<compile_context>
chip_gen: v7x
topology: tpu7x:2x2x1
jax: 0.10.0
libtpu: 0.0.40
codegen_flags: <defaults>
</compile_context>

<pallas_src>
import functools

import jax
import jax.numpy as jnp
from jax.experimental import pallas as pl
from jax.experimental.pallas import tpu as pltpu

BN_EPS = 1e-5

# ----------------------------- config (small) -------------------------------
VOCAB_SIZE = 50
EMBEDDING_SIZE = 16
INCEPT_DIM = 32          # must be divisible by 4
MAX_TEXT_LEN = 16        # sequence length (MaxPool1d kernel == full length)
LINEAR_HIDDEN = 32
NUM_CLASS = 4
BATCH = 2
USE_ELEMENT = False

PADT = 2                 # max 'same' padding needed (k=5 -> pad 2)
LANES = 128              # lane-dense channel width for activations / weights
GUARD = 8                # aligned zero guard rows above/below activations
EMB_ROWS = ((VOCAB_SIZE + 7) // 8) * 8          # vocab rows, 8-aligned


def _seg_len(seq):
    """Per-batch activation segment rows: [pad | seq | pad], 8-aligned."""
    return ((seq + 2 * PADT + 7) // 8) * 8


# ------------------------- parameter-slab row offsets ------------------------
OFF_EMB = 0
OFF_W1A = OFF_EMB + EMB_ROWS               # Inception1 stage A, 3 taps x 128
OFF_W1B = OFF_W1A + 3 * LANES              # Inception1 stage B, 5 taps x 128
OFF_W2A = OFF_W1B + 5 * LANES              # Inception2 stage A
OFF_W2B = OFF_W2A + 3 * LANES              # Inception2 stage B
OFF_FC1 = OFF_W2B + 5 * LANES
OFF_FC2 = OFF_FC1 + LANES
OFF_BIAS = OFF_FC2 + LANES
N_BIAS_ROWS = 8
TOTAL_ROWS = OFF_BIAS + N_BIAS_ROWS        # = 2368 rows of 128 f32 (~1.2 MiB)
BIAS_1A, BIAS_1B, BIAS_2A, BIAS_2B, BIAS_FC1, BIAS_FC2 = range(6)


# ----------------------------- fused Pallas kernel --------------------------
def _fused_kernel(tok_ref, par_ref, o_ref, buf_ref, *, batch, seq,
                  use_element):
    lp = _seg_len(seq)
    n = batch * lp                              # activation rows (all batches)

    # Row-validity mask: 1.0 on real sequence rows, 0.0 on pad rows.  Applied
    # after every conv stage so the batch-merged taps never read garbage from
    # the inter-batch / outer pad rows.
    rows = jax.lax.broadcasted_iota(jnp.int32, (n, 1), 0)
    valid = None
    for b in range(batch):                      # static, tiny batch
        lo = b * lp + PADT
        vb = jnp.logical_and(rows >= lo, rows < lo + seq)
        valid = vb if valid is None else jnp.logical_or(valid, vb)
    mask = valid.astype(jnp.float32)            # (n, 1)

    # --- embedding lookup as a one-hot MXU matmul ---------------------------
    # Pad rows carry token -1 -> all-zero one-hot -> exactly-zero activations.
    tok = tok_ref[...]                                            # (n, 1) i32
    onehot = (tok == jax.lax.broadcasted_iota(jnp.int32, (n, EMB_ROWS), 1)
              ).astype(jnp.float32)                               # (n, EMB_ROWS)
    x = jnp.dot(onehot, par_ref[OFF_EMB:OFF_EMB + EMB_ROWS, :],
                preferred_element_type=jnp.float32)               # (n, 128)

    # Zero the whole activation scratch once (guard rows never written again).
    buf_ref[...] = jnp.zeros_like(buf_ref)

    def bias_row(i):
        return par_ref[OFF_BIAS + i:OFF_BIAS + i + 1, :]          # (1, 128)

    def conv(x_in, w_off, k, bias_idx):
        """'same' Conv1d + bias + ReLU over ALL batch segments in one pass:
        one (n,128)@(128,128) MXU matmul per tap, lane-dense loads/stores."""
        buf_ref[GUARD:GUARD + n, :] = x_in      # aligned, full-lane store
        pad = (k - 1) // 2
        acc = None
        for j in range(k):                      # static tap unroll
            d = j - pad
            xs = buf_ref[GUARD + d:GUARD + d + n, :]              # (n, 128)
            w = par_ref[w_off + j * LANES:w_off + (j + 1) * LANES, :]
            t = jnp.dot(xs, w, preferred_element_type=jnp.float32)
            acc = t if acc is None else acc + t
        # ReLU, then re-zero pad rows so the next stage's taps read exact 0s.
        return jnp.maximum(acc + bias_row(bias_idx), 0.0) * mask

    x = conv(x, OFF_W1A, 3, BIAS_1A)   # Inception 1, merged branch convs A
    x = conv(x, OFF_W1B, 5, BIAS_1B)   # Inception 1, merged branch convs B
    x = conv(x, OFF_W2A, 3, BIAS_2A)   # Inception 2, merged branch convs A
    x = conv(x, OFF_W2B, 5, BIAS_2B)   # Inception 2, merged branch convs B

    # --- MaxPool1d over the full text length (per batch) --------------------
    # Pad rows are exact zeros and activations are ReLU outputs (>= 0), so the
    # max over a whole segment equals the max over its valid rows.
    pooled = jnp.concatenate(
        [jnp.max(x[b * lp:(b + 1) * lp, :], axis=0, keepdims=True)
         for b in range(batch)], axis=0)                          # (batch, 128)

    if use_element:
        o_ref[...] = pooled[:, :INCEPT_DIM]
    else:
        h = jnp.maximum(
            jnp.dot(pooled, par_ref[OFF_FC1:OFF_FC1 + LANES, :],
                    preferred_element_type=jnp.float32)
            + bias_row(BIAS_FC1), 0.0)
        logits = (jnp.dot(h, par_ref[OFF_FC2:OFF_FC2 + LANES, :],
                          preferred_element_type=jnp.float32)
                  + bias_row(BIAS_FC2))
        o_ref[...] = logits[:, :NUM_CLASS]


def cnn_with_inception_forward(tokens, param_slab):
    """tokens: (B, L) int32; param_slab: (TOTAL_ROWS, 128) f32 from
    build_fused_params."""
    batch, seq = tokens.shape
    lp = _seg_len(seq)
    out_dim = INCEPT_DIM if USE_ELEMENT else NUM_CLASS

    # Lay the tokens out in the padded per-batch segment layout; pad rows get
    # token -1 so their embedding row (and hence the conv padding) is zero.
    tokp = jnp.full((batch, lp), -1, dtype=jnp.int32)
    tokp = tokp.at[:, PADT:PADT + seq].set(tokens.astype(jnp.int32))
    tok2d = tokp.reshape(batch * lp, 1)

    kern = functools.partial(_fused_kernel, batch=batch, seq=seq,
                             use_element=USE_ELEMENT)
    return pl.pallas_call(
        kern,
        out_shape=jax.ShapeDtypeStruct((batch, out_dim), jnp.float32),
        grid=(1,),
        in_specs=[
            pl.BlockSpec(tok2d.shape, lambda i: (0, 0)),
            pl.BlockSpec(param_slab.shape, lambda i: (0, 0)),
        ],
        out_specs=pl.BlockSpec((batch, out_dim), lambda i: (0, 0)),
        scratch_shapes=[
            pltpu.VMEM((2 * GUARD + batch * lp, LANES), jnp.float32),
        ],
        compiler_params=pltpu.CompilerParams(
            dimension_semantics=("arbitrary",)),
    )(tok2d, param_slab)


# ----------------------- parameter construction / folding -------------------
def make_inception_params(key, cin, co):
    assert co % 4 == 0
    c4 = co // 4
    ks = jax.random.split(key, 12)

    def w(k, K, ci, cout):
        return jax.random.normal(k, (K, ci, cout), jnp.float32) * 0.1

    def b(k, cout):
        return jax.random.normal(k, (cout,), jnp.float32) * 0.1

    return dict(
        b1_w=w(ks[0], 1, cin, c4), b1_b=b(ks[1], c4),
        b2_w1=w(ks[2], 1, cin, c4), b2_b1=b(ks[3], c4),
        b2_w3=w(ks[4], 3, c4, c4), b2_b3=b(ks[5], c4),
        b3_w1=w(ks[6], 3, cin, c4), b3_b1=b(ks[7], c4),
        b3_w5=w(ks[8], 5, c4, c4), b3_b5=b(ks[9], c4),
        b4_w3=w(ks[10], 3, cin, c4), b4_b3=b(ks[11], c4),
    )


def make_params(key):
    k_emb, k_i1, k_i2, k_f1w, k_f1b, k_f2w, k_f2b = jax.random.split(key, 7)
    return dict(
        embedding=jax.random.normal(
            k_emb, (VOCAB_SIZE, EMBEDDING_SIZE), jnp.float32) * 0.1,
        inc1=make_inception_params(k_i1, EMBEDDING_SIZE, INCEPT_DIM),
        inc2=make_inception_params(k_i2, INCEPT_DIM, INCEPT_DIM),
        fc1_w=jax.random.normal(
            k_f1w, (INCEPT_DIM, LINEAR_HIDDEN), jnp.float32) * 0.1,
        fc1_b=jax.random.normal(k_f1b, (LINEAR_HIDDEN,), jnp.float32) * 0.1,
        fc2_w=jax.random.normal(
            k_f2w, (LINEAR_HIDDEN, NUM_CLASS), jnp.float32) * 0.1,
        fc2_b=jax.random.normal(k_f2b, (NUM_CLASS,), jnp.float32) * 0.1,
    )


def _merge_inception(p, cin, co):
    """Fold the 6 branch convs + all BNs of one Inception block into merged
    stage-A (3, cin, co) and stage-B (5, co, co) conv weights + biases."""
    c4 = co // 4
    s = (1.0 + BN_EPS) ** -0.5                  # inference-mode BN scale
    s_vec = jnp.full((c4,), s, jnp.float32)

    def fold(w, b, sc):                         # fold per-out-channel BN scale
        return w * sc[None, None, :], b * sc

    # stage A channel blocks: [branch1, branch2-mid, branch3-mid, branch4]
    wa = jnp.zeros((3, cin, co), jnp.float32)
    ba = jnp.zeros((co,), jnp.float32)
    w, b = fold(p['b1_w'], p['b1_b'], s_vec)            # branch1 k=1 (+activa)
    wa = wa.at[1, :, 0:c4].set(w[0]); ba = ba.at[0:c4].set(b)
    w, b = fold(p['b2_w1'], p['b2_b1'], s_vec)          # branch2 k=1 (+BN)
    wa = wa.at[1, :, c4:2 * c4].set(w[0]); ba = ba.at[c4:2 * c4].set(b)
    w, b = fold(p['b3_w1'], p['b3_b1'], s_vec)          # branch3 k=3 (+BN)
    wa = wa.at[:, :, 2 * c4:3 * c4].set(w); ba = ba.at[2 * c4:3 * c4].set(b)
    w, b = fold(p['b4_w3'], p['b4_b3'], s_vec)          # branch4 k=3 (+activa)
    wa = wa.at[:, :, 3 * c4:4 * c4].set(w); ba = ba.at[3 * c4:4 * c4].set(b)

    # stage B: branch2 k=3, branch3 k=5, identity pass-through for br1 / br4
    wb = jnp.zeros((5, co, co), jnp.float32)
    bb = jnp.zeros((co,), jnp.float32)
    eye = jnp.eye(c4, dtype=jnp.float32)
    wb = wb.at[2, 0:c4, 0:c4].set(eye)                          # branch1 pass
    w, b = fold(p['b2_w3'], p['b2_b3'], s_vec)                  # branch2 k=3
    wb = wb.at[1:4, c4:2 * c4, c4:2 * c4].set(w)
    bb = bb.at[c4:2 * c4].set(b)
    w, b = fold(p['b3_w5'], p['b3_b5'], s_vec)                  # branch3 k=5
    wb = wb.at[:, 2 * c4:3 * c4, 2 * c4:3 * c4].set(w)
    bb = bb.at[2 * c4:3 * c4].set(b)
    wb = wb.at[2, 3 * c4:4 * c4, 3 * c4:4 * c4].set(eye)        # branch4 pass
    return wa, ba, wb, bb


def _pad_rows(a, rows):
    out = jnp.zeros((rows, LANES), jnp.float32)
    return out.at[:a.shape[0], :a.shape[1]].set(a)


def build_fused_params(params):
    """Fold BN into merged conv / FC weights and pack EVERYTHING into one
    lane-dense (TOTAL_ROWS, 128) f32 slab -> a single parameter DMA."""
    w1a, b1a, w1b, b1b = _merge_inception(params['inc1'],
                                          EMBEDDING_SIZE, INCEPT_DIM)
    w2a, b2a, w2b, b2b = _merge_inception(params['inc2'],
                                          INCEPT_DIM, INCEPT_DIM)
    s = (1.0 + BN_EPS) ** -0.5

    pieces = [_pad_rows(params['embedding'], EMB_ROWS)]
    for w in (w1a, w1b, w2a, w2b):
        for j in range(w.shape[0]):
            pieces.append(_pad_rows(w[j], LANES))
    pieces.append(_pad_rows(params['fc1_w'] * s, LANES))   # fold FC BatchNorm
    pieces.append(_pad_rows(params['fc2_w'], LANES))

    biases = jnp.zeros((N_BIAS_ROWS, LANES), jnp.float32)
    biases = biases.at[BIAS_1A, :INCEPT_DIM].set(b1a)
    biases = biases.at[BIAS_1B, :INCEPT_DIM].set(b1b)
    biases = biases.at[BIAS_2A, :INCEPT_DIM].set(b2a)
    biases = biases.at[BIAS_2B, :INCEPT_DIM].set(b2b)
    biases = biases.at[BIAS_FC1, :LINEAR_HIDDEN].set(params['fc1_b'] * s)
    biases = biases.at[BIAS_FC2, :NUM_CLASS].set(params['fc2_b'])
    pieces.append(biases)

    slab = jnp.concatenate(pieces, axis=0)
    assert slab.shape == (TOTAL_ROWS, LANES), slab.shape
    return slab


# ------------------------ pure-JAX reference (unfused) -----------------------
def _ref_conv1d(x, w, b):
    K = w.shape[0]
    pad_l = (K - 1) // 2
    xp = jnp.pad(x, ((0, 0), (pad_l, K - 1 - pad_l), (0, 0)))
    L = x.shape[1]
    y = sum(jnp.einsum('bli,io->blo', xp[:, j:j + L, :], w[j])
            for j in range(K))
    return y + b


def _ref_bn(x):
    return x / jnp.sqrt(1.0 + BN_EPS)


def _ref_inception(x, p):
    br1 = _ref_conv1d(x, p['b1_w'], p['b1_b'])
    h2 = jax.nn.relu(_ref_bn(_ref_conv1d(x, p['b2_w1'], p['b2_b1'])))
    br2 = _ref_conv1d(h2, p['b2_w3'], p['b2_b3'])
    h3 = jax.nn.relu(_ref_bn(_ref_conv1d(x, p['b3_w1'], p['b3_b1'])))
    br3 = _ref_conv1d(h3, p['b3_w5'], p['b3_b5'])
    br4 = _ref_conv1d(x, p['b4_w3'], p['b4_b3'])
    cat = jnp.concatenate([br1, br2, br3, br4], axis=-1)
    return jax.nn.relu(_ref_bn(cat))


def reference_forward(tokens, params):
    emb = jnp.take(params['embedding'], tokens, axis=0)
    h = _ref_inception(emb, params['inc1'])
    h = _ref_inception(h, params['inc2'])
    h = jnp.max(h, axis=1)
    if USE_ELEMENT:
        return h
    h = jax.nn.relu(_ref_bn(h @ params['fc1_w'] + params['fc1_b']))
    return h @ params['fc2_w'] + params['fc2_b']


# ----------------------------------- main ------------------------------------
if __name__ == "__main__":
    key = jax.random.PRNGKey(0)
    k_tok, k_par = jax.random.split(key)
    tokens = jax.random.randint(
        k_tok, (BATCH, MAX_TEXT_LEN), 0, VOCAB_SIZE, dtype=jnp.int32)
    params = make_params(k_par)
    slab = build_fused_params(params)

    fwd = jax.jit(cnn_with_inception_forward)
    out = jax.block_until_ready(fwd(tokens, slab))
    expected_shape = (BATCH, INCEPT_DIM if USE_ELEMENT else NUM_CLASS)
    assert out.shape == expected_shape, out.shape

    # sanity check against a pure-JAX implementation of the original network
    ref = jax.block_until_ready(jax.jit(reference_forward)(tokens, params))
    assert jnp.allclose(out, ref, atol=1e-4, rtol=1e-4), (out, ref)

    print("KERNEL_OK")
</pallas_src>

<mosaic_0001>
module attributes {stable_mosaic.version = 11 : i64} {
  func.func @_fused_kernel(%arg0: i32, %arg1: memref<48x1xi32, #tpu.memory_space<vmem>>, %arg2: memref<2368x128xf32, #tpu.memory_space<vmem>>, %arg3: memref<2x4xf32, #tpu.memory_space<vmem>>, %arg4: memref<64x128xf32, #tpu.memory_space<vmem>>) attributes {dimension_semantics = [#tpu.dimension_semantics<arbitrary>], iteration_bounds = array<i64: 1>, scalar_prefetch = 0 : i64, scratch_operands = 1 : i64, tpu.core_type = #tpu.core_type<tc>, window_params = [{pipeline_mode = #tpu.pipeline_mode<synchronous>, transform_indices = @transform_0, window_bounds = array<i64: 48, 1>}, {pipeline_mode = #tpu.pipeline_mode<synchronous>, transform_indices = @transform_1, window_bounds = array<i64: 2368, 128>}, {pipeline_mode = #tpu.pipeline_mode<synchronous>, transform_indices = @transform_2, window_bounds = array<i64: 2, 4>}]} {
    %0 = tpu.iota {dimensions = array<i32: 0>} : vector<48x1xi32>
    %c2_i32 = arith.constant 2 : i32
    %1 = vector.broadcast %c2_i32 : i32 to vector<48x1xi32>
    %2 = arith.cmpi sge, %0, %1 : vector<48x1xi32>
    %c18_i32 = arith.constant 18 : i32
    %3 = vector.broadcast %c18_i32 : i32 to vector<48x1xi32>
    %4 = arith.cmpi slt, %0, %3 : vector<48x1xi32>
    %5 = arith.andi %2, %4 : vector<48x1xi1>
    %c26_i32 = arith.constant 26 : i32
    %6 = vector.broadcast %c26_i32 : i32 to vector<48x1xi32>
    %7 = arith.cmpi sge, %0, %6 : vector<48x1xi32>
    %c42_i32 = arith.constant 42 : i32
    %8 = vector.broadcast %c42_i32 : i32 to vector<48x1xi32>
    %9 = arith.cmpi slt, %0, %8 : vector<48x1xi32>
    %10 = arith.andi %7, %9 : vector<48x1xi1>
    %11 = arith.ori %5, %10 : vector<48x1xi1>
    %12 = arith.extui %11 : vector<48x1xi1> to vector<48x1xi32>
    %13 = arith.sitofp %12 : vector<48x1xi32> to vector<48x1xf32>
    %c0 = arith.constant 0 : index
    %c0_0 = arith.constant 0 : index
    %14 = vector.load %arg1[%c0, %c0_0] : memref<48x1xi32, #tpu.memory_space<vmem>>, vector<48x1xi32>
    %15 = tpu.iota {dimensions = array<i32: 1>} : vector<48x56xi32>
    %16 = vector.broadcast %14 : vector<48x1xi32> to vector<48x56xi32>
    %17 = arith.cmpi eq, %16, %15 : vector<48x56xi32>
    %18 = arith.extui %17 : vector<48x56xi1> to vector<48x56xi32>
    %19 = arith.sitofp %18 : vector<48x56xi32> to vector<48x56xf32>
    %c0_1 = arith.constant 0 : index
    %c0_2 = arith.constant 0 : index
    %20 = vector.load %arg2[%c0_1, %c0_2] : memref<2368x128xf32, #tpu.memory_space<vmem>>, vector<56x128xf32>
    %cst = arith.constant dense<0.000000e+00> : vector<48x128xf32>
    %21 = tpu.matmul %19, %20, %cst {dimension_numbers = #tpu.dot_dimension_numbers<[1], [0], [0], [1], [0, 0, 1, 1], [], []>} : vector<48x56xf32>, vector<56x128xf32>, vector<48x128xf32> -> vector<48x128xf32>
    %cst_3 = arith.constant 0.000000e+00 : f32
    %22 = vector.broadcast %cst_3 : f32 to vector<64x128xf32>
    %c0_4 = arith.constant 0 : index
    %c0_5 = arith.constant 0 : index
    %23 = vector.load %arg4[%c0_4, %c0_5] : memref<64x128xf32, #tpu.memory_space<vmem>>, vector<64x128xf32>
    tpu.vector_store %arg4[%c0_4, %c0_5], %22 {strides = array<i32>} : memref<64x128xf32, #tpu.memory_space<vmem>>, vector<64x128xf32>,
    %c8 = arith.constant 8 : index
    %c0_6 = arith.constant 0 : index
    %24 = vector.load %arg4[%c8, %c0_6] : memref<64x128xf32, #tpu.memory_space<vmem>>, vector<48x128xf32>
    tpu.vector_store %arg4[%c8, %c0_6], %21 {strides = array<i32>} : memref<64x128xf32, #tpu.memory_space<vmem>>, vector<48x128xf32>,
    %c7 = arith.constant 7 : index
    %c0_7 = arith.constant 0 : index
    %25 = vector.load %arg4[%c7, %c0_7] : memref<64x128xf32, #tpu.memory_space<vmem>>, vector<48x128xf32>
    %c56 = arith.constant 56 : index
    %c0_8 = arith.constant 0 : index
    %26 = vector.load %arg2[%c56, %c0_8] : memref<2368x128xf32, #tpu.memory_space<vmem>>, vector<128x128xf32>
    %cst_9 = arith.constant dense<0.000000e+00> : vector<48x128xf32>
    %27 = tpu.matmul %25, %26, %cst_9 {dimension_numbers = #tpu.dot_dimension_numbers<[1], [0], [0], [1], [0, 0, 1, 1], [], []>} : vector<48x128xf32>, vector<128x128xf32>, vector<48x128xf32> -> vector<48x128xf32>
    %c8_10 = arith.constant 8 : index
    %c0_11 = arith.constant 0 : index
    %28 = vector.load %arg4[%c8_10, %c0_11] : memref<64x128xf32, #tpu.memory_space<vmem>>, vector<48x128xf32>
    %c184 = arith.constant 184 : index
    %c0_12 = arith.constant 0 : index
    %29 = vector.load %arg2[%c184, %c0_12] : memref<2368x128xf32, #tpu.memory_space<vmem>>, vector<128x128xf32>
    %cst_13 = arith.constant dense<0.000000e+00> : vector<48x128xf32>
    %30 = tpu.matmul %28, %29, %cst_13 {dimension_numbers = #tpu.dot_dimension_numbers<[1], [0], [0], [1], [0, 0, 1, 1], [], []>} : vector<48x128xf32>, vector<128x128xf32>, vector<48x128xf32> -> vector<48x128xf32>
    %31 = arith.addf %27, %30 : vector<48x128xf32>
    %c9 = arith.constant 9 : index
    %c0_14 = arith.constant 0 : index
    %32 = vector.load %arg4[%c9, %c0_14] : memref<64x128xf32, #tpu.memory_space<vmem>>, vector<48x128xf32>
    %c312 = arith.constant 312 : index
    %c0_15 = arith.constant 0 : index
    %33 = vector.load %arg2[%c312, %c0_15] : memref<2368x128xf32, #tpu.memory_space<vmem>>, vector<128x128xf32>
    %cst_16 = arith.constant dense<0.000000e+00> : vector<48x128xf32>
    %34 = tpu.matmul %32, %33, %cst_16 {dimension_numbers = #tpu.dot_dimension_numbers<[1], [0], [0], [1], [0, 0, 1, 1], [], []>} : vector<48x128xf32>, vector<128x128xf32>, vector<48x128xf32> -> vector<48x128xf32>
    %35 = arith.addf %31, %34 : vector<48x128xf32>
    %c2360 = arith.constant 2360 : index
    %c0_17 = arith.constant 0 : index
    %36 = vector.load %arg2[%c2360, %c0_17] : memref<2368x128xf32, #tpu.memory_space<vmem>>, vector<1x128xf32>
    %37 = vector.broadcast %36 : vector<1x128xf32> to vector<48x128xf32>
    %38 = arith.addf %35, %37 : vector<48x128xf32>
    %cst_18 = arith.constant 0.000000e+00 : f32
    %39 = vector.broadcast %cst_18 : f32 to vector<48x128xf32>
    %40 = arith.maximumf %38, %39 : vector<48x128xf32>
    %41 = vector.broadcast %13 : vector<48x1xf32> to vector<48x128xf32>
    %42 = arith.mulf %40, %41 : vector<48x128xf32>
    %c8_19 = arith.constant 8 : index
    %c0_20 = arith.constant 0 : index
    %43 = vector.load %arg4[%c8_19, %c0_20] : memref<64x128xf32, #tpu.memory_space<vmem>>, vector<48x128xf32>
    tpu.vector_store %arg4[%c8_19, %c0_20], %42 {strides = array<i32>} : memref<64x128xf32, #tpu.memory_space<vmem>>, vector<48x128xf32>,
    %c6 = arith.constant 6 : index
    %c0_21 = arith.constant 0 : index
    %44 = vector.load %arg4[%c6, %c0_21] : memref<64x128xf32, #tpu.memory_space<vmem>>, vector<48x128xf32>
    %c440 = arith.constant 440 : index
    %c0_22 = arith.constant 0 : index
    %45 = vector.load %arg2[%c440, %c0_22] : memref<2368x128xf32, #tpu.memory_space<vmem>>, vector<128x128xf32>
    %cst_23 = arith.constant dense<0.000000e+00> : vector<48x128xf32>
    %46 = tpu.matmul %44, %45, %cst_23 {dimension_numbers = #tpu.dot_dimension_numbers<[1], [0], [0], [1], [0, 0, 1, 1], [], []>} : vector<48x128xf32>, vector<128x128xf32>, vector<48x128xf32> -> vector<48x128xf32>
    %c7_24 = arith.constant 7 : index
    %c0_25 = arith.constant 0 : index
    %47 = vector.load %arg4[%c7_24, %c0_25] : memref<64x128xf32, #tpu.memory_space<vmem>>, vector<48x128xf32>
    %c568 = arith.constant 568 : index
    %c0_26 = arith.constant 0 : index
    %48 = vector.load %arg2[%c568, %c0_26] : memref<2368x128xf32, #tpu.memory_space<vmem>>, vector<128x128xf32>
    %cst_27 = arith.constant dense<0.000000e+00> : vector<48x128xf32>
    %49 = tpu.matmul %47, %48, %cst_27 {dimension_numbers = #tpu.dot_dimension_numbers<[1], [0], [0], [1], [0, 0, 1, 1], [], []>} : vector<48x128xf32>, vector<128x128xf32>, vector<48x128xf32> -> vector<48x128xf32>
    %50 = arith.addf %46, %49 : vector<48x128xf32>
    %c8_28 = arith.constant 8 : index
    %c0_29 = arith.constant 0 : index
    %51 = vector.load %arg4[%c8_28, %c0_29] : memref<64x128xf32, #tpu.memory_space<vmem>>, vector<48x128xf32>
    %c696 = arith.constant 696 : index
    %c0_30 = arith.constant 0 : index
    %52 = vector.load %arg2[%c696, %c0_30] : memref<2368x128xf32, #tpu.memory_space<vmem>>, vector<128x128xf32>
    %cst_31 = arith.constant dense<0.000000e+00> : vector<48x128xf32>
    %53 = tpu.matmul %51, %52, %cst_31 {dimension_numbers = #tpu.dot_dimension_numbers<[1], [0], [0], [1], [0, 0, 1, 1], [], []>} : vector<48x128xf32>, vector<128x128xf32>, vector<48x128xf32> -> vector<48x128xf32>
    %54 = arith.addf %50, %53 : vector<48x128xf32>
    %c9_32 = arith.constant 9 : index
    %c0_33 = arith.constant 0 : index
    %55 = vector.load %arg4[%c9_32, %c0_33] : memref<64x128xf32, #tpu.memory_space<vmem>>, vector<48x128xf32>
    %c824 = arith.constant 824 : index
    %c0_34 = arith.constant 0 : index
    %56 = vector.load %arg2[%c824, %c0_34] : memref<2368x128xf32, #tpu.memory_space<vmem>>, vector<128x128xf32>
    %cst_35 = arith.constant dense<0.000000e+00> : vector<48x128xf32>
    %57 = tpu.matmul %55, %56, %cst_35 {dimension_numbers = #tpu.dot_dimension_numbers<[1], [0], [0], [1], [0, 0, 1, 1], [], []>} : vector<48x128xf32>, vector<128x128xf32>, vector<48x128xf32> -> vector<48x128xf32>
    %58 = arith.addf %54, %57 : vector<48x128xf32>
    %c10 = arith.constant 10 : index
    %c0_36 = arith.constant 0 : index
    %59 = vector.load %arg4[%c10, %c0_36] : memref<64x128xf32, #tpu.memory_space<vmem>>, vector<48x128xf32>
    %c952 = arith.constant 952 : index
    %c0_37 = arith.constant 0 : index
    %60 = vector.load %arg2[%c952, %c0_37] : memref<2368x128xf32, #tpu.memory_space<vmem>>, vector<128x128xf32>
    %cst_38 = arith.constant dense<0.000000e+00> : vector<48x128xf32>
    %61 = tpu.matmul %59, %60, %cst_38 {dimension_numbers = #tpu.dot_dimension_numbers<[1], [0], [0], [1], [0, 0, 1, 1], [], []>} : vector<48x128xf32>, vector<128x128xf32>, vector<48x128xf32> -> vector<48x128xf32>
    %62 = arith.addf %58, %61 : vector<48x128xf32>
    %c2361 = arith.constant 2361 : index
    %c0_39 = arith.constant 0 : index
    %63 = vector.load %arg2[%c2361, %c0_39] : memref<2368x128xf32, #tpu.memory_space<vmem>>, vector<1x128xf32>
    %64 = vector.broadcast %63 : vector<1x128xf32> to vector<48x128xf32>
    %65 = arith.addf %62, %64 : vector<48x128xf32>
    %cst_40 = arith.constant 0.000000e+00 : f32
    %66 = vector.broadcast %cst_40 : f32 to vector<48x128xf32>
    %67 = arith.maximumf %65, %66 : vector<48x128xf32>
    %68 = vector.broadcast %13 : vector<48x1xf32> to vector<48x128xf32>
    %69 = arith.mulf %67, %68 : vector<48x128xf32>
    %c8_41 = arith.constant 8 : index
    %c0_42 = arith.constant 0 : index
    %70 = vector.load %arg4[%c8_41, %c0_42] : memref<64x128xf32, #tpu.memory_space<vmem>>, vector<48x128xf32>
    tpu.vector_store %arg4[%c8_41, %c0_42], %69 {strides = array<i32>} : memref<64x128xf32, #tpu.memory_space<vmem>>, vector<48x128xf32>,
    %c7_43 = arith.constant 7 : index
    %c0_44 = arith.constant 0 : index
    %71 = vector.load %arg4[%c7_43, %c0_44] : memref<64x128xf32, #tpu.memory_space<vmem>>, vector<48x128xf32>
    %c1080 = arith.constant 1080 : index
    %c0_45 = arith.constant 0 : index
    %72 = vector.load %arg2[%c1080, %c0_45] : memref<2368x128xf32, #tpu.memory_space<vmem>>, vector<128x128xf32>
    %cst_46 = arith.constant dense<0.000000e+00> : vector<48x128xf32>
    %73 = tpu.matmul %71, %72, %cst_46 {dimension_numbers = #tpu.dot_dimension_numbers<[1], [0], [0], [1], [0, 0, 1, 1], [], []>} : vector<48x128xf32>, vector<128x128xf32>, vector<48x128xf32> -> vector<48x128xf32>
    %c8_47 = arith.constant 8 : index
    %c0_48 = arith.constant 0 : index
    %74 = vector.load %arg4[%c8_47, %c0_48] : memref<64x128xf32, #tpu.memory_space<vmem>>, vector<48x128xf32>
    %c1208 = arith.constant 1208 : index
    %c0_49 = arith.constant 0 : index
    %75 = vector.load %arg2[%c1208, %c0_49] : memref<2368x128xf32, #tpu.memory_space<vmem>>, vector<128x128xf32>
    %cst_50 = arith.constant dense<0.000000e+00> : vector<48x128xf32>
    %76 = tpu.matmul %74, %75, %cst_50 {dimension_numbers = #tpu.dot_dimension_numbers<[1], [0], [0], [1], [0, 0, 1, 1], [], []>} : vector<48x128xf32>, vector<128x128xf32>, vector<48x128xf32> -> vector<48x128xf32>
    %77 = arith.addf %73, %76 : vector<48x128xf32>
    %c9_51 = arith.constant 9 : index
    %c0_52 = arith.constant 0 : index
    %78 = vector.load %arg4[%c9_51, %c0_52] : memref<64x128xf32, #tpu.memory_space<vmem>>, vector<48x128xf32>
    %c1336 = arith.constant 1336 : index
    %c0_53 = arith.constant 0 : index
    %79 = vector.load %arg2[%c1336, %c0_53] : memref<2368x128xf32, #tpu.memory_space<vmem>>, vector<128x128xf32>
    %cst_54 = arith.constant dense<0.000000e+00> : vector<48x128xf32>
    %80 = tpu.matmul %78, %79, %cst_54 {dimension_numbers = #tpu.dot_dimension_numbers<[1], [0], [0], [1], [0, 0, 1, 1], [], []>} : vector<48x128xf32>, vector<128x128xf32>, vector<48x128xf32> -> vector<48x128xf32>
    %81 = arith.addf %77, %80 : vector<48x128xf32>
    %c2362 = arith.constant 2362 : index
    %c0_55 = arith.constant 0 : index
    %82 = vector.load %arg2[%c2362, %c0_55] : memref<2368x128xf32, #tpu.memory_space<vmem>>, vector<1x128xf32>
    %83 = vector.broadcast %82 : vector<1x128xf32> to vector<48x128xf32>
    %84 = arith.addf %81, %83 : vector<48x128xf32>
    %cst_56 = arith.constant 0.000000e+00 : f32
    %85 = vector.broadcast %cst_56 : f32 to vector<48x128xf32>
    %86 = arith.maximumf %84, %85 : vector<48x128xf32>
    %87 = vector.broadcast %13 : vector<48x1xf32> to vector<48x128xf32>
    %88 = arith.mulf %86, %87 : vector<48x128xf32>
    %c8_57 = arith.constant 8 : index
    %c0_58 = arith.constant 0 : index
    %89 = vector.load %arg4[%c8_57, %c0_58] : memref<64x128xf32, #tpu.memory_space<vmem>>, vector<48x128xf32>
    tpu.vector_store %arg4[%c8_57, %c0_58], %88 {strides = array<i32>} : memref<64x128xf32, #tpu.memory_space<vmem>>, vector<48x128xf32>,
    %c6_59 = arith.constant 6 : index
    %c0_60 = arith.constant 0 : index
    %90 = vector.load %arg4[%c6_59, %c0_60] : memref<64x128xf32, #tpu.memory_space<vmem>>, vector<48x128xf32>
    %c1464 = arith.constant 1464 : index
    %c0_61 = arith.constant 0 : index
    %91 = vector.load %arg2[%c1464, %c0_61] : memref<2368x128xf32, #tpu.memory_space<vmem>>, vector<128x128xf32>
    %cst_62 = arith.constant dense<0.000000e+00> : vector<48x128xf32>
    %92 = tpu.matmul %90, %91, %cst_62 {dimension_numbers = #tpu.dot_dimension_numbers<[1], [0], [0], [1], [0, 0, 1, 1], [], []>} : vector<48x128xf32>, vector<128x128xf32>, vector<48x128xf32> -> vector<48x128xf32>
    %c7_63 = arith.constant 7 : index
    %c0_64 = arith.constant 0 : index
    %93 = vector.load %arg4[%c7_63, %c0_64] : memref<64x128xf32, #tpu.memory_space<vmem>>, vector<48x128xf32>
    %c1592 = arith.constant 1592 : index
    %c0_65 = arith.constant 0 : index
    %94 = vector.load %arg2[%c1592, %c0_65] : memref<2368x128xf32, #tpu.memory_space<vmem>>, vector<128x128xf32>
    %cst_66 = arith.constant dense<0.000000e+00> : vector<48x128xf32>
    %95 = tpu.matmul %93, %94, %cst_66 {dimension_numbers = #tpu.dot_dimension_numbers<[1], [0], [0], [1], [0, 0, 1, 1], [], []>} : vector<48x128xf32>, vector<128x128xf32>, vector<48x128xf32> -> vector<48x128xf32>
    %96 = arith.addf %92, %95 : vector<48x128xf32>
    %c8_67 = arith.constant 8 : index
    %c0_68 = arith.constant 0 : index
    %97 = vector.load %arg4[%c8_67, %c0_68] : memref<64x128xf32, #tpu.memory_space<vmem>>, vector<48x128xf32>
    %c1720 = arith.constant 1720 : index
    %c0_69 = arith.constant 0 : index
    %98 = vector.load %arg2[%c1720, %c0_69] : memref<2368x128xf32, #tpu.memory_space<vmem>>, vector<128x128xf32>
    %cst_70 = arith.constant dense<0.000000e+00> : vector<48x128xf32>
    %99 = tpu.matmul %97, %98, %cst_70 {dimension_numbers = #tpu.dot_dimension_numbers<[1], [0], [0], [1], [0, 0, 1, 1], [], []>} : vector<48x128xf32>, vector<128x128xf32>, vector<48x128xf32> -> vector<48x128xf32>
    %100 = arith.addf %96, %99 : vector<48x128xf32>
    %c9_71 = arith.constant 9 : index
    %c0_72 = arith.constant 0 : index
    %101 = vector.load %arg4[%c9_71, %c0_72] : memref<64x128xf32, #tpu.memory_space<vmem>>, vector<48x128xf32>
    %c1848 = arith.constant 1848 : index
    %c0_73 = arith.constant 0 : index
    %102 = vector.load %arg2[%c1848, %c0_73] : memref<2368x128xf32, #tpu.memory_space<vmem>>, vector<128x128xf32>
    %cst_74 = arith.constant dense<0.000000e+00> : vector<48x128xf32>
    %103 = tpu.matmul %101, %102, %cst_74 {dimension_numbers = #tpu.dot_dimension_numbers<[1], [0], [0], [1], [0, 0, 1, 1], [], []>} : vector<48x128xf32>, vector<128x128xf32>, vector<48x128xf32> -> vector<48x128xf32>
    %104 = arith.addf %100, %103 : vector<48x128xf32>
    %c10_75 = arith.constant 10 : index
    %c0_76 = arith.constant 0 : index
    %105 = vector.load %arg4[%c10_75, %c0_76] : memref<64x128xf32, #tpu.memory_space<vmem>>, vector<48x128xf32>
    %c1976 = arith.constant 1976 : index
    %c0_77 = arith.constant 0 : index
    %106 = vector.load %arg2[%c1976, %c0_77] : memref<2368x128xf32, #tpu.memory_space<vmem>>, vector<128x128xf32>
    %cst_78 = arith.constant dense<0.000000e+00> : vector<48x128xf32>
    %107 = tpu.matmul %105, %106, %cst_78 {dimension_numbers = #tpu.dot_dimension_numbers<[1], [0], [0], [1], [0, 0, 1, 1], [], []>} : vector<48x128xf32>, vector<128x128xf32>, vector<48x128xf32> -> vector<48x128xf32>
    %108 = arith.addf %104, %107 : vector<48x128xf32>
    %c2363 = arith.constant 2363 : index
    %c0_79 = arith.constant 0 : index
    %109 = vector.load %arg2[%c2363, %c0_79] : memref<2368x128xf32, #tpu.memory_space<vmem>>, vector<1x128xf32>
    %110 = vector.broadcast %109 : vector<1x128xf32> to vector<48x128xf32>
    %111 = arith.addf %108, %110 : vector<48x128xf32>
    %cst_80 = arith.constant 0.000000e+00 : f32
    %112 = vector.broadcast %cst_80 : f32 to vector<48x128xf32>
    %113 = arith.maximumf %111, %112 : vector<48x128xf32>
    %114 = vector.broadcast %13 : vector<48x1xf32> to vector<48x128xf32>
    %115 = arith.mulf %113, %114 : vector<48x128xf32>
    %116 = vector.extract_strided_slice %115 {offsets = [0, 0], sizes = [24, 128], strides = [1, 1]} : vector<48x128xf32> to vector<24x128xf32>
    %cst_81 = arith.constant dense<0xFF800000> : vector<128xf32>
    %117 = vector.multi_reduction <maximumf>, %116, %cst_81 [0] : vector<24x128xf32> to vector<128xf32>
    %118 = vector.shape_cast %117 : vector<128xf32> to vector<1x128xf32>
    %119 = vector.extract_strided_slice %115 {offsets = [24, 0], sizes = [24, 128], strides = [1, 1]} : vector<48x128xf32> to vector<24x128xf32>
    %cst_82 = arith.constant dense<0xFF800000> : vector<128xf32>
    %120 = vector.multi_reduction <maximumf>, %119, %cst_82 [0] : vector<24x128xf32> to vector<128xf32>
    %121 = vector.shape_cast %120 : vector<128xf32> to vector<1x128xf32>
    %122 = tpu.concatenate %118, %121 in 0 : vector<1x128xf32>, vector<1x128xf32> -> vector<2x128xf32>
    %c2104 = arith.constant 2104 : index
    %c0_83 = arith.constant 0 : index
    %123 = vector.load %arg2[%c2104, %c0_83] : memref<2368x128xf32, #tpu.memory_space<vmem>>, vector<128x128xf32>
    %cst_84 = arith.constant dense<0.000000e+00> : vector<2x128xf32>
    %124 = tpu.matmul %122, %123, %cst_84 {dimension_numbers = #tpu.dot_dimension_numbers<[1], [0], [0], [1], [0, 0, 1, 1], [], []>} : vector<2x128xf32>, vector<128x128xf32>, vector<2x128xf32> -> vector<2x128xf32>
    %c2364 = arith.constant 2364 : index
    %c0_85 = arith.constant 0 : index
    %125 = vector.load %arg2[%c2364, %c0_85] : memref<2368x128xf32, #tpu.memory_space<vmem>>, vector<1x128xf32>
    %126 = vector.broadcast %125 : vector<1x128xf32> to vector<2x128xf32>
    %127 = arith.addf %124, %126 : vector<2x128xf32>
    %cst_86 = arith.constant 0.000000e+00 : f32
    %128 = vector.broadcast %cst_86 : f32 to vector<2x128xf32>
    %129 = arith.maximumf %127, %128 : vector<2x128xf32>
    %c2232 = arith.constant 2232 : index
    %c0_87 = arith.constant 0 : index
    %130 = vector.load %arg2[%c2232, %c0_87] : memref<2368x128xf32, #tpu.memory_space<vmem>>, vector<128x128xf32>
    %cst_88 = arith.constant dense<0.000000e+00> : vector<2x128xf32>
    %131 = tpu.matmul %129, %130, %cst_88 {dimension_numbers = #tpu.dot_dimension_numbers<[1], [0], [0], [1], [0, 0, 1, 1], [], []>} : vector<2x128xf32>, vector<128x128xf32>, vector<2x128xf32> -> vector<2x128xf32>
    %c2365 = arith.constant 2365 : index
    %c0_89 = arith.constant 0 : index
    %132 = vector.load %arg2[%c2365, %c0_89] : memref<2368x128xf32, #tpu.memory_space<vmem>>, vector<1x128xf32>
    %133 = vector.broadcast %132 : vector<1x128xf32> to vector<2x128xf32>
    %134 = arith.addf %131, %133 : vector<2x128xf32>
    %135 = vector.extract_strided_slice %134 {offsets = [0, 0], sizes = [2, 4], strides = [1, 1]} : vector<2x128xf32> to vector<2x4xf32>
    %c0_90 = arith.constant 0 : index
    %c0_91 = arith.constant 0 : index
    %136 = vector.load %arg3[%c0_90, %c0_91] : memref<2x4xf32, #tpu.memory_space<vmem>>, vector<2x4xf32>
    tpu.vector_store %arg3[%c0_90, %c0_91], %135 {strides = array<i32>} : memref<2x4xf32, #tpu.memory_space<vmem>>, vector<2x4xf32>,
    return
  }
  func.func @transform_0(%arg0: i32) -> (i32, i32) {
    %c0_i32 = arith.constant 0 : i32
    %c0_i32_0 = arith.constant 0 : i32
    %c0_i32_1 = arith.constant 0 : i32
    return %c0_i32, %c0_i32_0 : i32, i32
  }
  func.func @transform_1(%arg0: i32) -> (i32, i32) {
    %c0_i32 = arith.constant 0 : i32
    %c0_i32_0 = arith.constant 0 : i32
    %c0_i32_1 = arith.constant 0 : i32
    return %c0_i32, %c0_i32_0 : i32, i32
  }
  func.func @transform_2(%arg0: i32) -> (i32, i32) {
    %c0_i32 = arith.constant 0 : i32
    %c0_i32_0 = arith.constant 0 : i32
    %c0_i32_1 = arith.constant 0 : i32
    return %c0_i32, %c0_i32_0 : i32, i32
  }
}

</mosaic_0001>

<llo_original>
// kernel: cnn_with_inception_forward.1
$region0: #{cnn_with_inception_forward.1}
  #allocation0 [shape = 'u32[]', space=smem, size = 0x4, offset = 0x4, fixed_abs, tag = 'smem constant byte address 0x4 - core index']
  #allocation1 [shape = 'u32[144,128]{1,0:T(1,128)}', space=vmem, size = 0x12000, scoped, tag = 'internal scratch']
  #allocation2 [shape = 'f32[64,128]{1,0:T(8,128)}', space=vmem, size = 0x8000, scoped, tag = 'scratch operand']
  %s0 = inlined_call_operand.vmem [shape: s32[48,1], index: 0, kind: input, shape index: {}]
  %s1 = inlined_call_operand.hbm [shape: f32[2368,128], index: 1, kind: input, shape index: {}]
  %s2 = inlined_call_operand.hbm [shape: f32[2,4], index: 2, kind: output, shape index: {}]
  %s3 = sld [smem:[#allocation0]]
  $region22: #{cnn_with_inception_forward.1} parent=0
    _
  %s5 = ssub.s32 1, %s3
  %s6 = scalar_select 0, %s5, %s3
  $region1: #{cnn_with_inception_forward.1} parent=0
    #allocation3 [shape = 'u8[1212416]{0}', space=vmem, size = 0x128000, scoped, tag = 'input window, operand 1, single buffered']
    #allocation4 [shape = 's32[1]{0}', space=sflag, size = 0x4, scoped, tag = 'scoped memory for cnn_with_inception_forward.1']
    #allocation5 [shape = 's32[1]{0}', space=sflag, size = 0x4, scoped, tag = 'scoped memory for cnn_with_inception_forward.1']
    #allocation6 [shape = 'u8[1024]{0}', space=vmem, size = 0x400, scoped, tag = 'output window, operand 0, single buffered']
    %7 = vsyncpa [#allocation4], 0
    %8 = vsyncpa [#allocation5], 0
    // Predicated region
    $region2: #{cnn_with_inception_forward.1} parent=1 // pred_check
      _
    $region3: #{cnn_with_inception_forward.1} parent=1 // pred_check_branch
      %10 = sbr.rel (0) target = $region5
    $region4: #{cnn_with_inception_forward.1} parent=1 // pred_region
      _
    $region5: #{cnn_with_inception_forward.1} parent=1 // pred_fallthru
      _
    // Predicated region
    $region6: #{cnn_with_inception_forward.1} parent=1 // pred_check
      _
    $region7: #{cnn_with_inception_forward.1} parent=1 // pred_check_branch
      %12 = sbr.rel (0) target = $region9
    $region8: #{cnn_with_inception_forward.1} parent=1 // pred_region
      %s14 = ssub.s32 37888, 37888
      %15 = vsyncadd [#allocation4], %s14
      %s16 = sshll.u32 [#allocation3], 4
      %s17 = int_to_ptr.vmem [resolvable:$true] %s16
      %22 = dma.hbm_to_vmem [thread:$0]  %s1, 37888, %s17, [#allocation4], 128, 128, 8
    $region9: #{cnn_with_inception_forward.1} parent=1 // pred_fallthru
      _
    // Predicated region
    $region10: #{cnn_with_inception_forward.1} parent=1 // pred_check
      _
    $region11: #{cnn_with_inception_forward.1} parent=1 // pred_check_branch
      %24 = sbr.rel (0) target = $region13
    $region12: #{cnn_with_inception_forward.1} parent=1 // pred_region
      %25 = dma.done [#allocation4], 37888
    $region13: #{cnn_with_inception_forward.1} parent=1 // pred_fallthru
      _
    %v26 = vlaneseq
    %v27 = vshrl.u32 %v26, 7
    %v28 = vadd.s32 %v27, 8
    %v29 = vadd.s32 %v27, 16
    %v30 = vadd.s32 %v27, 24
    %v31 = vadd.s32 %v27, 32
    %v32 = vadd.s32 %v27, 40
    %vm33 = vcmp.ge.s32.totalorder %v27, 2
    %vm34 = vcmp.ge.s32.totalorder %v28, 2
    %vm35 = vcmp.ge.s32.totalorder %v29, 2
    %vm36 = vcmp.ge.s32.totalorder %v30, 2
    %vm37 = vcmp.ge.s32.totalorder %v31, 2
    %vm38 = vcmp.ge.s32.totalorder %v32, 2
    %vm39 = vcmp.lt.s32.totalorder %v27, 18
    %vm40 = vcmp.lt.s32.totalorder %v28, 18
    %vm41 = vcmp.lt.s32.totalorder %v29, 18
    %vm42 = vcmp.lt.s32.totalorder %v30, 18
    %vm43 = vcmp.lt.s32.totalorder %v31, 18
    %vm44 = vcmp.lt.s32.totalorder %v32, 18
    %vm45 = vmand %vm33, %vm39
    %vm46 = vmand %vm34, %vm40
    %vm47 = vmand %vm35, %vm41
    %vm48 = vmand %vm36, %vm42
    %vm49 = vmand %vm37, %vm43
    %vm50 = vmand %vm38, %vm44
    %vm51 = vcmp.ge.s32.totalorder %v27, 26
    %vm52 = vcmp.ge.s32.totalorder %v28, 26
    %vm53 = vcmp.ge.s32.totalorder %v29, 26
    %vm54 = vcmp.ge.s32.totalorder %v30, 26
    %vm55 = vcmp.ge.s32.totalorder %v31, 26
    %vm56 = vcmp.ge.s32.totalorder %v32, 26
    %vm57 = vcmp.lt.s32.totalorder %v27, 42
    %vm58 = vcmp.lt.s32.totalorder %v28, 42
    %vm59 = vcmp.lt.s32.totalorder %v29, 42
    %vm60 = vcmp.lt.s32.totalorder %v30, 42
    %vm61 = vcmp.lt.s32.totalorder %v31, 42
    %vm62 = vcmp.lt.s32.totalorder %v32, 42
    %vm63 = vmand %vm51, %vm57
    %vm64 = vmand %vm52, %vm58
    %vm65 = vmand %vm53, %vm59
    %vm66 = vmand %vm54, %vm60
    %vm67 = vmand %vm55, %vm61
    %vm68 = vmand %vm56, %vm62
    %vm69 = vmor %vm45, %vm63
    %vm70 = vmor %vm46, %vm64
    %vm71 = vmor %vm47, %vm65
    %vm72 = vmor %vm48, %vm66
    %vm73 = vmor %vm49, %vm67
    %vm74 = vmor %vm50, %vm68
    %v75 = vsel %vm69, 1, 0
    %v76 = vsel %vm70, 1, 0
    %v77 = vsel %vm71, 1, 0
    %v78 = vsel %vm72, 1, 0
    %v79 = vsel %vm73, 1, 0
    %v80 = vsel %vm74, 1, 0
    %v81 = vcvt.s32.f32 %v75
    %v82 = vcvt.s32.f32 %v76
    %v83 = vcvt.s32.f32 %v77
    %v84 = vcvt.s32.f32 %v78
    %v85 = vcvt.s32.f32 %v79
    %v86 = vcvt.s32.f32 %v80
    %v87 = vld [vmem:[%s0] sm:$0xff]
    %v88 = vld [vmem:[%s0 + $0x8] sm:$0xff]
    %v89 = vld [vmem:[%s0 + $0x10] sm:$0xff]
    %v90 = vld [vmem:[%s0 + $0x18] sm:$0xff]
    %v91 = vld [vmem:[%s0 + $0x20] sm:$0xff]
    %v92 = vld [vmem:[%s0 + $0x28] sm:$0xff]
    %v93 = vlaneseq
    %v94 = vand.u32 %v93, 127
    %95 = vset.pattern.permute.xlu0 0
    %96 = vperm.xlu0 %95, %v87
    %v97 = vpop.permute.xlu0 %96
    %98 = vset.pattern.permute.xlu0 0
    %99 = vperm.xlu0 %98, %v88
    %v100 = vpop.permute.xlu0 %99
    %101 = vset.pattern.permute.xlu0 0
    %102 = vperm.xlu0 %101, %v89
    %v103 = vpop.permute.xlu0 %102
    %104 = vset.pattern.permute.xlu0 0
    %105 = vperm.xlu0 %104, %v90
    %v106 = vpop.permute.xlu0 %105
    %107 = vset.pattern.permute.xlu0 0
    %108 = vperm.xlu0 %107, %v91
    %v109 = vpop.permute.xlu0 %108
    %110 = vset.pattern.permute.xlu0 0
    %111 = vperm.xlu0 %110, %v92
    %v112 = vpop.permute.xlu0 %111
    %vm113 = vcmp.eq.s32.totalorder %v97, %v94
    %vm114 = vcmp.eq.s32.totalorder %v100, %v94
    %vm115 = vcmp.eq.s32.totalorder %v103, %v94
    %vm116 = vcmp.eq.s32.totalorder %v106, %v94
    %vm117 = vcmp.eq.s32.totalorder %v109, %v94
    %vm118 = vcmp.eq.s32.totalorder %v112, %v94
    %v119 = vsel %vm113, 1, 0
    %v120 = vsel %vm114, 1, 0
    %v121 = vsel %vm115, 1, 0
    %v122 = vsel %vm116, 1, 0
    %v123 = vsel %vm117, 1, 0
    %v124 = vsel %vm118, 1, 0
    %v125 = vcvt.s32.f32 %v119
    %v126 = vcvt.s32.f32 %v120
    %v127 = vcvt.s32.f32 %v121
    %v128 = vcvt.s32.f32 %v122
    %v129 = vcvt.s32.f32 %v123
    %v130 = vcvt.s32.f32 %v124
    %v131 = vld [vmem:[#allocation3] sm:$0xff]
    %v132 = vld [vmem:[#allocation3 + $0x8] sm:$0xff]
    %v133 = vld [vmem:[#allocation3 + $0x10] sm:$0xff]
    %v134 = vld [vmem:[#allocation3 + $0x18] sm:$0xff]
    %v135 = vld [vmem:[#allocation3 + $0x20] sm:$0xff]
    %v136 = vld [vmem:[#allocation3 + $0x28] sm:$0xff]
    %v137 = vld [vmem:[#allocation3 + $0x30] sm:$0xff]
    %vm138 = vcmask 457728
    %v140 = vsel %vm138, %v125, 0
    %v143 = vsel %vm138, %v126, 0
    %v146 = vsel %vm138, %v127, 0
    %v149 = vsel %vm138, %v128, 0
    %v152 = vsel %vm138, %v129, 0
    %v155 = vsel %vm138, %v130, 0
    %157 = vmatprep.subr.mxu0 0.0
    %158 = vmatpush1.msra.mxu0 %v131
    %159 = vmatprep.subr.mxu0 0.0
    %160 = vmatpush1.msra.mxu0 %v132
    %161 = vmatprep.subr.mxu0 0.0
    %162 = vmatpush1.msra.mxu0 %v133
    %163 = vmatprep.subr.mxu0 0.0
    %164 = vmatpush1.msra.mxu0 %v134
    %165 = vmatprep.subr.mxu0 0.0
    %166 = vmatpush1.msra.mxu0 %v135
    %167 = vmatprep.subr.mxu0 0.0
    %168 = vmatpush1.msra.mxu0 %v136
    %169 = vmatprep.subr.mxu0 0.0
    %170 = vmatpush1.msra.mxu0 %v137
    %171 = vmatprep.subr.mxu0 0.0
    %172 = vmatpush1.msra.mxu0 0.0
    %173 = vmatprep.subr.mxu0 0.0
    %174 = vmatpush1.msra.mxu0 0.0
    %175 = vmatprep.subr.mxu0 0.0
    %176 = vmatpush1.msra.mxu0 0.0
    %177 = vmatprep.subr.mxu0 0.0
    %178 = vmatpush1.msra.mxu0 0.0
    %179 = vmatprep.subr.mxu0 0.0
    %180 = vmatpush1.msra.mxu0 0.0
    %181 = vmatprep.subr.mxu0 0.0
    %182 = vmatpush1.msra.mxu0 0.0
    %183 = vmatprep.subr.mxu0 0.0
    %184 = vmatpush1.msra.mxu0 0.0
    %185 = vmatprep.subr.mxu0 0.0
    %186 = vmatpush1.msra.mxu0 0.0
    %187 = vmatprep.subr.mxu0 0.0
    %188 = vmatpush1.msra.mxu0 0.0
    %189 = vmatprep.subr.mxu0 0.0
    %190 = vmatpush1.msra.mxu0 0.0
    %191 = vmatprep.subr.mxu0 0.0
    %192 = vmatpush1.msra.mxu0 0.0
    %193 = vmatprep.subr.mxu0 0.0
    %194 = vmatpush1.msra.mxu0 0.0
    %195 = vmatprep.subr.mxu0 0.0
    %196 = vmatpush1.msra.mxu0 0.0
    %197 = vmatprep.subr.mxu0 0.0
    %198 = vmatpush1.msra.mxu0 0.0
    %199 = vmatprep.subr.mxu0 0.0
    %200 = vmatpush1.msra.mxu0 0.0
    %201 = vmatprep.subr.mxu0 0.0
    %202 = vmatpush1.msra.mxu0 0.0
    %203 = vmatprep.subr.mxu0 0.0
    %204 = vmatpush1.msra.mxu0 0.0
    %205 = vmatprep.subr.mxu0 0.0
    %206 = vmatpush1.msra.mxu0 0.0
    %207 = vmatprep.subr.mxu0 0.0
    %208 = vmatpush1.msra.mxu0 0.0
    %209 = vmatprep.subr.mxu0 0.0
    %210 = vmatpush1.msra.mxu0 0.0
    %211 = vmatprep.subr.mxu0 0.0
    %212 = vmatpush1.msra.mxu0 0.0
    %213 = vmatprep.subr.mxu0 0.0
    %214 = vmatpush1.msra.mxu0 0.0
    %215 = vmatprep.subr.mxu0 0.0
    %216 = vmatpush1.msra.mxu0 0.0
    %217 = vmatprep.subr.mxu0 0.0
    %218 = vmatpush1.msra.mxu0 0.0
    %219 = vmatprep.subr.mxu0 0.0
    %220 = vmatpush1.msra.mxu0 0.0
    %221 = vmatprep.mubr.f32.mxu0 0.0
    %222 = vmatmul.mubr.f32.gmra.mrb[0].mxu0 %v140
    %v223 = vpop.f32.mrb[0].mxu0
    %v224 = vadd.f32 0.0, %v223
    %v225 = vpop.f32.mrb[0].mxu0
    %226 = vmatprep.mubr.f32.mxu0 0.0
    %227 = vmatmul.mubr.f32.gmra.mrb[0].mxu0 %v143
    %v228 = vpop.f32.mrb[0].mxu0
    %v229 = vadd.f32 0.0, %v228
    %v230 = vpop.f32.mrb[0].mxu0
    %231 = vmatprep.mubr.f32.mxu0 0.0
    %232 = vmatmul.mubr.f32.gmra.mrb[0].mxu0 %v146
    %v233 = vpop.f32.mrb[0].mxu0
    %v234 = vadd.f32 0.0, %v233
    %v235 = vpop.f32.mrb[0].mxu0
    %236 = vmatprep.mubr.f32.mxu0 0.0
    %237 = vmatmul.mubr.f32.gmra.mrb[0].mxu0 %v149
    %v238 = vpop.f32.mrb[0].mxu0
    %v239 = vadd.f32 0.0, %v238
    %v240 = vpop.f32.mrb[0].mxu0
    %241 = vmatprep.mubr.f32.mxu0 0.0
    %242 = vmatmul.mubr.f32.gmra.mrb[0].mxu0 %v152
    %v243 = vpop.f32.mrb[0].mxu0
    %v244 = vadd.f32 0.0, %v243
    %v245 = vpop.f32.mrb[0].mxu0
    %246 = vmatprep.mubr.f32.mxu0 0.0
    %247 = vmatmul.mubr.f32.gmra.mrb[0].mxu0 %v155
    %v248 = vpop.f32.mrb[0].mxu0
    %v249 = vadd.f32 0.0, %v248
    %v250 = vpop.f32.mrb[0].mxu0
    %251 = vdwg.mxu0
    %252 = vst [vmem:[#allocation2] sm:$0xff] 0.0
    %253 = vst [vmem:[#allocation2 + $0x8] sm:$0xff] 0.0
    %254 = vst [vmem:[#allocation2 + $0x10] sm:$0xff] 0.0
    %255 = vst [vmem:[#allocation2 + $0x18] sm:$0xff] 0.0
    %256 = vst [vmem:[#allocation2 + $0x20] sm:$0xff] 0.0
    %257 = vst [vmem:[#allocation2 + $0x28] sm:$0xff] 0.0
    %258 = vst [vmem:[#allocation2 + $0x30] sm:$0xff] 0.0
    %259 = vst [vmem:[#allocation2 + $0x38] sm:$0xff] 0.0
    %260 = vst [vmem:[#allocation2 + $0x8] sm:$0xff] %v224
    %261 = vst [vmem:[#allocation2 + $0x10] sm:$0xff] %v229
    %262 = vst [vmem:[#allocation2 + $0x18] sm:$0xff] %v234
    %263 = vst [vmem:[#allocation2 + $0x20] sm:$0xff] %v239
    %264 = vst [vmem:[#allocation2 + $0x28] sm:$0xff] %v244
    %265 = vst [vmem:[#allocation2 + $0x30] sm:$0xff] %v249
    %v266 = vld [vmem:[#allocation2 + $0x7] sm:$0xff]
    %v267 = vld [vmem:[#allocation2 + $0xf] sm:$0xff]
    %v268 = vld [vmem:[#allocation2 + $0x17] sm:$0xff]
    %v269 = vld [vmem:[#allocation2 + $0x1f] sm:$0xff]
    %v270 = vld [vmem:[#allocation2 + $0x27] sm:$0xff]
    %v271 = vld [vmem:[#allocation2 + $0x2f] sm:$0xff]
    %v272 = vld [vmem:[#allocation3 + $0x38] sm:$0xff]
    %v273 = vld [vmem:[#allocation3 + $0x40] sm:$0xff]
    %v274 = vld [vmem:[#allocation3 + $0x48] sm:$0xff]
    %v275 = vld [vmem:[#allocation3 + $0x50] sm:$0xff]
    %v276 = vld [vmem:[#allocation3 + $0x58] sm:$0xff]
    %v277 = vld [vmem:[#allocation3 + $0x60] sm:$0xff]
    %v278 = vld [vmem:[#allocation3 + $0x68] sm:$0xff]
    %v279 = vld [vmem:[#allocation3 + $0x70] sm:$0xff]
    %v280 = vld [vmem:[#allocation3 + $0x78] sm:$0xff]
    %v281 = vld [vmem:[#allocation3 + $0x80] sm:$0xff]
    %v282 = vld [vmem:[#allocation3 + $0x88] sm:$0xff]
    %v283 = vld [vmem:[#allocation3 + $0x90] sm:$0xff]
    %v284 = vld [vmem:[#allocation3 + $0x98] sm:$0xff]
    %v285 = vld [vmem:[#allocation3 + $0xa0] sm:$0xff]
    %v286 = vld [vmem:[#allocation3 + $0xa8] sm:$0xff]
    %v287 = vld [vmem:[#allocation3 + $0xb0] sm:$0xff]
    %v288 = vld [vmem:[#allocation2 + $0x8] sm:$0xff]
    %v289 = vld [vmem:[#allocation2 + $0x10] sm:$0xff]
    %v290 = vld [vmem:[#allocation2 + $0x18] sm:$0xff]
    %v291 = vld [vmem:[#allocation2 + $0x20] sm:$0xff]
    %v292 = vld [vmem:[#allocation2 + $0x28] sm:$0xff]
    %v293 = vld [vmem:[#allocation2 + $0x30] sm:$0xff]
    %v294 = vld [vmem:[#allocation3 + $0xb8] sm:$0xff]
    %v295 = vld [vmem:[#allocation3 + $0xc0] sm:$0xff]
    %v296 = vld [vmem:[#allocation3 + $0xc8] sm:$0xff]
    %v297 = vld [vmem:[#allocation3 + $0xd0] sm:$0xff]
    %v298 = vld [vmem:[#allocation3 + $0xd8] sm:$0xff]
    %v299 = vld [vmem:[#allocation3 + $0xe0] sm:$0xff]
    %v300 = vld [vmem:[#allocation3 + $0xe8] sm:$0xff]
    %v301 = vld [vmem:[#allocation3 + $0xf0] sm:$0xff]
    %v302 = vld [vmem:[#allocation3 + $0xf8] sm:$0xff]
    %v303 = vld [vmem:[#allocation3 + $0x100] sm:$0xff]
    %v304 = vld [vmem:[#allocation3 + $0x108] sm:$0xff]
    %v305 = vld [vmem:[#allocation3 + $0x110] sm:$0xff]
    %v306 = vld [vmem:[#allocation3 + $0x118] sm:$0xff]
    %v307 = vld [vmem:[#allocation3 + $0x120] sm:$0xff]
    %v308 = vld [vmem:[#allocation3 + $0x128] sm:$0xff]
    %v309 = vld [vmem:[#allocation3 + $0x130] sm:$0xff]
    %310 = vmatprep.subr.mxu0 0.0
    %311 = vmatpush1.msra.mxu0 %v294
    %312 = vmatprep.subr.mxu0 0.0
    %313 = vmatpush1.msra.mxu0 %v295
    %314 = vmatprep.subr.mxu0 0.0
    %315 = vmatpush1.msra.mxu0 %v296
    %316 = vmatprep.subr.mxu0 0.0
    %317 = vmatpush1.msra.mxu0 %v297
    %318 = vmatprep.subr.mxu0 0.0
    %319 = vmatpush1.msra.mxu0 %v298
    %320 = vmatprep.subr.mxu0 0.0
    %321 = vmatpush1.msra.mxu0 %v299
    %322 = vmatprep.subr.mxu0 0.0
    %323 = vmatpush1.msra.mxu0 %v300
    %324 = vmatprep.subr.mxu0 0.0
    %325 = vmatpush1.msra.mxu0 %v301
    %326 = vmatprep.subr.mxu0 0.0
    %327 = vmatpush1.msra.mxu0 %v302
    %328 = vmatprep.subr.mxu0 0.0
    %329 = vmatpush1.msra.mxu0 %v303
    %330 = vmatprep.subr.mxu0 0.0
    %331 = vmatpush1.msra.mxu0 %v304
    %332 = vmatprep.subr.mxu0 0.0
    %333 = vmatpush1.msra.mxu0 %v305
    %334 = vmatprep.subr.mxu0 0.0
    %335 = vmatpush1.msra.mxu0 %v306
    %336 = vmatprep.subr.mxu0 0.0
    %337 = vmatpush1.msra.mxu0 %v307
    %338 = vmatprep.subr.mxu0 0.0
    %339 = vmatpush1.msra.mxu0 %v308
    %340 = vmatprep.subr.mxu0 0.0
    %341 = vmatpush1.msra.mxu0 %v309
    %342 = vmatprep.subr.mxu0 0.0
    %343 = vmatpush1.msra.mxu0 0.0
    %344 = vmatprep.subr.mxu0 0.0
    %345 = vmatpush1.msra.mxu0 0.0
    %346 = vmatprep.subr.mxu0 0.0
    %347 = vmatpush1.msra.mxu0 0.0
    %348 = vmatprep.subr.mxu0 0.0
    %349 = vmatpush1.msra.mxu0 0.0
    %350 = vmatprep.subr.mxu0 0.0
    %351 = vmatpush1.msra.mxu0 0.0
    %352 = vmatprep.subr.mxu0 0.0
    %353 = vmatpush1.msra.mxu0 0.0
    %354 = vmatprep.subr.mxu0 0.0
    %355 = vmatpush1.msra.mxu0 0.0
    %356 = vmatprep.subr.mxu0 0.0
    %357 = vmatpush1.msra.mxu0 0.0
    %358 = vmatprep.subr.mxu0 0.0
    %359 = vmatpush1.msra.mxu0 0.0
    %360 = vmatprep.subr.mxu0 0.0
    %361 = vmatpush1.msra.mxu0 0.0
    %362 = vmatprep.subr.mxu0 0.0
    %363 = vmatpush1.msra.mxu0 0.0
    %364 = vmatprep.subr.mxu0 0.0
    %365 = vmatpush1.msra.mxu0 0.0
    %366 = vmatprep.subr.mxu0 0.0
    %367 = vmatpush1.msra.mxu0 0.0
    %368 = vmatprep.subr.mxu0 0.0
    %369 = vmatpush1.msra.mxu0 0.0
    %370 = vmatprep.subr.mxu0 0.0
    %371 = vmatpush1.msra.mxu0 0.0
    %372 = vmatprep.subr.mxu0 0.0
    %373 = vmatpush1.msra.mxu0 0.0
    %374 = vmatprep.mubr.f32.mxu0 0.0
    %375 = vmatmul.mubr.f32.gmra.mrb[0].mxu0 %v288
    %v376 = vpop.f32.mrb[0].mxu0
    %v377 = vadd.f32 0.0, %v376
    %v378 = vpop.f32.mrb[0].mxu0
    %379 = vmatprep.mubr.f32.mxu0 0.0
    %380 = vmatmul.mubr.f32.gmra.mrb[0].mxu0 %v289
    %v381 = vpop.f32.mrb[0].mxu0
    %v382 = vadd.f32 0.0, %v381
    %v383 = vpop.f32.mrb[0].mxu0
    %384 = vmatprep.mubr.f32.mxu0 0.0
    %385 = vmatmul.mubr.f32.gmra.mrb[0].mxu0 %v290
    %v386 = vpop.f32.mrb[0].mxu0
    %v387 = vadd.f32 0.0, %v386
    %v388 = vpop.f32.mrb[0].mxu0
    %389 = vmatprep.mubr.f32.mxu0 0.0
    %390 = vmatmul.mubr.f32.gmra.mrb[0].mxu0 %v291
    %v391 = vpop.f32.mrb[0].mxu0
    %v392 = vadd.f32 0.0, %v391
    %v393 = vpop.f32.mrb[0].mxu0
    %394 = vmatprep.mubr.f32.mxu0 0.0
    %395 = vmatmul.mubr.f32.gmra.mrb[0].mxu0 %v292
    %v396 = vpop.f32.mrb[0].mxu0
    %v397 = vadd.f32 0.0, %v396
    %v398 = vpop.f32.mrb[0].mxu0
    %399 = vmatprep.mubr.f32.mxu0 0.0
    %400 = vmatmul.mubr.f32.gmra.mrb[0].mxu0 %v293
    %v401 = vpop.f32.mrb[0].mxu0
    %v402 = vadd.f32 0.0, %v401
    %v403 = vpop.f32.mrb[0].mxu0
    %404 = vdwg.mxu0
    %405 = vmatprep.subr.mxu0 0.0
    %406 = vmatpush1.msra.mxu0 %v272
    %407 = vmatprep.subr.mxu0 0.0
    %408 = vmatpush1.msra.mxu0 %v273
    %409 = vmatprep.subr.mxu0 0.0
    %410 = vmatpush1.msra.mxu0 %v274
    %411 = vmatprep.subr.mxu0 0.0
    %412 = vmatpush1.msra.mxu0 %v275
    %413 = vmatprep.subr.mxu0 0.0
    %414 = vmatpush1.msra.mxu0 %v276
    %415 = vmatprep.subr.mxu0 0.0
    %416 = vmatpush1.msra.mxu0 %v277
    %417 = vmatprep.subr.mxu0 0.0
    %418 = vmatpush1.msra.mxu0 %v278
    %419 = vmatprep.subr.mxu0 0.0
    %420 = vmatpush1.msra.mxu0 %v279
    %421 = vmatprep.subr.mxu0 0.0
    %422 = vmatpush1.msra.mxu0 %v280
    %423 = vmatprep.subr.mxu0 0.0
    %424 = vmatpush1.msra.mxu0 %v281
    %425 = vmatprep.subr.mxu0 0.0
    %426 = vmatpush1.msra.mxu0 %v282
    %427 = vmatprep.subr.mxu0 0.0
    %428 = vmatpush1.msra.mxu0 %v283
    %429 = vmatprep.subr.mxu0 0.0
    %430 = vmatpush1.msra.mxu0 %v284
    %431 = vmatprep.subr.mxu0 0.0
    %432 = vmatpush1.msra.mxu0 %v285
    %433 = vmatprep.subr.mxu0 0.0
    %434 = vmatpush1.msra.mxu0 %v286
    %435 = vmatprep.subr.mxu0 0.0
    %436 = vmatpush1.msra.mxu0 %v287
    %437 = vmatprep.subr.mxu0 0.0
    %438 = vmatpush1.msra.mxu0 0.0
    %439 = vmatprep.subr.mxu0 0.0
    %440 = vmatpush1.msra.mxu0 0.0
    %441 = vmatprep.subr.mxu0 0.0
    %442 = vmatpush1.msra.mxu0 0.0
    %443 = vmatprep.subr.mxu0 0.0
    %444 = vmatpush1.msra.mxu0 0.0
    %445 = vmatprep.subr.mxu0 0.0
    %446 = vmatpush1.msra.mxu0 0.0
    %447 = vmatprep.subr.mxu0 0.0
    %448 = vmatpush1.msra.mxu0 0.0
    %449 = vmatprep.subr.mxu0 0.0
    %450 = vmatpush1.msra.mxu0 0.0
    %451 = vmatprep.subr.mxu0 0.0
    %452 = vmatpush1.msra.mxu0 0.0
    %453 = vmatprep.subr.mxu0 0.0
    %454 = vmatpush1.msra.mxu0 0.0
    %455 = vmatprep.subr.mxu0 0.0
    %456 = vmatpush1.msra.mxu0 0.0
    %457 = vmatprep.subr.mxu0 0.0
    %458 = vmatpush1.msra.mxu0 0.0
    %459 = vmatprep.subr.mxu0 0.0
    %460 = vmatpush1.msra.mxu0 0.0
    %461 = vmatprep.subr.mxu0 0.0
    %462 = vmatpush1.msra.mxu0 0.0
    %463 = vmatprep.subr.mxu0 0.0
    %464 = vmatpush1.msra.mxu0 0.0
    %465 = vmatprep.subr.mxu0 0.0
    %466 = vmatpush1.msra.mxu0 0.0
    %467 = vmatprep.subr.mxu0 0.0
    %468 = vmatpush1.msra.mxu0 0.0
    %469 = vmatprep.mubr.f32.mxu0 0.0
    %470 = vmatmul.mubr.f32.gmra.mrb[0].mxu0 %v266
    %v471 = vpop.f32.mrb[0].mxu0
    %v472 = vadd.f32 %v377, %v471
    %v473 = vpop.f32.mrb[0].mxu0
    %474 = vmatprep.mubr.f32.mxu0 0.0
    %475 = vmatmul.mubr.f32.gmra.mrb[0].mxu0 %v267
    %v476 = vpop.f32.mrb[0].mxu0
    %v477 = vadd.f32 %v382, %v476
    %v478 = vpop.f32.mrb[0].mxu0
    %479 = vmatprep.mubr.f32.mxu0 0.0
    %480 = vmatmul.mubr.f32.gmra.mrb[0].mxu0 %v268
    %v481 = vpop.f32.mrb[0].mxu0
    %v482 = vadd.f32 %v387, %v481
    %v483 = vpop.f32.mrb[0].mxu0
    %484 = vmatprep.mubr.f32.mxu0 0.0
    %485 = vmatmul.mubr.f32.gmra.mrb[0].mxu0 %v269
    %v486 = vpop.f32.mrb[0].mxu0
    %v487 = vadd.f32 %v392, %v486
    %v488 = vpop.f32.mrb[0].mxu0
    %489 = vmatprep.mubr.f32.mxu0 0.0
    %490 = vmatmul.mubr.f32.gmra.mrb[0].mxu0 %v270
    %v491 = vpop.f32.mrb[0].mxu0
    %v492 = vadd.f32 %v397, %v491
    %v493 = vpop.f32.mrb[0].mxu0
    %494 = vmatprep.mubr.f32.mxu0 0.0
    %495 = vmatmul.mubr.f32.gmra.mrb[0].mxu0 %v271
    %v496 = vpop.f32.mrb[0].mxu0
    %v497 = vadd.f32 %v402, %v496
    %v498 = vpop.f32.mrb[0].mxu0
    %499 = vdwg.mxu0
    %v500 = vld [vmem:[#allocation2 + $0x9] sm:$0xff]
    %v501 = vld [vmem:[#allocation2 + $0x11] sm:$0xff]
    %v502 = vld [vmem:[#allocation2 + $0x19] sm:$0xff]
    %v503 = vld [vmem:[#allocation2 + $0x21] sm:$0xff]
    %v504 = vld [vmem:[#allocation2 + $0x29] sm:$0xff]
    %v505 = vld [vmem:[#allocation2 + $0x31] sm:$0xff]
    %v506 = vld [vmem:[#allocation3 + $0x138] sm:$0xff]
    %v507 = vld [vmem:[#allocation3 + $0x140] sm:$0xff]
    %v508 = vld [vmem:[#allocation3 + $0x148] sm:$0xff]
    %v509 = vld [vmem:[#allocation3 + $0x150] sm:$0xff]
    %v510 = vld [vmem:[#allocation3 + $0x158] sm:$0xff]
    %v511 = vld [vmem:[#allocation3 + $0x160] sm:$0xff]
    %v512 = vld [vmem:[#allocation3 + $0x168] sm:$0xff]
    %v513 = vld [vmem:[#allocation3 + $0x170] sm:$0xff]
    %v514 = vld [vmem:[#allocation3 + $0x178] sm:$0xff]
    %v515 = vld [vmem:[#allocation3 + $0x180] sm:$0xff]
    %v516 = vld [vmem:[#allocation3 + $0x188] sm:$0xff]
    %v517 = vld [vmem:[#allocation3 + $0x190] sm:$0xff]
    %v518 = vld [vmem:[#allocation3 + $0x198] sm:$0xff]
    %v519 = vld [vmem:[#allocation3 + $0x1a0] sm:$0xff]
    %v520 = vld [vmem:[#allocation3 + $0x1a8] sm:$0xff]
    %v521 = vld [vmem:[#allocation3 + $0x1b0] sm:$0xff]
    %522 = vmatprep.subr.mxu0 0.0
    %523 = vmatpush1.msra.mxu0 %v506
    %524 = vmatprep.subr.mxu0 0.0
    %525 = vmatpush1.msra.mxu0 %v507
    %526 = vmatprep.subr.mxu0 0.0
    %527 = vmatpush1.msra.mxu0 %v508
    %528 = vmatprep.subr.mxu0 0.0
    %529 = vmatpush1.msra.mxu0 %v509
    %530 = vmatprep.subr.mxu0 0.0
    %531 = vmatpush1.msra.mxu0 %v510
    %532 = vmatprep.subr.mxu0 0.0
    %533 = vmatpush1.msra.mxu0 %v511
    %534 = vmatprep.subr.mxu0 0.0
    %535 = vmatpush1.msra.mxu0 %v512
    %536 = vmatprep.subr.mxu0 0.0
    %537 = vmatpush1.msra.mxu0 %v513
    %538 = vmatprep.subr.mxu0 0.0
    %539 = vmatpush1.msra.mxu0 %v514
    %540 = vmatprep.subr.mxu0 0.0
    %541 = vmatpush1.msra.mxu0 %v515
    %542 = vmatprep.subr.mxu0 0.0
    %543 = vmatpush1.msra.mxu0 %v516
    %544 = vmatprep.subr.mxu0 0.0
    %545 = vmatpush1.msra.mxu0 %v517
    %546 = vmatprep.subr.mxu0 0.0
    %547 = vmatpush1.msra.mxu0 %v518
    %548 = vmatprep.subr.mxu0 0.0
    %549 = vmatpush1.msra.mxu0 %v519
    %550 = vmatprep.subr.mxu0 0.0
    %551 = vmatpush1.msra.mxu0 %v520
    %552 = vmatprep.subr.mxu0 0.0
    %553 = vmatpush1.msra.mxu0 %v521
    %554 = vmatprep.subr.mxu0 0.0
    %555 = vmatpush1.msra.mxu0 0.0
    %556 = vmatprep.subr.mxu0 0.0
    %557 = vmatpush1.msra.mxu0 0.0
    %558 = vmatprep.subr.mxu0 0.0
    %559 = vmatpush1.msra.mxu0 0.0
    %560 = vmatprep.subr.mxu0 0.0
    %561 = vmatpush1.msra.mxu0 0.0
    %562 = vmatprep.subr.mxu0 0.0
    %563 = vmatpush1.msra.mxu0 0.0
    %564 = vmatprep.subr.mxu0 0.0
    %565 = vmatpush1.msra.mxu0 0.0
    %566 = vmatprep.subr.mxu0 0.0
    %567 = vmatpush1.msra.mxu0 0.0
    %568 = vmatprep.subr.mxu0 0.0
    %569 = vmatpush1.msra.mxu0 0.0
    %570 = vmatprep.subr.mxu0 0.0
    %571 = vmatpush1.msra.mxu0 0.0
    %572 = vmatprep.subr.mxu0 0.0
    %573 = vmatpush1.msra.mxu0 0.0
    %574 = vmatprep.subr.mxu0 0.0
    %575 = vmatpush1.msra.mxu0 0.0
    %576 = vmatprep.subr.mxu0 0.0
    %577 = vmatpush1.msra.mxu0 0.0
    %578 = vmatprep.subr.mxu0 0.0
    %579 = vmatpush1.msra.mxu0 0.0
    %580 = vmatprep.subr.mxu0 0.0
    %581 = vmatpush1.msra.mxu0 0.0
    %582 = vmatprep.subr.mxu0 0.0
    %583 = vmatpush1.msra.mxu0 0.0
    %584 = vmatprep.subr.mxu0 0.0
    %585 = vmatpush1.msra.mxu0 0.0
    %586 = vmatprep.mubr.f32.mxu0 0.0
    %587 = vmatmul.mubr.f32.gmra.mrb[0].mxu0 %v500
    %v588 = vpop.f32.mrb[0].mxu0
    %v589 = vadd.f32 0.0, %v588
    %v590 = vpop.f32.mrb[0].mxu0
    %591 = vmatprep.mubr.f32.mxu0 0.0
    %592 = vmatmul.mubr.f32.gmra.mrb[0].mxu0 %v501
    %v593 = vpop.f32.mrb[0].mxu0
    %v594 = vadd.f32 0.0, %v593
    %v595 = vpop.f32.mrb[0].mxu0
    %596 = vmatprep.mubr.f32.mxu0 0.0
    %597 = vmatmul.mubr.f32.gmra.mrb[0].mxu0 %v502
    %v598 = vpop.f32.mrb[0].mxu0
    %v599 = vadd.f32 0.0, %v598
    %v600 = vpop.f32.mrb[0].mxu0
    %601 = vmatprep.mubr.f32.mxu0 0.0
    %602 = vmatmul.mubr.f32.gmra.mrb[0].mxu0 %v503
    %v603 = vpop.f32.mrb[0].mxu0
    %v604 = vadd.f32 0.0, %v603
    %v605 = vpop.f32.mrb[0].mxu0
    %606 = vmatprep.mubr.f32.mxu0 0.0
    %607 = vmatmul.mubr.f32.gmra.mrb[0].mxu0 %v504
    %v608 = vpop.f32.mrb[0].mxu0
    %v609 = vadd.f32 0.0, %v608
    %v610 = vpop.f32.mrb[0].mxu0
    %611 = vmatprep.mubr.f32.mxu0 0.0
    %612 = vmatmul.mubr.f32.gmra.mrb[0].mxu0 %v505
    %v613 = vpop.f32.mrb[0].mxu0
    %v614 = vadd.f32 0.0, %v613
    %v615 = vpop.f32.mrb[0].mxu0
    %616 = vdwg.mxu0
    %v617 = vadd.f32 %v472, %v589
    %v618 = vadd.f32 %v477, %v594
    %v619 = vadd.f32 %v482, %v599
    %v620 = vadd.f32 %v487, %v604
    %v621 = vadd.f32 %v492, %v609
    %v622 = vadd.f32 %v497, %v614
    %v623 = vld [vmem:[#allocation3 + $0x938] sm:$0x1]
    %v624 = vlaneseq
    %v625 = vshrl.u32 %v624, 7
    %v626 = vsub.s32 0, %v625
    %v627 = vrot.slane %v623, %v626
    %v628 = vadd.f32 %v617, %v627
    %v629 = vadd.f32 %v618, %v627
    %v630 = vadd.f32 %v619, %v627
    %v631 = vadd.f32 %v620, %v627
    %v632 = vadd.f32 %v621, %v627
    %v633 = vadd.f32 %v622, %v627
    %v634 = vmax.f32 %v628, 0.0
    %v635 = vmax.f32 %v629, 0.0
    %v636 = vmax.f32 %v630, 0.0
    %v637 = vmax.f32 %v631, 0.0
    %v638 = vmax.f32 %v632, 0.0
    %v639 = vmax.f32 %v633, 0.0
    %v640 = vmul.f32 %v634, %v81
    %v641 = vmul.f32 %v635, %v82
    %v642 = vmul.f32 %v636, %v83
    %v643 = vmul.f32 %v637, %v84
    %v644 = vmul.f32 %v638, %v85
    %v645 = vmul.f32 %v639, %v86
    %646 = vst [vmem:[#allocation2 + $0x8] sm:$0xff] %v640
    %647 = vst [vmem:[#allocation2 + $0x10] sm:$0xff] %v641
    %648 = vst [vmem:[#allocation2 + $0x18] sm:$0xff] %v642
    %649 = vst [vmem:[#allocation2 + $0x20] sm:$0xff] %v643
    %650 = vst [vmem:[#allocation2 + $0x28] sm:$0xff] %v644
    %651 = vst [vmem:[#allocation2 + $0x30] sm:$0xff] %v645
    %v652 = vld [vmem:[#allocation2 + $0x6] sm:$0xff]
    %v653 = vld [vmem:[#allocation2 + $0xe] sm:$0xff]
    %v654 = vld [vmem:[#allocation2 + $0x16] sm:$0xff]
    %v655 = vld [vmem:[#allocation2 + $0x1e] sm:$0xff]
    %v656 = vld [vmem:[#allocation2 + $0x26] sm:$0xff]
    %v657 = vld [vmem:[#allocation2 + $0x2e] sm:$0xff]
    %v658 = vld [vmem:[#allocation3 + $0x1b8] sm:$0xff]
    %v659 = vld [vmem:[#allocation3 + $0x1c0] sm:$0xff]
    %v660 = vld [vmem:[#allocation3 + $0x1c8] sm:$0xff]
    %v661 = vld [vmem:[#allocation3 + $0x1d0] sm:$0xff]
    %v662 = vld [vmem:[#allocation3 + $0x1d8] sm:$0xff]
    %v663 = vld [vmem:[#allocation3 + $0x1e0] sm:$0xff]
    %v664 = vld [vmem:[#allocation3 + $0x1e8] sm:$0xff]
    %v665 = vld [vmem:[#allocation3 + $0x1f0] sm:$0xff]
    %v666 = vld [vmem:[#allocation3 + $0x1f8] sm:$0xff]
    %v667 = vld [vmem:[#allocation3 + $0x200] sm:$0xff]
    %v668 = vld [vmem:[#allocation3 + $0x208] sm:$0xff]
    %v669 = vld [vmem:[#allocation3 + $0x210] sm:$0xff]
    %v670 = vld [vmem:[#allocation3 + $0x218] sm:$0xff]
    %v671 = vld [vmem:[#allocation3 + $0x220] sm:$0xff]
    %v672 = vld [vmem:[#allocation3 + $0x228] sm:$0xff]
    %v673 = vld [vmem:[#allocation3 + $0x230] sm:$0xff]
    %v674 = vld [vmem:[#allocation2 + $0x7] sm:$0xff]
    %v675 = vld [vmem:[#allocation2 + $0xf] sm:$0xff]
    %v676 = vld [vmem:[#allocation2 + $0x17] sm:$0xff]
    %v677 = vld [vmem:[#allocation2 + $0x1f] sm:$0xff]
    %v678 = vld [vmem:[#allocation2 + $0x27] sm:$0xff]
    %v679 = vld [vmem:[#allocation2 + $0x2f] sm:$0xff]
    %v680 = vld [vmem:[#allocation3 + $0x238] sm:$0xff]
    %v681 = vld [vmem:[#allocation3 + $0x240] sm:$0xff]
    %v682 = vld [vmem:[#allocation3 + $0x248] sm:$0xff]
    %v683 = vld [vmem:[#allocation3 + $0x250] sm:$0xff]
    %v684 = vld [vmem:[#allocation3 + $0x258] sm:$0xff]
    %v685 = vld [vmem:[#allocation3 + $0x260] sm:$0xff]
    %v686 = vld [vmem:[#allocation3 + $0x268] sm:$0xff]
    %v687 = vld [vmem:[#allocation3 + $0x270] sm:$0xff]
    %v688 = vld [vmem:[#allocation3 + $0x278] sm:$0xff]
    %v689 = vld [vmem:[#allocation3 + $0x280] sm:$0xff]
    %v690 = vld [vmem:[#allocation3 + $0x288] sm:$0xff]
    %v691 = vld [vmem:[#allocation3 + $0x290] sm:$0xff]
    %v692 = vld [vmem:[#allocation3 + $0x298] sm:$0xff]
    %v693 = vld [vmem:[#allocation3 + $0x2a0] sm:$0xff]
    %v694 = vld [vmem:[#allocation3 + $0x2a8] sm:$0xff]
    %v695 = vld [vmem:[#allocation3 + $0x2b0] sm:$0xff]
    %696 = vmatprep.subr.mxu0 0.0
    %697 = vmatpush1.msra.mxu0 %v680
    %698 = vmatprep.subr.mxu0 0.0
    %699 = vmatpush1.msra.mxu0 %v681
    %700 = vmatprep.subr.mxu0 0.0
    %701 = vmatpush1.msra.mxu0 %v682
    %702 = vmatprep.subr.mxu0 0.0
    %703 = vmatpush1.msra.mxu0 %v683
    %704 = vmatprep.subr.mxu0 0.0
    %705 = vmatpush1.msra.mxu0 %v684
    %706 = vmatprep.subr.mxu0 0.0
    %707 = vmatpush1.msra.mxu0 %v685
    %708 = vmatprep.subr.mxu0 0.0
    %709 = vmatpush1.msra.mxu0 %v686
    %710 = vmatprep.subr.mxu0 0.0
    %711 = vmatpush1.msra.mxu0 %v687
    %712 = vmatprep.subr.mxu0 0.0
    %713 = vmatpush1.msra.mxu0 %v688
    %714 = vmatprep.subr.mxu0 0.0
    %715 = vmatpush1.msra.mxu0 %v689
    %716 = vmatprep.subr.mxu0 0.0
    %717 = vmatpush1.msra.mxu0 %v690
    %718 = vmatprep.subr.mxu0 0.0
    %719 = vmatpush1.msra.mxu0 %v691
    %720 = vmatprep.subr.mxu0 0.0
    %721 = vmatpush1.msra.mxu0 %v692
    %722 = vmatprep.subr.mxu0 0.0
    %723 = vmatpush1.msra.mxu0 %v693
    %724 = vmatprep.subr.mxu0 0.0
    %725 = vmatpush1.msra.mxu0 %v694
    %726 = vmatprep.subr.mxu0 0.0
    %727 = vmatpush1.msra.mxu0 %v695
    %728 = vmatprep.subr.mxu0 0.0
    %729 = vmatpush1.msra.mxu0 0.0
    %730 = vmatprep.subr.mxu0 0.0
    %731 = vmatpush1.msra.mxu0 0.0
    %732 = vmatprep.subr.mxu0 0.0
    %733 = vmatpush1.msra.mxu0 0.0
    %734 = vmatprep.subr.mxu0 0.0
    %735 = vmatpush1.msra.mxu0 0.0
    %736 = vmatprep.subr.mxu0 0.0
    %737 = vmatpush1.msra.mxu0 0.0
    %738 = vmatprep.subr.mxu0 0.0
    %739 = vmatpush1.msra.mxu0 0.0
    %740 = vmatprep.subr.mxu0 0.0
    %741 = vmatpush1.msra.mxu0 0.0
    %742 = vmatprep.subr.mxu0 0.0
    %743 = vmatpush1.msra.mxu0 0.0
    %744 = vmatprep.subr.mxu0 0.0
    %745 = vmatpush1.msra.mxu0 0.0
    %746 = vmatprep.subr.mxu0 0.0
    %747 = vmatpush1.msra.mxu0 0.0
    %748 = vmatprep.subr.mxu0 0.0
    %749 = vmatpush1.msra.mxu0 0.0
    %750 = vmatprep.subr.mxu0 0.0
    %751 = vmatpush1.msra.mxu0 0.0
    %752 = vmatprep.subr.mxu0 0.0
    %753 = vmatpush1.msra.mxu0 0.0
    %754 = vmatprep.subr.mxu0 0.0
    %755 = vmatpush1.msra.mxu0 0.0
    %756 = vmatprep.subr.mxu0 0.0
    %757 = vmatpush1.msra.mxu0 0.0
    %758 = vmatprep.subr.mxu0 0.0
    %759 = vmatpush1.msra.mxu0 0.0
    %760 = vmatprep.mubr.f32.mxu0 0.0
    %761 = vmatmul.mubr.f32.gmra.mrb[0].mxu0 %v674
    %v762 = vpop.f32.mrb[0].mxu0
    %v763 = vadd.f32 0.0, %v762
    %v764 = vpop.f32.mrb[0].mxu0
    %765 = vmatprep.mubr.f32.mxu0 0.0
    %766 = vmatmul.mubr.f32.gmra.mrb[0].mxu0 %v675
    %v767 = vpop.f32.mrb[0].mxu0
    %v768 = vadd.f32 0.0, %v767
    %v769 = vpop.f32.mrb[0].mxu0
    %770 = vmatprep.mubr.f32.mxu0 0.0
    %771 = vmatmul.mubr.f32.gmra.mrb[0].mxu0 %v676
    %v772 = vpop.f32.mrb[0].mxu0
    %v773 = vadd.f32 0.0, %v772
    %v774 = vpop.f32.mrb[0].mxu0
    %775 = vmatprep.mubr.f32.mxu0 0.0
    %776 = vmatmul.mubr.f32.gmra.mrb[0].mxu0 %v677
    %v777 = vpop.f32.mrb[0].mxu0
    %v778 = vadd.f32 0.0, %v777
    %v779 = vpop.f32.mrb[0].mxu0
    %780 = vmatprep.mubr.f32.mxu0 0.0
    %781 = vmatmul.mubr.f32.gmra.mrb[0].mxu0 %v678
    %v782 = vpop.f32.mrb[0].mxu0
    %v783 = vadd.f32 0.0, %v782
    %v784 = vpop.f32.mrb[0].mxu0
    %785 = vmatprep.mubr.f32.mxu0 0.0
    %786 = vmatmul.mubr.f32.gmra.mrb[0].mxu0 %v679
    %v787 = vpop.f32.mrb[0].mxu0
    %v788 = vadd.f32 0.0, %v787
    %v789 = vpop.f32.mrb[0].mxu0
    %790 = vdwg.mxu0
    %791 = vmatprep.subr.mxu0 0.0
    %792 = vmatpush1.msra.mxu0 %v658
    %793 = vmatprep.subr.mxu0 0.0
    %794 = vmatpush1.msra.mxu0 %v659
    %795 = vmatprep.subr.mxu0 0.0
    %796 = vmatpush1.msra.mxu0 %v660
    %797 = vmatprep.subr.mxu0 0.0
    %798 = vmatpush1.msra.mxu0 %v661
    %799 = vmatprep.subr.mxu0 0.0
    %800 = vmatpush1.msra.mxu0 %v662
    %801 = vmatprep.subr.mxu0 0.0
    %802 = vmatpush1.msra.mxu0 %v663
    %803 = vmatprep.subr.mxu0 0.0
    %804 = vmatpush1.msra.mxu0 %v664
    %805 = vmatprep.subr.mxu0 0.0
    %806 = vmatpush1.msra.mxu0 %v665
    %807 = vmatprep.subr.mxu0 0.0
    %808 = vmatpush1.msra.mxu0 %v666
    %809 = vmatprep.subr.mxu0 0.0
    %810 = vmatpush1.msra.mxu0 %v667
    %811 = vmatprep.subr.mxu0 0.0
    %812 = vmatpush1.msra.mxu0 %v668
    %813 = vmatprep.subr.mxu0 0.0
    %814 = vmatpush1.msra.mxu0 %v669
    %815 = vmatprep.subr.mxu0 0.0
    %816 = vmatpush1.msra.mxu0 %v670
    %817 = vmatprep.subr.mxu0 0.0
    %818 = vmatpush1.msra.mxu0 %v671
    %819 = vmatprep.subr.mxu0 0.0
    %820 = vmatpush1.msra.mxu0 %v672
    %821 = vmatprep.subr.mxu0 0.0
    %822 = vmatpush1.msra.mxu0 %v673
    %823 = vmatprep.subr.mxu0 0.0
    %824 = vmatpush1.msra.mxu0 0.0
    %825 = vmatprep.subr.mxu0 0.0
    %826 = vmatpush1.msra.mxu0 0.0
    %827 = vmatprep.subr.mxu0 0.0
    %828 = vmatpush1.msra.mxu0 0.0
    %829 = vmatprep.subr.mxu0 0.0
    %830 = vmatpush1.msra.mxu0 0.0
    %831 = vmatprep.subr.mxu0 0.0
    %832 = vmatpush1.msra.mxu0 0.0
    %833 = vmatprep.subr.mxu0 0.0
    %834 = vmatpush1.msra.mxu0 0.0
    %835 = vmatprep.subr.mxu0 0.0
    %836 = vmatpush1.msra.mxu0 0.0
    %837 = vmatprep.subr.mxu0 0.0
    %838 = vmatpush1.msra.mxu0 0.0
    %839 = vmatprep.subr.mxu0 0.0
    %840 = vmatpush1.msra.mxu0 0.0
    %841 = vmatprep.subr.mxu0 0.0
    %842 = vmatpush1.msra.mxu0 0.0
    %843 = vmatprep.subr.mxu0 0.0
    %844 = vmatpush1.msra.mxu0 0.0
    %845 = vmatprep.subr.mxu0 0.0
    %846 = vmatpush1.msra.mxu0 0.0
    %847 = vmatprep.subr.mxu0 0.0
    %848 = vmatpush1.msra.mxu0 0.0
    %849 = vmatprep.subr.mxu0 0.0
    %850 = vmatpush1.msra.mxu0 0.0
    %851 = vmatprep.subr.mxu0 0.0
    %852 = vmatpush1.msra.mxu0 0.0
    %853 = vmatprep.subr.mxu0 0.0
    %854 = vmatpush1.msra.mxu0 0.0
    %855 = vmatprep.mubr.f32.mxu0 0.0
    %856 = vmatmul.mubr.f32.gmra.mrb[0].mxu0 %v652
    %v857 = vpop.f32.mrb[0].mxu0
    %v858 = vadd.f32 %v763, %v857
    %v859 = vpop.f32.mrb[0].mxu0
    %860 = vmatprep.mubr.f32.mxu0 0.0
    %861 = vmatmul.mubr.f32.gmra.mrb[0].mxu0 %v653
    %v862 = vpop.f32.mrb[0].mxu0
    %v863 = vadd.f32 %v768, %v862
    %v864 = vpop.f32.mrb[0].mxu0
    %865 = vmatprep.mubr.f32.mxu0 0.0
    %866 = vmatmul.mubr.f32.gmra.mrb[0].mxu0 %v654
    %v867 = vpop.f32.mrb[0].mxu0
    %v868 = vadd.f32 %v773, %v867
    %v869 = vpop.f32.mrb[0].mxu0
    %870 = vmatprep.mubr.f32.mxu0 0.0
    %871 = vmatmul.mubr.f32.gmra.mrb[0].mxu0 %v655
    %v872 = vpop.f32.mrb[0].mxu0
    %v873 = vadd.f32 %v778, %v872
    %v874 = vpop.f32.mrb[0].mxu0
    %875 = vmatprep.mubr.f32.mxu0 0.0
    %876 = vmatmul.mubr.f32.gmra.mrb[0].mxu0 %v656
    %v877 = vpop.f32.mrb[0].mxu0
    %v878 = vadd.f32 %v783, %v877
    %v879 = vpop.f32.mrb[0].mxu0
    %880 = vmatprep.mubr.f32.mxu0 0.0
    %881 = vmatmul.mubr.f32.gmra.mrb[0].mxu0 %v657
    %v882 = vpop.f32.mrb[0].mxu0
    %v883 = vadd.f32 %v788, %v882
    %v884 = vpop.f32.mrb[0].mxu0
    %885 = vdwg.mxu0
    %v886 = vld [vmem:[#allocation2 + $0x8] sm:$0xff]
    %v887 = vld [vmem:[#allocation2 + $0x10] sm:$0xff]
    %v888 = vld [vmem:[#allocation2 + $0x18] sm:$0xff]
    %v889 = vld [vmem:[#allocation2 + $0x20] sm:$0xff]
    %v890 = vld [vmem:[#allocation2 + $0x28] sm:$0xff]
    %v891 = vld [vmem:[#allocation2 + $0x30] sm:$0xff]
    %v892 = vld [vmem:[#allocation3 + $0x2b8] sm:$0xff]
    %v893 = vld [vmem:[#allocation3 + $0x2c0] sm:$0xff]
    %v894 = vld [vmem:[#allocation3 + $0x2c8] sm:$0xff]
    %v895 = vld [vmem:[#allocation3 + $0x2d0] sm:$0xff]
    %v896 = vld [vmem:[#allocation3 + $0x2d8] sm:$0xff]
    %v897 = vld [vmem:[#allocation3 + $0x2e0] sm:$0xff]
    %v898 = vld [vmem:[#allocation3 + $0x2e8] sm:$0xff]
    %v899 = vld [vmem:[#allocation3 + $0x2f0] sm:$0xff]
    %v900 = vld [vmem:[#allocation3 + $0x2f8] sm:$0xff]
    %v901 = vld [vmem:[#allocation3 + $0x300] sm:$0xff]
    %v902 = vld [vmem:[#allocation3 + $0x308] sm:$0xff]
    %v903 = vld [vmem:[#allocation3 + $0x310] sm:$0xff]
    %v904 = vld [vmem:[#allocation3 + $0x318] sm:$0xff]
    %v905 = vld [vmem:[#allocation3 + $0x320] sm:$0xff]
    %v906 = vld [vmem:[#allocation3 + $0x328] sm:$0xff]
    %v907 = vld [vmem:[#allocation3 + $0x330] sm:$0xff]
    %908 = vmatprep.subr.mxu0 0.0
    %909 = vmatpush1.msra.mxu0 %v892
    %910 = vmatprep.subr.mxu0 0.0
    %911 = vmatpush1.msra.mxu0 %v893
    %912 = vmatprep.subr.mxu0 0.0
    %913 = vmatpush1.msra.mxu0 %v894
    %914 = vmatprep.subr.mxu0 0.0
    %915 = vmatpush1.msra.mxu0 %v895
    %916 = vmatprep.subr.mxu0 0.0
    %917 = vmatpush1.msra.mxu0 %v896
    %918 = vmatprep.subr.mxu0 0.0
    %919 = vmatpush1.msra.mxu0 %v897
    %920 = vmatprep.subr.mxu0 0.0
    %921 = vmatpush1.msra.mxu0 %v898
    %922 = vmatprep.subr.mxu0 0.0
    %923 = vmatpush1.msra.mxu0 %v899
    %924 = vmatprep.subr.mxu0 0.0
    %925 = vmatpush1.msra.mxu0 %v900
    %926 = vmatprep.subr.mxu0 0.0
    %927 = vmatpush1.msra.mxu0 %v901
    %928 = vmatprep.subr.mxu0 0.0
    %929 = vmatpush1.msra.mxu0 %v902
    %930 = vmatprep.subr.mxu0 0.0
    %931 = vmatpush1.msra.mxu0 %v903
    %932 = vmatprep.subr.mxu0 0.0
    %933 = vmatpush1.msra.mxu0 %v904
    %934 = vmatprep.subr.mxu0 0.0
    %935 = vmatpush1.msra.mxu0 %v905
    %936 = vmatprep.subr.mxu0 0.0
    %937 = vmatpush1.msra.mxu0 %v906
    %938 = vmatprep.subr.mxu0 0.0
    %939 = vmatpush1.msra.mxu0 %v907
    %940 = vmatprep.subr.mxu0 0.0
    %941 = vmatpush1.msra.mxu0 0.0
    %942 = vmatprep.subr.mxu0 0.0
    %943 = vmatpush1.msra.mxu0 0.0
    %944 = vmatprep.subr.mxu0 0.0
    %945 = vmatpush1.msra.mxu0 0.0
    %946 = vmatprep.subr.mxu0 0.0
    %947 = vmatpush1.msra.mxu0 0.0
    %948 = vmatprep.subr.mxu0 0.0
    %949 = vmatpush1.msra.mxu0 0.0
    %950 = vmatprep.subr.mxu0 0.0
    %951 = vmatpush1.msra.mxu0 0.0
    %952 = vmatprep.subr.mxu0 0.0
    %953 = vmatpush1.msra.mxu0 0.0
    %954 = vmatprep.subr.mxu0 0.0
    %955 = vmatpush1.msra.mxu0 0.0
    %956 = vmatprep.subr.mxu0 0.0
    %957 = vmatpush1.msra.mxu0 0.0
    %958 = vmatprep.subr.mxu0 0.0
    %959 = vmatpush1.msra.mxu0 0.0
    %960 = vmatprep.subr.mxu0 0.0
    %961 = vmatpush1.msra.mxu0 0.0
    %962 = vmatprep.subr.mxu0 0.0
    %963 = vmatpush1.msra.mxu0 0.0
    %964 = vmatprep.subr.mxu0 0.0
    %965 = vmatpush1.msra.mxu0 0.0
    %966 = vmatprep.subr.mxu0 0.0
    %967 = vmatpush1.msra.mxu0 0.0
    %968 = vmatprep.subr.mxu0 0.0
    %969 = vmatpush1.msra.mxu0 0.0
    %970 = vmatprep.subr.mxu0 0.0
    %971 = vmatpush1.msra.mxu0 0.0
    %972 = vmatprep.mubr.f32.mxu0 0.0
    %973 = vmatmul.mubr.f32.gmra.mrb[0].mxu0 %v886
    %v974 = vpop.f32.mrb[0].mxu0
    %v975 = vadd.f32 0.0, %v974
    %v976 = vpop.f32.mrb[0].mxu0
    %977 = vmatprep.mubr.f32.mxu0 0.0
    %978 = vmatmul.mubr.f32.gmra.mrb[0].mxu0 %v887
    %v979 = vpop.f32.mrb[0].mxu0
    %v980 = vadd.f32 0.0, %v979
    %v981 = vpop.f32.mrb[0].mxu0
    %982 = vmatprep.mubr.f32.mxu0 0.0
    %983 = vmatmul.mubr.f32.gmra.mrb[0].mxu0 %v888
    %v984 = vpop.f32.mrb[0].mxu0
    %v985 = vadd.f32 0.0, %v984
    %v986 = vpop.f32.mrb[0].mxu0
    %987 = vmatprep.mubr.f32.mxu0 0.0
    %988 = vmatmul.mubr.f32.gmra.mrb[0].mxu0 %v889
    %v989 = vpop.f32.mrb[0].mxu0
    %v990 = vadd.f32 0.0, %v989
    %v991 = vpop.f32.mrb[0].mxu0
    %992 = vmatprep.mubr.f32.mxu0 0.0
    %993 = vmatmul.mubr.f32.gmra.mrb[0].mxu0 %v890
    %v994 = vpop.f32.mrb[0].mxu0
    %v995 = vadd.f32 0.0, %v994
    %v996 = vpop.f32.mrb[0].mxu0
    %997 = vmatprep.mubr.f32.mxu0 0.0
    %998 = vmatmul.mubr.f32.gmra.mrb[0].mxu0 %v891
    %v999 = vpop.f32.mrb[0].mxu0
    %v1000 = vadd.f32 0.0, %v999
    %v1001 = vpop.f32.mrb[0].mxu0
    %1002 = vdwg.mxu0
    %v1003 = vadd.f32 %v858, %v975
    %v1004 = vadd.f32 %v863, %v980
    %v1005 = vadd.f32 %v868, %v985
    %v1006 = vadd.f32 %v873, %v990
    %v1007 = vadd.f32 %v878, %v995
    %v1008 = vadd.f32 %v883, %v1000
    %v1009 = vld [vmem:[#allocation2 + $0x9] sm:$0xff]
    %v1010 = vld [vmem:[#allocation2 + $0x11] sm:$0xff]
    %v1011 = vld [vmem:[#allocation2 + $0x19] sm:$0xff]
    %v1012 = vld [vmem:[#allocation2 + $0x21] sm:$0xff]
    %v1013 = vld [vmem:[#allocation2 + $0x29] sm:$0xff]
    %v1014 = vld [vmem:[#allocation2 + $0x31] sm:$0xff]
    %v1015 = vld [vmem:[#allocation3 + $0x338] sm:$0xff]
    %v1016 = vld [vmem:[#allocation3 + $0x340] sm:$0xff]
    %v1017 = vld [vmem:[#allocation3 + $0x348] sm:$0xff]
    %v1018 = vld [vmem:[#allocation3 + $0x350] sm:$0xff]
    %v1019 = vld [vmem:[#allocation3 + $0x358] sm:$0xff]
    %v1020 = vld [vmem:[#allocation3 + $0x360] sm:$0xff]
    %v1021 = vld [vmem:[#allocation3 + $0x368] sm:$0xff]
    %v1022 = vld [vmem:[#allocation3 + $0x370] sm:$0xff]
    %v1023 = vld [vmem:[#allocation3 + $0x378] sm:$0xff]
    %v1024 = vld [vmem:[#allocation3 + $0x380] sm:$0xff]
    %v1025 = vld [vmem:[#allocation3 + $0x388] sm:$0xff]
    %v1026 = vld [vmem:[#allocation3 + $0x390] sm:$0xff]
    %v1027 = vld [vmem:[#allocation3 + $0x398] sm:$0xff]
    %v1028 = vld [vmem:[#allocation3 + $0x3a0] sm:$0xff]
    %v1029 = vld [vmem:[#allocation3 + $0x3a8] sm:$0xff]
    %v1030 = vld [vmem:[#allocation3 + $0x3b0] sm:$0xff]
    %1031 = vmatprep.subr.mxu0 0.0
    %1032 = vmatpush1.msra.mxu0 %v1015
    %1033 = vmatprep.subr.mxu0 0.0
    %1034 = vmatpush1.msra.mxu0 %v1016
    %1035 = vmatprep.subr.mxu0 0.0
    %1036 = vmatpush1.msra.mxu0 %v1017
    %1037 = vmatprep.subr.mxu0 0.0
    %1038 = vmatpush1.msra.mxu0 %v1018
    %1039 = vmatprep.subr.mxu0 0.0
    %1040 = vmatpush1.msra.mxu0 %v1019
    %1041 = vmatprep.subr.mxu0 0.0
    %1042 = vmatpush1.msra.mxu0 %v1020
    %1043 = vmatprep.subr.mxu0 0.0
    %1044 = vmatpush1.msra.mxu0 %v1021
    %1045 = vmatprep.subr.mxu0 0.0
    %1046 = vmatpush1.msra.mxu0 %v1022
    %1047 = vmatprep.subr.mxu0 0.0
    %1048 = vmatpush1.msra.mxu0 %v1023
    %1049 = vmatprep.subr.mxu0 0.0
    %1050 = vmatpush1.msra.mxu0 %v1024
    %1051 = vmatprep.subr.mxu0 0.0
    %1052 = vmatpush1.msra.mxu0 %v1025
    %1053 = vmatprep.subr.mxu0 0.0
    %1054 = vmatpush1.msra.mxu0 %v1026
    %1055 = vmatprep.subr.mxu0 0.0
    %1056 = vmatpush1.msra.mxu0 %v1027
    %1057 = vmatprep.subr.mxu0 0.0
    %1058 = vmatpush1.msra.mxu0 %v1028
    %1059 = vmatprep.subr.mxu0 0.0
    %1060 = vmatpush1.msra.mxu0 %v1029
    %1061 = vmatprep.subr.mxu0 0.0
    %1062 = vmatpush1.msra.mxu0 %v1030
    %1063 = vmatprep.subr.mxu0 0.0
    %1064 = vmatpush1.msra.mxu0 0.0
    %1065 = vmatprep.subr.mxu0 0.0
    %1066 = vmatpush1.msra.mxu0 0.0
    %1067 = vmatprep.subr.mxu0 0.0
    %1068 = vmatpush1.msra.mxu0 0.0
    %1069 = vmatprep.subr.mxu0 0.0
    %1070 = vmatpush1.msra.mxu0 0.0
    %1071 = vmatprep.subr.mxu0 0.0
    %1072 = vmatpush1.msra.mxu0 0.0
    %1073 = vmatprep.subr.mxu0 0.0
    %1074 = vmatpush1.msra.mxu0 0.0
    %1075 = vmatprep.subr.mxu0 0.0
    %1076 = vmatpush1.msra.mxu0 0.0
    %1077 = vmatprep.subr.mxu0 0.0
    %1078 = vmatpush1.msra.mxu0 0.0
    %1079 = vmatprep.subr.mxu0 0.0
    %1080 = vmatpush1.msra.mxu0 0.0
    %1081 = vmatprep.subr.mxu0 0.0
    %1082 = vmatpush1.msra.mxu0 0.0
    %1083 = vmatprep.subr.mxu0 0.0
    %1084 = vmatpush1.msra.mxu0 0.0
    %1085 = vmatprep.subr.mxu0 0.0
    %1086 = vmatpush1.msra.mxu0 0.0
    %1087 = vmatprep.subr.mxu0 0.0
    %1088 = vmatpush1.msra.mxu0 0.0
    %1089 = vmatprep.subr.mxu0 0.0
    %1090 = vmatpush1.msra.mxu0 0.0
    %1091 = vmatprep.subr.mxu0 0.0
    %1092 = vmatpush1.msra.mxu0 0.0
    %1093 = vmatprep.subr.mxu0 0.0
    %1094 = vmatpush1.msra.mxu0 0.0
    %1095 = vmatprep.mubr.f32.mxu0 0.0
    %1096 = vmatmul.mubr.f32.gmra.mrb[0].mxu0 %v1009
    %v1097 = vpop.f32.mrb[0].mxu0
    %v1098 = vadd.f32 0.0, %v1097
    %v1099 = vpop.f32.mrb[0].mxu0
    %1100 = vmatprep.mubr.f32.mxu0 0.0
    %1101 = vmatmul.mubr.f32.gmra.mrb[0].mxu0 %v1010
    %v1102 = vpop.f32.mrb[0].mxu0
    %v1103 = vadd.f32 0.0, %v1102
    %v1104 = vpop.f32.mrb[0].mxu0
    %1105 = vmatprep.mubr.f32.mxu0 0.0
    %1106 = vmatmul.mubr.f32.gmra.mrb[0].mxu0 %v1011
    %v1107 = vpop.f32.mrb[0].mxu0
    %v1108 = vadd.f32 0.0, %v1107
    %v1109 = vpop.f32.mrb[0].mxu0
    %1110 = vmatprep.mubr.f32.mxu0 0.0
    %1111 = vmatmul.mubr.f32.gmra.mrb[0].mxu0 %v1012
    %v1112 = vpop.f32.mrb[0].mxu0
    %v1113 = vadd.f32 0.0, %v1112
    %v1114 = vpop.f32.mrb[0].mxu0
    %1115 = vmatprep.mubr.f32.mxu0 0.0
    %1116 = vmatmul.mubr.f32.gmra.mrb[0].mxu0 %v1013
    %v1117 = vpop.f32.mrb[0].mxu0
    %v1118 = vadd.f32 0.0, %v1117
    %v1119 = vpop.f32.mrb[0].mxu0
    %1120 = vmatprep.mubr.f32.mxu0 0.0
    %1121 = vmatmul.mubr.f32.gmra.mrb[0].mxu0 %v1014
    %v1122 = vpop.f32.mrb[0].mxu0
    %v1123 = vadd.f32 0.0, %v1122
    %v1124 = vpop.f32.mrb[0].mxu0
    %1125 = vdwg.mxu0
    %v1126 = vadd.f32 %v1003, %v1098
    %v1127 = vadd.f32 %v1004, %v1103
    %v1128 = vadd.f32 %v1005, %v1108
    %v1129 = vadd.f32 %v1006, %v1113
    %v1130 = vadd.f32 %v1007, %v1118
    %v1131 = vadd.f32 %v1008, %v1123
    %v1132 = vld [vmem:[#allocation2 + $0xa] sm:$0xff]
    %v1133 = vld [vmem:[#allocation2 + $0x12] sm:$0xff]
    %v1134 = vld [vmem:[#allocation2 + $0x1a] sm:$0xff]
    %v1135 = vld [vmem:[#allocation2 + $0x22] sm:$0xff]
    %v1136 = vld [vmem:[#allocation2 + $0x2a] sm:$0xff]
    %v1137 = vld [vmem:[#allocation2 + $0x32] sm:$0xff]
    %v1138 = vld [vmem:[#allocation3 + $0x3b8] sm:$0xff]
    %v1139 = vld [vmem:[#allocation3 + $0x3c0] sm:$0xff]
    %v1140 = vld [vmem:[#allocation3 + $0x3c8] sm:$0xff]
    %v1141 = vld [vmem:[#allocation3 + $0x3d0] sm:$0xff]
    %v1142 = vld [vmem:[#allocation3 + $0x3d8] sm:$0xff]
    %v1143 = vld [vmem:[#allocation3 + $0x3e0] sm:$0xff]
    %v1144 = vld [vmem:[#allocation3 + $0x3e8] sm:$0xff]
    %v1145 = vld [vmem:[#allocation3 + $0x3f0] sm:$0xff]
    %v1146 = vld [vmem:[#allocation3 + $0x3f8] sm:$0xff]
    %v1147 = vld [vmem:[#allocation3 + $0x400] sm:$0xff]
    %v1148 = vld [vmem:[#allocation3 + $0x408] sm:$0xff]
    %v1149 = vld [vmem:[#allocation3 + $0x410] sm:$0xff]
    %v1150 = vld [vmem:[#allocation3 + $0x418] sm:$0xff]
    %v1151 = vld [vmem:[#allocation3 + $0x420] sm:$0xff]
    %v1152 = vld [vmem:[#allocation3 + $0x428] sm:$0xff]
    %v1153 = vld [vmem:[#allocation3 + $0x430] sm:$0xff]
    %1154 = vmatprep.subr.mxu0 0.0
    %1155 = vmatpush1.msra.mxu0 %v1138
    %1156 = vmatprep.subr.mxu0 0.0
    %1157 = vmatpush1.msra.mxu0 %v1139
    %1158 = vmatprep.subr.mxu0 0.0
    %1159 = vmatpush1.msra.mxu0 %v1140
    %1160 = vmatprep.subr.mxu0 0.0
    %1161 = vmatpush1.msra.mxu0 %v1141
    %1162 = vmatprep.subr.mxu0 0.0
    %1163 = vmatpush1.msra.mxu0 %v1142
    %1164 = vmatprep.subr.mxu0 0.0
    %1165 = vmatpush1.msra.mxu0 %v1143
    %1166 = vmatprep.subr.mxu0 0.0
    %1167 = vmatpush1.msra.mxu0 %v1144
    %1168 = vmatprep.subr.mxu0 0.0
    %1169 = vmatpush1.msra.mxu0 %v1145
    %1170 = vmatprep.subr.mxu0 0.0
    %1171 = vmatpush1.msra.mxu0 %v1146
    %1172 = vmatprep.subr.mxu0 0.0
    %1173 = vmatpush1.msra.mxu0 %v1147
    %1174 = vmatprep.subr.mxu0 0.0
    %1175 = vmatpush1.msra.mxu0 %v1148
    %1176 = vmatprep.subr.mxu0 0.0
    %1177 = vmatpush1.msra.mxu0 %v1149
    %1178 = vmatprep.subr.mxu0 0.0
    %1179 = vmatpush1.msra.mxu0 %v1150
    %1180 = vmatprep.subr.mxu0 0.0
    %1181 = vmatpush1.msra.mxu0 %v1151
    %1182 = vmatprep.subr.mxu0 0.0
    %1183 = vmatpush1.msra.mxu0 %v1152
    %1184 = vmatprep.subr.mxu0 0.0
    %1185 = vmatpush1.msra.mxu0 %v1153
    %1186 = vmatprep.subr.mxu0 0.0
    %1187 = vmatpush1.msra.mxu0 0.0
    %1188 = vmatprep.subr.mxu0 0.0
    %1189 = vmatpush1.msra.mxu0 0.0
    %1190 = vmatprep.subr.mxu0 0.0
    %1191 = vmatpush1.msra.mxu0 0.0
    %1192 = vmatprep.subr.mxu0 0.0
    %1193 = vmatpush1.msra.mxu0 0.0
    %1194 = vmatprep.subr.mxu0 0.0
    %1195 = vmatpush1.msra.mxu0 0.0
    %1196 = vmatprep.subr.mxu0 0.0
    %1197 = vmatpush1.msra.mxu0 0.0
    %1198 = vmatprep.subr.mxu0 0.0
    %1199 = vmatpush1.msra.mxu0 0.0
    %1200 = vmatprep.subr.mxu0 0.0
    %1201 = vmatpush1.msra.mxu0 0.0
    %1202 = vmatprep.subr.mxu0 0.0
    %1203 = vmatpush1.msra.mxu0 0.0
    %1204 = vmatprep.subr.mxu0 0.0
    %1205 = vmatpush1.msra.mxu0 0.0
    %1206 = vmatprep.subr.mxu0 0.0
    %1207 = vmatpush1.msra.mxu0 0.0
    %1208 = vmatprep.subr.mxu0 0.0
    %1209 = vmatpush1.msra.mxu0 0.0
    %1210 = vmatprep.subr.mxu0 0.0
    %1211 = vmatpush1.msra.mxu0 0.0
    %1212 = vmatprep.subr.mxu0 0.0
    %1213 = vmatpush1.msra.mxu0 0.0
    %1214 = vmatprep.subr.mxu0 0.0
    %1215 = vmatpush1.msra.mxu0 0.0
    %1216 = vmatprep.subr.mxu0 0.0
    %1217 = vmatpush1.msra.mxu0 0.0
    %1218 = vmatprep.mubr.f32.mxu0 0.0
    %1219 = vmatmul.mubr.f32.gmra.mrb[0].mxu0 %v1132
    %v1220 = vpop.f32.mrb[0].mxu0
    %v1221 = vadd.f32 0.0, %v1220
    %v1222 = vpop.f32.mrb[0].mxu0
    %1223 = vmatprep.mubr.f32.mxu0 0.0
    %1224 = vmatmul.mubr.f32.gmra.mrb[0].mxu0 %v1133
    %v1225 = vpop.f32.mrb[0].mxu0
    %v1226 = vadd.f32 0.0, %v1225
    %v1227 = vpop.f32.mrb[0].mxu0
    %1228 = vmatprep.mubr.f32.mxu0 0.0
    %1229 = vmatmul.mubr.f32.gmra.mrb[0].mxu0 %v1134
    %v1230 = vpop.f32.mrb[0].mxu0
    %v1231 = vadd.f32 0.0, %v1230
    %v1232 = vpop.f32.mrb[0].mxu0
    %1233 = vmatprep.mubr.f32.mxu0 0.0
    %1234 = vmatmul.mubr.f32.gmra.mrb[0].mxu0 %v1135
    %v1235 = vpop.f32.mrb[0].mxu0
    %v1236 = vadd.f32 0.0, %v1235
    %v1237 = vpop.f32.mrb[0].mxu0
    %1238 = vmatprep.mubr.f32.mxu0 0.0
    %1239 = vmatmul.mubr.f32.gmra.mrb[0].mxu0 %v1136
    %v1240 = vpop.f32.mrb[0].mxu0
    %v1241 = vadd.f32 0.0, %v1240
    %v1242 = vpop.f32.mrb[0].mxu0
    %1243 = vmatprep.mubr.f32.mxu0 0.0
    %1244 = vmatmul.mubr.f32.gmra.mrb[0].mxu0 %v1137
    %v1245 = vpop.f32.mrb[0].mxu0
    %v1246 = vadd.f32 0.0, %v1245
    %v1247 = vpop.f32.mrb[0].mxu0
    %1248 = vdwg.mxu0
    %v1249 = vadd.f32 %v1126, %v1221
    %v1250 = vadd.f32 %v1127, %v1226
    %v1251 = vadd.f32 %v1128, %v1231
    %v1252 = vadd.f32 %v1129, %v1236
    %v1253 = vadd.f32 %v1130, %v1241
    %v1254 = vadd.f32 %v1131, %v1246
    %v1255 = vld [vmem:[#allocation3 + $0x939] sm:$0x1]
    %v1256 = vlaneseq
    %v1257 = vshrl.u32 %v1256, 7
    %v1258 = vsub.s32 0, %v1257
    %v1259 = vrot.slane %v1255, %v1258
    %v1260 = vadd.f32 %v1249, %v1259
    %v1261 = vadd.f32 %v1250, %v1259
    %v1262 = vadd.f32 %v1251, %v1259
    %v1263 = vadd.f32 %v1252, %v1259
    %v1264 = vadd.f32 %v1253, %v1259
    %v1265 = vadd.f32 %v1254, %v1259
    %v1266 = vmax.f32 %v1260, 0.0
    %v1267 = vmax.f32 %v1261, 0.0
    %v1268 = vmax.f32 %v1262, 0.0
    %v1269 = vmax.f32 %v1263, 0.0
    %v1270 = vmax.f32 %v1264, 0.0
    %v1271 = vmax.f32 %v1265, 0.0
    %v1272 = vmul.f32 %v1266, %v81
    %v1273 = vmul.f32 %v1267, %v82
    %v1274 = vmul.f32 %v1268, %v83
    %v1275 = vmul.f32 %v1269, %v84
    %v1276 = vmul.f32 %v1270, %v85
    %v1277 = vmul.f32 %v1271, %v86
    %1278 = vst [vmem:[#allocation2 + $0x8] sm:$0xff] %v1272
    %1279 = vst [vmem:[#allocation2 + $0x10] sm:$0xff] %v1273
    %1280 = vst [vmem:[#allocation2 + $0x18] sm:$0xff] %v1274
    %1281 = vst [vmem:[#allocation2 + $0x20] sm:$0xff] %v1275
    %1282 = vst [vmem:[#allocation2 + $0x28] sm:$0xff] %v1276
    %1283 = vst [vmem:[#allocation2 + $0x30] sm:$0xff] %v1277
    %v1284 = vld [vmem:[#allocation2 + $0x7] sm:$0xff]
    %v1285 = vld [vmem:[#allocation2 + $0xf] sm:$0xff]
    %v1286 = vld [vmem:[#allocation2 + $0x17] sm:$0xff]
    %v1287 = vld [vmem:[#allocation2 + $0x1f] sm:$0xff]
    %v1288 = vld [vmem:[#allocation2 + $0x27] sm:$0xff]
    %v1289 = vld [vmem:[#allocation2 + $0x2f] sm:$0xff]
    %v1290 = vld [vmem:[#allocation3 + $0x438] sm:$0xff]
    %v1291 = vld [vmem:[#allocation3 + $0x440] sm:$0xff]
    %v1292 = vld [vmem:[#allocation3 + $0x448] sm:$0xff]
    %v1293 = vld [vmem:[#allocation3 + $0x450] sm:$0xff]
    %v1294 = vld [vmem:[#allocation3 + $0x458] sm:$0xff]
    %v1295 = vld [vmem:[#allocation3 + $0x460] sm:$0xff]
    %v1296 = vld [vmem:[#allocation3 + $0x468] sm:$0xff]
    %v1297 = vld [vmem:[#allocation3 + $0x470] sm:$0xff]
    %v1298 = vld [vmem:[#allocation3 + $0x478] sm:$0xff]
    %v1299 = vld [vmem:[#allocation3 + $0x480] sm:$0xff]
    %v1300 = vld [vmem:[#allocation3 + $0x488] sm:$0xff]
    %v1301 = vld [vmem:[#allocation3 + $0x490] sm:$0xff]
    %v1302 = vld [vmem:[#allocation3 + $0x498] sm:$0xff]
    %v1303 = vld [vmem:[#allocation3 + $0x4a0] sm:$0xff]
    %v1304 = vld [vmem:[#allocation3 + $0x4a8] sm:$0xff]
    %v1305 = vld [vmem:[#allocation3 + $0x4b0] sm:$0xff]
    %v1306 = vld [vmem:[#allocation2 + $0x8] sm:$0xff]
    %v1307 = vld [vmem:[#allocation2 + $0x10] sm:$0xff]
    %v1308 = vld [vmem:[#allocation2 + $0x18] sm:$0xff]
    %v1309 = vld [vmem:[#allocation2 + $0x20] sm:$0xff]
    %v1310 = vld [vmem:[#allocation2 + $0x28] sm:$0xff]
    %v1311 = vld [vmem:[#allocation2 + $0x30] sm:$0xff]
    %v1312 = vld [vmem:[#allocation3 + $0x4b8] sm:$0xff]
    %v1313 = vld [vmem:[#allocation3 + $0x4c0] sm:$0xff]
    %v1314 = vld [vmem:[#allocation3 + $0x4c8] sm:$0xff]
    %v1315 = vld [vmem:[#allocation3 + $0x4d0] sm:$0xff]
    %v1316 = vld [vmem:[#allocation3 + $0x4d8] sm:$0xff]
    %v1317 = vld [vmem:[#allocation3 + $0x4e0] sm:$0xff]
    %v1318 = vld [vmem:[#allocation3 + $0x4e8] sm:$0xff]
    %v1319 = vld [vmem:[#allocation3 + $0x4f0] sm:$0xff]
    %v1320 = vld [vmem:[#allocation3 + $0x4f8] sm:$0xff]
    %v1321 = vld [vmem:[#allocation3 + $0x500] sm:$0xff]
    %v1322 = vld [vmem:[#allocation3 + $0x508] sm:$0xff]
    %v1323 = vld [vmem:[#allocation3 + $0x510] sm:$0xff]
    %v1324 = vld [vmem:[#allocation3 + $0x518] sm:$0xff]
    %v1325 = vld [vmem:[#allocation3 + $0x520] sm:$0xff]
    %v1326 = vld [vmem:[#allocation3 + $0x528] sm:$0xff]
    %v1327 = vld [vmem:[#allocation3 + $0x530] sm:$0xff]
    %1328 = vmatprep.subr.mxu0 0.0
    %1329 = vmatpush1.msra.mxu0 %v1312
    %1330 = vmatprep.subr.mxu0 0.0
    %1331 = vmatpush1.msra.mxu0 %v1313
    %1332 = vmatprep.subr.mxu0 0.0
    %1333 = vmatpush1.msra.mxu0 %v1314
    %1334 = vmatprep.subr.mxu0 0.0
    %1335 = vmatpush1.msra.mxu0 %v1315
    %1336 = vmatprep.subr.mxu0 0.0
    %1337 = vmatpush1.msra.mxu0 %v1316
    %1338 = vmatprep.subr.mxu0 0.0
    %1339 = vmatpush1.msra.mxu0 %v1317
    %1340 = vmatprep.subr.mxu0 0.0
    %1341 = vmatpush1.msra.mxu0 %v1318
    %1342 = vmatprep.subr.mxu0 0.0
    %1343 = vmatpush1.msra.mxu0 %v1319
    %1344 = vmatprep.subr.mxu0 0.0
    %1345 = vmatpush1.msra.mxu0 %v1320
    %1346 = vmatprep.subr.mxu0 0.0
    %1347 = vmatpush1.msra.mxu0 %v1321
    %1348 = vmatprep.subr.mxu0 0.0
    %1349 = vmatpush1.msra.mxu0 %v1322
    %1350 = vmatprep.subr.mxu0 0.0
    %1351 = vmatpush1.msra.mxu0 %v1323
    %1352 = vmatprep.subr.mxu0 0.0
    %1353 = vmatpush1.msra.mxu0 %v1324
    %1354 = vmatprep.subr.mxu0 0.0
    %1355 = vmatpush1.msra.mxu0 %v1325
    %1356 = vmatprep.subr.mxu0 0.0
    %1357 = vmatpush1.msra.mxu0 %v1326
    %1358 = vmatprep.subr.mxu0 0.0
    %1359 = vmatpush1.msra.mxu0 %v1327
    %1360 = vmatprep.subr.mxu0 0.0
    %1361 = vmatpush1.msra.mxu0 0.0
    %1362 = vmatprep.subr.mxu0 0.0
    %1363 = vmatpush1.msra.mxu0 0.0
    %1364 = vmatprep.subr.mxu0 0.0
    %1365 = vmatpush1.msra.mxu0 0.0
    %1366 = vmatprep.subr.mxu0 0.0
    %1367 = vmatpush1.msra.mxu0 0.0
    %1368 = vmatprep.subr.mxu0 0.0
    %1369 = vmatpush1.msra.mxu0 0.0
    %1370 = vmatprep.subr.mxu0 0.0
    %1371 = vmatpush1.msra.mxu0 0.0
    %1372 = vmatprep.subr.mxu0 0.0
    %1373 = vmatpush1.msra.mxu0 0.0
    %1374 = vmatprep.subr.mxu0 0.0
    %1375 = vmatpush1.msra.mxu0 0.0
    %1376 = vmatprep.subr.mxu0 0.0
    %1377 = vmatpush1.msra.mxu0 0.0
    %1378 = vmatprep.subr.mxu0 0.0
    %1379 = vmatpush1.msra.mxu0 0.0
    %1380 = vmatprep.subr.mxu0 0.0
    %1381 = vmatpush1.msra.mxu0 0.0
    %1382 = vmatprep.subr.mxu0 0.0
    %1383 = vmatpush1.msra.mxu0 0.0
    %1384 = vmatprep.subr.mxu0 0.0
    %1385 = vmatpush1.msra.mxu0 0.0
    %1386 = vmatprep.subr.mxu0 0.0
    %1387 = vmatpush1.msra.mxu0 0.0
    %1388 = vmatprep.subr.mxu0 0.0
    %1389 = vmatpush1.msra.mxu0 0.0
    %1390 = vmatprep.subr.mxu0 0.0
    %1391 = vmatpush1.msra.mxu0 0.0
    %1392 = vmatprep.mubr.f32.mxu0 0.0
    %1393 = vmatmul.mubr.f32.gmra.mrb[0].mxu0 %v1306
    %v1394 = vpop.f32.mrb[0].mxu0
    %v1395 = vadd.f32 0.0, %v1394
    %v1396 = vpop.f32.mrb[0].mxu0
    %1397 = vmatprep.mubr.f32.mxu0 0.0
    %1398 = vmatmul.mubr.f32.gmra.mrb[0].mxu0 %v1307
    %v1399 = vpop.f32.mrb[0].mxu0
    %v1400 = vadd.f32 0.0, %v1399
    %v1401 = vpop.f32.mrb[0].mxu0
    %1402 = vmatprep.mubr.f32.mxu0 0.0
    %1403 = vmatmul.mubr.f32.gmra.mrb[0].mxu0 %v1308
    %v1404 = vpop.f32.mrb[0].mxu0
    %v1405 = vadd.f32 0.0, %v1404
    %v1406 = vpop.f32.mrb[0].mxu0
    %1407 = vmatprep.mubr.f32.mxu0 0.0
    %1408 = vmatmul.mubr.f32.gmra.mrb[0].mxu0 %v1309
    %v1409 = vpop.f32.mrb[0].mxu0
    %v1410 = vadd.f32 0.0, %v1409
    %v1411 = vpop.f32.mrb[0].mxu0
    %1412 = vmatprep.mubr.f32.mxu0 0.0
    %1413 = vmatmul.mubr.f32.gmra.mrb[0].mxu0 %v1310
    %v1414 = vpop.f32.mrb[0].mxu0
    %v1415 = vadd.f32 0.0, %v1414
    %v1416 = vpop.f32.mrb[0].mxu0
    %1417 = vmatprep.mubr.f32.mxu0 0.0
    %1418 = vmatmul.mubr.f32.gmra.mrb[0].mxu0 %v1311
    %v1419 = vpop.f32.mrb[0].mxu0
    %v1420 = vadd.f32 0.0, %v1419
    %v1421 = vpop.f32.mrb[0].mxu0
    %1422 = vdwg.mxu0
    %1423 = vmatprep.subr.mxu0 0.0
    %1424 = vmatpush1.msra.mxu0 %v1290
    %1425 = vmatprep.subr.mxu0 0.0
    %1426 = vmatpush1.msra.mxu0 %v1291
    %1427 = vmatprep.subr.mxu0 0.0
    %1428 = vmatpush1.msra.mxu0 %v1292
    %1429 = vmatprep.subr.mxu0 0.0
    %1430 = vmatpush1.msra.mxu0 %v1293
    %1431 = vmatprep.subr.mxu0 0.0
    %1432 = vmatpush1.msra.mxu0 %v1294
    %1433 = vmatprep.subr.mxu0 0.0
    %1434 = vmatpush1.msra.mxu0 %v1295
    %1435 = vmatprep.subr.mxu0 0.0
    %1436 = vmatpush1.msra.mxu0 %v1296
    %1437 = vmatprep.subr.mxu0 0.0
    %1438 = vmatpush1.msra.mxu0 %v1297
    %1439 = vmatprep.subr.mxu0 0.0
    %1440 = vmatpush1.msra.mxu0 %v1298
    %1441 = vmatprep.subr.mxu0 0.0
    %1442 = vmatpush1.msra.mxu0 %v1299
    %1443 = vmatprep.subr.mxu0 0.0
    %1444 = vmatpush1.msra.mxu0 %v1300
    %1445 = vmatprep.subr.mxu0 0.0
    %1446 = vmatpush1.msra.mxu0 %v1301
    %1447 = vmatprep.subr.mxu0 0.0
    %1448 = vmatpush1.msra.mxu0 %v1302
    %1449 = vmatprep.subr.mxu0 0.0
    %1450 = vmatpush1.msra.mxu0 %v1303
    %1451 = vmatprep.subr.mxu0 0.0
    %1452 = vmatpush1.msra.mxu0 %v1304
    %1453 = vmatprep.subr.mxu0 0.0
    %1454 = vmatpush1.msra.mxu0 %v1305
    %1455 = vmatprep.subr.mxu0 0.0
    %1456 = vmatpush1.msra.mxu0 0.0
    %1457 = vmatprep.subr.mxu0 0.0
    %1458 = vmatpush1.msra.mxu0 0.0
    %1459 = vmatprep.subr.mxu0 0.0
    %1460 = vmatpush1.msra.mxu0 0.0
    %1461 = vmatprep.subr.mxu0 0.0
    %1462 = vmatpush1.msra.mxu0 0.0
    %1463 = vmatprep.subr.mxu0 0.0
    %1464 = vmatpush1.msra.mxu0 0.0
    %1465 = vmatprep.subr.mxu0 0.0
    %1466 = vmatpush1.msra.mxu0 0.0
    %1467 = vmatprep.subr.mxu0 0.0
    %1468 = vmatpush1.msra.mxu0 0.0
    %1469 = vmatprep.subr.mxu0 0.0
    %1470 = vmatpush1.msra.mxu0 0.0
    %1471 = vmatprep.subr.mxu0 0.0
    %1472 = vmatpush1.msra.mxu0 0.0
    %1473 = vmatprep.subr.mxu0 0.0
    %1474 = vmatpush1.msra.mxu0 0.0
    %1475 = vmatprep.subr.mxu0 0.0
    %1476 = vmatpush1.msra.mxu0 0.0
    %1477 = vmatprep.subr.mxu0 0.0
    %1478 = vmatpush1.msra.mxu0 0.0
    %1479 = vmatprep.subr.mxu0 0.0
    %1480 = vmatpush1.msra.mxu0 0.0
    %1481 = vmatprep.subr.mxu0 0.0
    %1482 = vmatpush1.msra.mxu0 0.0
    %1483 = vmatprep.subr.mxu0 0.0
    %1484 = vmatpush1.msra.mxu0 0.0
    %1485 = vmatprep.subr.mxu0 0.0
    %1486 = vmatpush1.msra.mxu0 0.0
    %1487 = vmatprep.mubr.f32.mxu0 0.0
    %1488 = vmatmul.mubr.f32.gmra.mrb[0].mxu0 %v1284
    %v1489 = vpop.f32.mrb[0].mxu0
    %v1490 = vadd.f32 %v1395, %v1489
    %v1491 = vpop.f32.mrb[0].mxu0
    %1492 = vmatprep.mubr.f32.mxu0 0.0
    %1493 = vmatmul.mubr.f32.gmra.mrb[0].mxu0 %v1285
    %v1494 = vpop.f32.mrb[0].mxu0
    %v1495 = vadd.f32 %v1400, %v1494
    %v1496 = vpop.f32.mrb[0].mxu0
    %1497 = vmatprep.mubr.f32.mxu0 0.0
    %1498 = vmatmul.mubr.f32.gmra.mrb[0].mxu0 %v1286
    %v1499 = vpop.f32.mrb[0].mxu0
    %v1500 = vadd.f32 %v1405, %v1499
    %v1501 = vpop.f32.mrb[0].mxu0
    %1502 = vmatprep.mubr.f32.mxu0 0.0
    %1503 = vmatmul.mubr.f32.gmra.mrb[0].mxu0 %v1287
    %v1504 = vpop.f32.mrb[0].mxu0
    %v1505 = vadd.f32 %v1410, %v1504
    %v1506 = vpop.f32.mrb[0].mxu0
    %1507 = vmatprep.mubr.f32.mxu0 0.0
    %1508 = vmatmul.mubr.f32.gmra.mrb[0].mxu0 %v1288
    %v1509 = vpop.f32.mrb[0].mxu0
    %v1510 = vadd.f32 %v1415, %v1509
    %v1511 = vpop.f32.mrb[0].mxu0
    %1512 = vmatprep.mubr.f32.mxu0 0.0
    %1513 = vmatmul.mubr.f32.gmra.mrb[0].mxu0 %v1289
    %v1514 = vpop.f32.mrb[0].mxu0
    %v1515 = vadd.f32 %v1420, %v1514
    %v1516 = vpop.f32.mrb[0].mxu0
    %1517 = vdwg.mxu0
    %v1518 = vld [vmem:[#allocation2 + $0x9] sm:$0xff]
    %v1519 = vld [vmem:[#allocation2 + $0x11] sm:$0xff]
    %v1520 = vld [vmem:[#allocation2 + $0x19] sm:$0xff]
    %v1521 = vld [vmem:[#allocation2 + $0x21] sm:$0xff]
    %v1522 = vld [vmem:[#allocation2 + $0x29] sm:$0xff]
    %v1523 = vld [vmem:[#allocation2 + $0x31] sm:$0xff]
    %v1524 = vld [vmem:[#allocation3 + $0x538] sm:$0xff]
    %v1525 = vld [vmem:[#allocation3 + $0x540] sm:$0xff]
    %v1526 = vld [vmem:[#allocation3 + $0x548] sm:$0xff]
    %v1527 = vld [vmem:[#allocation3 + $0x550] sm:$0xff]
    %v1528 = vld [vmem:[#allocation3 + $0x558] sm:$0xff]
    %v1529 = vld [vmem:[#allocation3 + $0x560] sm:$0xff]
    %v1530 = vld [vmem:[#allocation3 + $0x568] sm:$0xff]
    %v1531 = vld [vmem:[#allocation3 + $0x570] sm:$0xff]
    %v1532 = vld [vmem:[#allocation3 + $0x578] sm:$0xff]
    %v1533 = vld [vmem:[#allocation3 + $0x580] sm:$0xff]
    %v1534 = vld [vmem:[#allocation3 + $0x588] sm:$0xff]
    %v1535 = vld [vmem:[#allocation3 + $0x590] sm:$0xff]
    %v1536 = vld [vmem:[#allocation3 + $0x598] sm:$0xff]
    %v1537 = vld [vmem:[#allocation3 + $0x5a0] sm:$0xff]
    %v1538 = vld [vmem:[#allocation3 + $0x5a8] sm:$0xff]
    %v1539 = vld [vmem:[#allocation3 + $0x5b0] sm:$0xff]
    %1540 = vmatprep.subr.mxu0 0.0
    %1541 = vmatpush1.msra.mxu0 %v1524
    %1542 = vmatprep.subr.mxu0 0.0
    %1543 = vmatpush1.msra.mxu0 %v1525
    %1544 = vmatprep.subr.mxu0 0.0
    %1545 = vmatpush1.msra.mxu0 %v1526
    %1546 = vmatprep.subr.mxu0 0.0
    %1547 = vmatpush1.msra.mxu0 %v1527
    %1548 = vmatprep.subr.mxu0 0.0
    %1549 = vmatpush1.msra.mxu0 %v1528
    %1550 = vmatprep.subr.mxu0 0.0
    %1551 = vmatpush1.msra.mxu0 %v1529
    %1552 = vmatprep.subr.mxu0 0.0
    %1553 = vmatpush1.msra.mxu0 %v1530
    %1554 = vmatprep.subr.mxu0 0.0
    %1555 = vmatpush1.msra.mxu0 %v1531
    %1556 = vmatprep.subr.mxu0 0.0
    %1557 = vmatpush1.msra.mxu0 %v1532
    %1558 = vmatprep.subr.mxu0 0.0
    %1559 = vmatpush1.msra.mxu0 %v1533
    %1560 = vmatprep.subr.mxu0 0.0
    %1561 = vmatpush1.msra.mxu0 %v1534
    %1562 = vmatprep.subr.mxu0 0.0
    %1563 = vmatpush1.msra.mxu0 %v1535
    %1564 = vmatprep.subr.mxu0 0.0
    %1565 = vmatpush1.msra.mxu0 %v1536
    %1566 = vmatprep.subr.mxu0 0.0
    %1567 = vmatpush1.msra.mxu0 %v1537
    %1568 = vmatprep.subr.mxu0 0.0
    %1569 = vmatpush1.msra.mxu0 %v1538
    %1570 = vmatprep.subr.mxu0 0.0
    %1571 = vmatpush1.msra.mxu0 %v1539
    %1572 = vmatprep.subr.mxu0 0.0
    %1573 = vmatpush1.msra.mxu0 0.0
    %1574 = vmatprep.subr.mxu0 0.0
    %1575 = vmatpush1.msra.mxu0 0.0
    %1576 = vmatprep.subr.mxu0 0.0
    %1577 = vmatpush1.msra.mxu0 0.0
    %1578 = vmatprep.subr.mxu0 0.0
    %1579 = vmatpush1.msra.mxu0 0.0
    %1580 = vmatprep.subr.mxu0 0.0
    %1581 = vmatpush1.msra.mxu0 0.0
    %1582 = vmatprep.subr.mxu0 0.0
    %1583 = vmatpush1.msra.mxu0 0.0
    %1584 = vmatprep.subr.mxu0 0.0
    %1585 = vmatpush1.msra.mxu0 0.0
    %1586 = vmatprep.subr.mxu0 0.0
    %1587 = vmatpush1.msra.mxu0 0.0
    %1588 = vmatprep.subr.mxu0 0.0
    %1589 = vmatpush1.msra.mxu0 0.0
    %1590 = vmatprep.subr.mxu0 0.0
    %1591 = vmatpush1.msra.mxu0 0.0
    %1592 = vmatprep.subr.mxu0 0.0
    %1593 = vmatpush1.msra.mxu0 0.0
    %1594 = vmatprep.subr.mxu0 0.0
    %1595 = vmatpush1.msra.mxu0 0.0
    %1596 = vmatprep.subr.mxu0 0.0
    %1597 = vmatpush1.msra.mxu0 0.0
    %1598 = vmatprep.subr.mxu0 0.0
    %1599 = vmatpush1.msra.mxu0 0.0
    %1600 = vmatprep.subr.mxu0 0.0
    %1601 = vmatpush1.msra.mxu0 0.0
    %1602 = vmatprep.subr.mxu0 0.0
    %1603 = vmatpush1.msra.mxu0 0.0
    %1604 = vmatprep.mubr.f32.mxu0 0.0
    %1605 = vmatmul.mubr.f32.gmra.mrb[0].mxu0 %v1518
    %v1606 = vpop.f32.mrb[0].mxu0
    %v1607 = vadd.f32 0.0, %v1606
    %v1608 = vpop.f32.mrb[0].mxu0
    %1609 = vmatprep.mubr.f32.mxu0 0.0
    %1610 = vmatmul.mubr.f32.gmra.mrb[0].mxu0 %v1519
    %v1611 = vpop.f32.mrb[0].mxu0
    %v1612 = vadd.f32 0.0, %v1611
    %v1613 = vpop.f32.mrb[0].mxu0
    %1614 = vmatprep.mubr.f32.mxu0 0.0
    %1615 = vmatmul.mubr.f32.gmra.mrb[0].mxu0 %v1520
    %v1616 = vpop.f32.mrb[0].mxu0
    %v1617 = vadd.f32 0.0, %v1616
    %v1618 = vpop.f32.mrb[0].mxu0
    %1619 = vmatprep.mubr.f32.mxu0 0.0
    %1620 = vmatmul.mubr.f32.gmra.mrb[0].mxu0 %v1521
    %v1621 = vpop.f32.mrb[0].mxu0
    %v1622 = vadd.f32 0.0, %v1621
    %v1623 = vpop.f32.mrb[0].mxu0
    %1624 = vmatprep.mubr.f32.mxu0 0.0
    %1625 = vmatmul.mubr.f32.gmra.mrb[0].mxu0 %v1522
    %v1626 = vpop.f32.mrb[0].mxu0
    %v1627 = vadd.f32 0.0, %v1626
    %v1628 = vpop.f32.mrb[0].mxu0
    %1629 = vmatprep.mubr.f32.mxu0 0.0
    %1630 = vmatmul.mubr.f32.gmra.mrb[0].mxu0 %v1523
    %v1631 = vpop.f32.mrb[0].mxu0
    %v1632 = vadd.f32 0.0, %v1631
    %v1633 = vpop.f32.mrb[0].mxu0
    %1634 = vdwg.mxu0
    %v1635 = vadd.f32 %v1490, %v1607
    %v1636 = vadd.f32 %v1495, %v1612
    %v1637 = vadd.f32 %v1500, %v1617
    %v1638 = vadd.f32 %v1505, %v1622
    %v1639 = vadd.f32 %v1510, %v1627
    %v1640 = vadd.f32 %v1515, %v1632
    %v1641 = vld [vmem:[#allocation3 + $0x93a] sm:$0x1]
    %v1642 = vlaneseq
    %v1643 = vshrl.u32 %v1642, 7
    %v1644 = vsub.s32 0, %v1643
    %v1645 = vrot.slane %v1641, %v1644
    %v1646 = vadd.f32 %v1635, %v1645
    %v1647 = vadd.f32 %v1636, %v1645
    %v1648 = vadd.f32 %v1637, %v1645
    %v1649 = vadd.f32 %v1638, %v1645
    %v1650 = vadd.f32 %v1639, %v1645
    %v1651 = vadd.f32 %v1640, %v1645
    %v1652 = vmax.f32 %v1646, 0.0
    %v1653 = vmax.f32 %v1647, 0.0
    %v1654 = vmax.f32 %v1648, 0.0
    %v1655 = vmax.f32 %v1649, 0.0
    %v1656 = vmax.f32 %v1650, 0.0
    %v1657 = vmax.f32 %v1651, 0.0
    %v1658 = vmul.f32 %v1652, %v81
    %v1659 = vmul.f32 %v1653, %v82
    %v1660 = vmul.f32 %v1654, %v83
    %v1661 = vmul.f32 %v1655, %v84
    %v1662 = vmul.f32 %v1656, %v85
    %v1663 = vmul.f32 %v1657, %v86
    %1664 = vst [vmem:[#allocation2 + $0x8] sm:$0xff] %v1658
    %1665 = vst [vmem:[#allocation2 + $0x10] sm:$0xff] %v1659
    %1666 = vst [vmem:[#allocation2 + $0x18] sm:$0xff] %v1660
    %1667 = vst [vmem:[#allocation2 + $0x20] sm:$0xff] %v1661
    %1668 = vst [vmem:[#allocation2 + $0x28] sm:$0xff] %v1662
    %1669 = vst [vmem:[#allocation2 + $0x30] sm:$0xff] %v1663
    %v1670 = vld [vmem:[#allocation2 + $0x6] sm:$0xff]
    %v1671 = vld [vmem:[#allocation2 + $0xe] sm:$0xff]
    %v1672 = vld [vmem:[#allocation2 + $0x16] sm:$0xff]
    %v1673 = vld [vmem:[#allocation2 + $0x1e] sm:$0xff]
    %v1674 = vld [vmem:[#allocation2 + $0x26] sm:$0xff]
    %v1675 = vld [vmem:[#allocation2 + $0x2e] sm:$0xff]
    %v1676 = vld [vmem:[#allocation3 + $0x5b8] sm:$0xff]
    %v1677 = vld [vmem:[#allocation3 + $0x5c0] sm:$0xff]
    %v1678 = vld [vmem:[#allocation3 + $0x5c8] sm:$0xff]
    %v1679 = vld [vmem:[#allocation3 + $0x5d0] sm:$0xff]
    %v1680 = vld [vmem:[#allocation3 + $0x5d8] sm:$0xff]
    %v1681 = vld [vmem:[#allocation3 + $0x5e0] sm:$0xff]
    %v1682 = vld [vmem:[#allocation3 + $0x5e8] sm:$0xff]
    %v1683 = vld [vmem:[#allocation3 + $0x5f0] sm:$0xff]
    %v1684 = vld [vmem:[#allocation3 + $0x5f8] sm:$0xff]
    %v1685 = vld [vmem:[#allocation3 + $0x600] sm:$0xff]
    %v1686 = vld [vmem:[#allocation3 + $0x608] sm:$0xff]
    %v1687 = vld [vmem:[#allocation3 + $0x610] sm:$0xff]
    %v1688 = vld [vmem:[#allocation3 + $0x618] sm:$0xff]
    %v1689 = vld [vmem:[#allocation3 + $0x620] sm:$0xff]
    %v1690 = vld [vmem:[#allocation3 + $0x628] sm:$0xff]
    %v1691 = vld [vmem:[#allocation3 + $0x630] sm:$0xff]
    %v1692 = vld [vmem:[#allocation2 + $0x7] sm:$0xff]
    %v1693 = vld [vmem:[#allocation2 + $0xf] sm:$0xff]
    %v1694 = vld [vmem:[#allocation2 + $0x17] sm:$0xff]
    %v1695 = vld [vmem:[#allocation2 + $0x1f] sm:$0xff]
    %v1696 = vld [vmem:[#allocation2 + $0x27] sm:$0xff]
    %v1697 = vld [vmem:[#allocation2 + $0x2f] sm:$0xff]
    %v1698 = vld [vmem:[#allocation3 + $0x638] sm:$0xff]
    %v1699 = vld [vmem:[#allocation3 + $0x640] sm:$0xff]
    %v1700 = vld [vmem:[#allocation3 + $0x648] sm:$0xff]
    %v1701 = vld [vmem:[#allocation3 + $0x650] sm:$0xff]
    %v1702 = vld [vmem:[#allocation3 + $0x658] sm:$0xff]
    %v1703 = vld [vmem:[#allocation3 + $0x660] sm:$0xff]
    %v1704 = vld [vmem:[#allocation3 + $0x668] sm:$0xff]
    %v1705 = vld [vmem:[#allocation3 + $0x670] sm:$0xff]
    %v1706 = vld [vmem:[#allocation3 + $0x678] sm:$0xff]
    %v1707 = vld [vmem:[#allocation3 + $0x680] sm:$0xff]
    %v1708 = vld [vmem:[#allocation3 + $0x688] sm:$0xff]
    %v1709 = vld [vmem:[#allocation3 + $0x690] sm:$0xff]
    %v1710 = vld [vmem:[#allocation3 + $0x698] sm:$0xff]
    %v1711 = vld [vmem:[#allocation3 + $0x6a0] sm:$0xff]
    %v1712 = vld [vmem:[#allocation3 + $0x6a8] sm:$0xff]
    %v1713 = vld [vmem:[#allocation3 + $0x6b0] sm:$0xff]
    %1714 = vmatprep.subr.mxu0 0.0
    %1715 = vmatpush1.msra.mxu0 %v1698
    %1716 = vmatprep.subr.mxu0 0.0
    %1717 = vmatpush1.msra.mxu0 %v1699
    %1718 = vmatprep.subr.mxu0 0.0
    %1719 = vmatpush1.msra.mxu0 %v1700
    %1720 = vmatprep.subr.mxu0 0.0
    %1721 = vmatpush1.msra.mxu0 %v1701
    %1722 = vmatprep.subr.mxu0 0.0
    %1723 = vmatpush1.msra.mxu0 %v1702
    %1724 = vmatprep.subr.mxu0 0.0
    %1725 = vmatpush1.msra.mxu0 %v1703
    %1726 = vmatprep.subr.mxu0 0.0
    %1727 = vmatpush1.msra.mxu0 %v1704
    %1728 = vmatprep.subr.mxu0 0.0
    %1729 = vmatpush1.msra.mxu0 %v1705
    %1730 = vmatprep.subr.mxu0 0.0
    %1731 = vmatpush1.msra.mxu0 %v1706
    %1732 = vmatprep.subr.mxu0 0.0
    %1733 = vmatpush1.msra.mxu0 %v1707
    %1734 = vmatprep.subr.mxu0 0.0
    %1735 = vmatpush1.msra.mxu0 %v1708
    %1736 = vmatprep.subr.mxu0 0.0
    %1737 = vmatpush1.msra.mxu0 %v1709
    %1738 = vmatprep.subr.mxu0 0.0
    %1739 = vmatpush1.msra.mxu0 %v1710
    %1740 = vmatprep.subr.mxu0 0.0
    %1741 = vmatpush1.msra.mxu0 %v1711
    %1742 = vmatprep.subr.mxu0 0.0
    %1743 = vmatpush1.msra.mxu0 %v1712
    %1744 = vmatprep.subr.mxu0 0.0
    %1745 = vmatpush1.msra.mxu0 %v1713
    %1746 = vmatprep.subr.mxu0 0.0
    %1747 = vmatpush1.msra.mxu0 0.0
    %1748 = vmatprep.subr.mxu0 0.0
    %1749 = vmatpush1.msra.mxu0 0.0
    %1750 = vmatprep.subr.mxu0 0.0
    %1751 = vmatpush1.msra.mxu0 0.0
    %1752 = vmatprep.subr.mxu0 0.0
    %1753 = vmatpush1.msra.mxu0 0.0
    %1754 = vmatprep.subr.mxu0 0.0
    %1755 = vmatpush1.msra.mxu0 0.0
    %1756 = vmatprep.subr.mxu0 0.0
    %1757 = vmatpush1.msra.mxu0 0.0
    %1758 = vmatprep.subr.mxu0 0.0
    %1759 = vmatpush1.msra.mxu0 0.0
    %1760 = vmatprep.subr.mxu0 0.0
    %1761 = vmatpush1.msra.mxu0 0.0
    %1762 = vmatprep.subr.mxu0 0.0
    %1763 = vmatpush1.msra.mxu0 0.0
    %1764 = vmatprep.subr.mxu0 0.0
    %1765 = vmatpush1.msra.mxu0 0.0
    %1766 = vmatprep.subr.mxu0 0.0
    %1767 = vmatpush1.msra.mxu0 0.0
    %1768 = vmatprep.subr.mxu0 0.0
    %1769 = vmatpush1.msra.mxu0 0.0
    %1770 = vmatprep.subr.mxu0 0.0
    %1771 = vmatpush1.msra.mxu0 0.0
    %1772 = vmatprep.subr.mxu0 0.0
    %1773 = vmatpush1.msra.mxu0 0.0
    %1774 = vmatprep.subr.mxu0 0.0
    %1775 = vmatpush1.msra.mxu0 0.0
    %1776 = vmatprep.subr.mxu0 0.0
    %1777 = vmatpush1.msra.mxu0 0.0
    %1778 = vmatprep.mubr.f32.mxu0 0.0
    %1779 = vmatmul.mubr.f32.gmra.mrb[0].mxu0 %v1692
    %v1780 = vpop.f32.mrb[0].mxu0
    %v1781 = vadd.f32 0.0, %v1780
    %v1782 = vpop.f32.mrb[0].mxu0
    %1783 = vmatprep.mubr.f32.mxu0 0.0
    %1784 = vmatmul.mubr.f32.gmra.mrb[0].mxu0 %v1693
    %v1785 = vpop.f32.mrb[0].mxu0
    %v1786 = vadd.f32 0.0, %v1785
    %v1787 = vpop.f32.mrb[0].mxu0
    %1788 = vmatprep.mubr.f32.mxu0 0.0
    %1789 = vmatmul.mubr.f32.gmra.mrb[0].mxu0 %v1694
    %v1790 = vpop.f32.mrb[0].mxu0
    %v1791 = vadd.f32 0.0, %v1790
    %v1792 = vpop.f32.mrb[0].mxu0
    %1793 = vmatprep.mubr.f32.mxu0 0.0
    %1794 = vmatmul.mubr.f32.gmra.mrb[0].mxu0 %v1695
    %v1795 = vpop.f32.mrb[0].mxu0
    %v1796 = vadd.f32 0.0, %v1795
    %v1797 = vpop.f32.mrb[0].mxu0
    %1798 = vmatprep.mubr.f32.mxu0 0.0
    %1799 = vmatmul.mubr.f32.gmra.mrb[0].mxu0 %v1696
    %v1800 = vpop.f32.mrb[0].mxu0
    %v1801 = vadd.f32 0.0, %v1800
    %v1802 = vpop.f32.mrb[0].mxu0
    %1803 = vmatprep.mubr.f32.mxu0 0.0
    %1804 = vmatmul.mubr.f32.gmra.mrb[0].mxu0 %v1697
    %v1805 = vpop.f32.mrb[0].mxu0
    %v1806 = vadd.f32 0.0, %v1805
    %v1807 = vpop.f32.mrb[0].mxu0
    %1808 = vdwg.mxu0
    %1809 = vmatprep.subr.mxu0 0.0
    %1810 = vmatpush1.msra.mxu0 %v1676
    %1811 = vmatprep.subr.mxu0 0.0
    %1812 = vmatpush1.msra.mxu0 %v1677
    %1813 = vmatprep.subr.mxu0 0.0
    %1814 = vmatpush1.msra.mxu0 %v1678
    %1815 = vmatprep.subr.mxu0 0.0
    %1816 = vmatpush1.msra.mxu0 %v1679
    %1817 = vmatprep.subr.mxu0 0.0
    %1818 = vmatpush1.msra.mxu0 %v1680
    %1819 = vmatprep.subr.mxu0 0.0
    %1820 = vmatpush1.msra.mxu0 %v1681
    %1821 = vmatprep.subr.mxu0 0.0
    %1822 = vmatpush1.msra.mxu0 %v1682
    %1823 = vmatprep.subr.mxu0 0.0
    %1824 = vmatpush1.msra.mxu0 %v1683
    %1825 = vmatprep.subr.mxu0 0.0
    %1826 = vmatpush1.msra.mxu0 %v1684
    %1827 = vmatprep.subr.mxu0 0.0
    %1828 = vmatpush1.msra.mxu0 %v1685
    %1829 = vmatprep.subr.mxu0 0.0
    %1830 = vmatpush1.msra.mxu0 %v1686
    %1831 = vmatprep.subr.mxu0 0.0
    %1832 = vmatpush1.msra.mxu0 %v1687
    %1833 = vmatprep.subr.mxu0 0.0
    %1834 = vmatpush1.msra.mxu0 %v1688
    %1835 = vmatprep.subr.mxu0 0.0
    %1836 = vmatpush1.msra.mxu0 %v1689
    %1837 = vmatprep.subr.mxu0 0.0
    %1838 = vmatpush1.msra.mxu0 %v1690
    %1839 = vmatprep.subr.mxu0 0.0
    %1840 = vmatpush1.msra.mxu0 %v1691
    %1841 = vmatprep.subr.mxu0 0.0
    %1842 = vmatpush1.msra.mxu0 0.0
    %1843 = vmatprep.subr.mxu0 0.0
    %1844 = vmatpush1.msra.mxu0 0.0
    %1845 = vmatprep.subr.mxu0 0.0
    %1846 = vmatpush1.msra.mxu0 0.0
    %1847 = vmatprep.subr.mxu0 0.0
    %1848 = vmatpush1.msra.mxu0 0.0
    %1849 = vmatprep.subr.mxu0 0.0
    %1850 = vmatpush1.msra.mxu0 0.0
    %1851 = vmatprep.subr.mxu0 0.0
    %1852 = vmatpush1.msra.mxu0 0.0
    %1853 = vmatprep.subr.mxu0 0.0
    %1854 = vmatpush1.msra.mxu0 0.0
    %1855 = vmatprep.subr.mxu0 0.0
    %1856 = vmatpush1.msra.mxu0 0.0
    %1857 = vmatprep.subr.mxu0 0.0
    %1858 = vmatpush1.msra.mxu0 0.0
    %1859 = vmatprep.subr.mxu0 0.0
    %1860 = vmatpush1.msra.mxu0 0.0
    %1861 = vmatprep.subr.mxu0 0.0
    %1862 = vmatpush1.msra.mxu0 0.0
    %1863 = vmatprep.subr.mxu0 0.0
    %1864 = vmatpush1.msra.mxu0 0.0
    %1865 = vmatprep.subr.mxu0 0.0
    %1866 = vmatpush1.msra.mxu0 0.0
    %1867 = vmatprep.subr.mxu0 0.0
    %1868 = vmatpush1.msra.mxu0 0.0
    %1869 = vmatprep.subr.mxu0 0.0
    %1870 = vmatpush1.msra.mxu0 0.0
    %1871 = vmatprep.subr.mxu0 0.0
    %1872 = vmatpush1.msra.mxu0 0.0
    %1873 = vmatprep.mubr.f32.mxu0 0.0
    %1874 = vmatmul.mubr.f32.gmra.mrb[0].mxu0 %v1670
    %v1875 = vpop.f32.mrb[0].mxu0
    %v1876 = vadd.f32 %v1781, %v1875
    %v1877 = vpop.f32.mrb[0].mxu0
    %1878 = vmatprep.mubr.f32.mxu0 0.0
    %1879 = vmatmul.mubr.f32.gmra.mrb[0].mxu0 %v1671
    %v1880 = vpop.f32.mrb[0].mxu0
    %v1881 = vadd.f32 %v1786, %v1880
    %v1882 = vpop.f32.mrb[0].mxu0
    %1883 = vmatprep.mubr.f32.mxu0 0.0
    %1884 = vmatmul.mubr.f32.gmra.mrb[0].mxu0 %v1672
    %v1885 = vpop.f32.mrb[0].mxu0
    %v1886 = vadd.f32 %v1791, %v1885
    %v1887 = vpop.f32.mrb[0].mxu0
    %1888 = vmatprep.mubr.f32.mxu0 0.0
    %1889 = vmatmul.mubr.f32.gmra.mrb[0].mxu0 %v1673
    %v1890 = vpop.f32.mrb[0].mxu0
    %v1891 = vadd.f32 %v1796, %v1890
    %v1892 = vpop.f32.mrb[0].mxu0
    %1893 = vmatprep.mubr.f32.mxu0 0.0
    %1894 = vmatmul.mubr.f32.gmra.mrb[0].mxu0 %v1674
    %v1895 = vpop.f32.mrb[0].mxu0
    %v1896 = vadd.f32 %v1801, %v1895
    %v1897 = vpop.f32.mrb[0].mxu0
    %1898 = vmatprep.mubr.f32.mxu0 0.0
    %1899 = vmatmul.mubr.f32.gmra.mrb[0].mxu0 %v1675
    %v1900 = vpop.f32.mrb[0].mxu0
    %v1901 = vadd.f32 %v1806, %v1900
    %v1902 = vpop.f32.mrb[0].mxu0
    %1903 = vdwg.mxu0
    %v1904 = vld [vmem:[#allocation2 + $0x8] sm:$0xff]
    %v1905 = vld [vmem:[#allocation2 + $0x10] sm:$0xff]
    %v1906 = vld [vmem:[#allocation2 + $0x18] sm:$0xff]
    %v1907 = vld [vmem:[#allocation2 + $0x20] sm:$0xff]
    %v1908 = vld [vmem:[#allocation2 + $0x28] sm:$0xff]
    %v1909 = vld [vmem:[#allocation2 + $0x30] sm:$0xff]
    %v1910 = vld [vmem:[#allocation3 + $0x6b8] sm:$0xff]
    %v1911 = vld [vmem:[#allocation3 + $0x6c0] sm:$0xff]
    %v1912 = vld [vmem:[#allocation3 + $0x6c8] sm:$0xff]
    %v1913 = vld [vmem:[#allocation3 + $0x6d0] sm:$0xff]
    %v1914 = vld [vmem:[#allocation3 + $0x6d8] sm:$0xff]
    %v1915 = vld [vmem:[#allocation3 + $0x6e0] sm:$0xff]
    %v1916 = vld [vmem:[#allocation3 + $0x6e8] sm:$0xff]
    %v1917 = vld [vmem:[#allocation3 + $0x6f0] sm:$0xff]
    %v1918 = vld [vmem:[#allocation3 + $0x6f8] sm:$0xff]
    %v1919 = vld [vmem:[#allocation3 + $0x700] sm:$0xff]
    %v1920 = vld [vmem:[#allocation3 + $0x708] sm:$0xff]
    %v1921 = vld [vmem:[#allocation3 + $0x710] sm:$0xff]
    %v1922 = vld [vmem:[#allocation3 + $0x718] sm:$0xff]
    %v1923 = vld [vmem:[#allocation3 + $0x720] sm:$0xff]
    %v1924 = vld [vmem:[#allocation3 + $0x728] sm:$0xff]
    %v1925 = vld [vmem:[#allocation3 + $0x730] sm:$0xff]
    %1926 = vmatprep.subr.mxu0 0.0
    %1927 = vmatpush1.msra.mxu0 %v1910
    %1928 = vmatprep.subr.mxu0 0.0
    %1929 = vmatpush1.msra.mxu0 %v1911
    %1930 = vmatprep.subr.mxu0 0.0
    %1931 = vmatpush1.msra.mxu0 %v1912
    %1932 = vmatprep.subr.mxu0 0.0
    %1933 = vmatpush1.msra.mxu0 %v1913
    %1934 = vmatprep.subr.mxu0 0.0
    %1935 = vmatpush1.msra.mxu0 %v1914
    %1936 = vmatprep.subr.mxu0 0.0
    %1937 = vmatpush1.msra.mxu0 %v1915
    %1938 = vmatprep.subr.mxu0 0.0
    %1939 = vmatpush1.msra.mxu0 %v1916
    %1940 = vmatprep.subr.mxu0 0.0
    %1941 = vmatpush1.msra.mxu0 %v1917
    %1942 = vmatprep.subr.mxu0 0.0
    %1943 = vmatpush1.msra.mxu0 %v1918
    %1944 = vmatprep.subr.mxu0 0.0
    %1945 = vmatpush1.msra.mxu0 %v1919
    %1946 = vmatprep.subr.mxu0 0.0
    %1947 = vmatpush1.msra.mxu0 %v1920
    %1948 = vmatprep.subr.mxu0 0.0
    %1949 = vmatpush1.msra.mxu0 %v1921
    %1950 = vmatprep.subr.mxu0 0.0
    %1951 = vmatpush1.msra.mxu0 %v1922
    %1952 = vmatprep.subr.mxu0 0.0
    %1953 = vmatpush1.msra.mxu0 %v1923
    %1954 = vmatprep.subr.mxu0 0.0
    %1955 = vmatpush1.msra.mxu0 %v1924
    %1956 = vmatprep.subr.mxu0 0.0
    %1957 = vmatpush1.msra.mxu0 %v1925
    %1958 = vmatprep.subr.mxu0 0.0
    %1959 = vmatpush1.msra.mxu0 0.0
    %1960 = vmatprep.subr.mxu0 0.0
    %1961 = vmatpush1.msra.mxu0 0.0
    %1962 = vmatprep.subr.mxu0 0.0
    %1963 = vmatpush1.msra.mxu0 0.0
    %1964 = vmatprep.subr.mxu0 0.0
    %1965 = vmatpush1.msra.mxu0 0.0
    %1966 = vmatprep.subr.mxu0 0.0
    %1967 = vmatpush1.msra.mxu0 0.0
    %1968 = vmatprep.subr.mxu0 0.0
    %1969 = vmatpush1.msra.mxu0 0.0
    %1970 = vmatprep.subr.mxu0 0.0
    %1971 = vmatpush1.msra.mxu0 0.0
    %1972 = vmatprep.subr.mxu0 0.0
    %1973 = vmatpush1.msra.mxu0 0.0
    %1974 = vmatprep.subr.mxu0 0.0
    %1975 = vmatpush1.msra.mxu0 0.0
    %1976 = vmatprep.subr.mxu0 0.0
    %1977 = vmatpush1.msra.mxu0 0.0
    %1978 = vmatprep.subr.mxu0 0.0
    %1979 = vmatpush1.msra.mxu0 0.0
    %1980 = vmatprep.subr.mxu0 0.0
    %1981 = vmatpush1.msra.mxu0 0.0
    %1982 = vmatprep.subr.mxu0 0.0
    %1983 = vmatpush1.msra.mxu0 0.0
    %1984 = vmatprep.subr.mxu0 0.0
    %1985 = vmatpush1.msra.mxu0 0.0
    %1986 = vmatprep.subr.mxu0 0.0
    %1987 = vmatpush1.msra.mxu0 0.0
    %1988 = vmatprep.subr.mxu0 0.0
    %1989 = vmatpush1.msra.mxu0 0.0
    %1990 = vmatprep.mubr.f32.mxu0 0.0
    %1991 = vmatmul.mubr.f32.gmra.mrb[0].mxu0 %v1904
    %v1992 = vpop.f32.mrb[0].mxu0
    %v1993 = vadd.f32 0.0, %v1992
    %v1994 = vpop.f32.mrb[0].mxu0
    %1995 = vmatprep.mubr.f32.mxu0 0.0
    %1996 = vmatmul.mubr.f32.gmra.mrb[0].mxu0 %v1905
    %v1997 = vpop.f32.mrb[0].mxu0
    %v1998 = vadd.f32 0.0, %v1997
    %v1999 = vpop.f32.mrb[0].mxu0
    %2000 = vmatprep.mubr.f32.mxu0 0.0
    %2001 = vmatmul.mubr.f32.gmra.mrb[0].mxu0 %v1906
    %v2002 = vpop.f32.mrb[0].mxu0
    %v2003 = vadd.f32 0.0, %v2002
    %v2004 = vpop.f32.mrb[0].mxu0
    %2005 = vmatprep.mubr.f32.mxu0 0.0
    %2006 = vmatmul.mubr.f32.gmra.mrb[0].mxu0 %v1907
    %v2007 = vpop.f32.mrb[0].mxu0
    %v2008 = vadd.f32 0.0, %v2007
    %v2009 = vpop.f32.mrb[0].mxu0
    %2010 = vmatprep.mubr.f32.mxu0 0.0
    %2011 = vmatmul.mubr.f32.gmra.mrb[0].mxu0 %v1908
    %v2012 = vpop.f32.mrb[0].mxu0
    %v2013 = vadd.f32 0.0, %v2012
    %v2014 = vpop.f32.mrb[0].mxu0
    %2015 = vmatprep.mubr.f32.mxu0 0.0
    %2016 = vmatmul.mubr.f32.gmra.mrb[0].mxu0 %v1909
    %v2017 = vpop.f32.mrb[0].mxu0
    %v2018 = vadd.f32 0.0, %v2017
    %v2019 = vpop.f32.mrb[0].mxu0
    %2020 = vdwg.mxu0
    %v2021 = vadd.f32 %v1876, %v1993
    %v2022 = vadd.f32 %v1881, %v1998
    %v2023 = vadd.f32 %v1886, %v2003
    %v2024 = vadd.f32 %v1891, %v2008
    %v2025 = vadd.f32 %v1896, %v2013
    %v2026 = vadd.f32 %v1901, %v2018
    %v2027 = vld [vmem:[#allocation2 + $0x9] sm:$0xff]
    %v2028 = vld [vmem:[#allocation2 + $0x11] sm:$0xff]
    %v2029 = vld [vmem:[#allocation2 + $0x19] sm:$0xff]
    %v2030 = vld [vmem:[#allocation2 + $0x21] sm:$0xff]
    %v2031 = vld [vmem:[#allocation2 + $0x29] sm:$0xff]
    %v2032 = vld [vmem:[#allocation2 + $0x31] sm:$0xff]
    %v2033 = vld [vmem:[#allocation3 + $0x738] sm:$0xff]
    %v2034 = vld [vmem:[#allocation3 + $0x740] sm:$0xff]
    %v2035 = vld [vmem:[#allocation3 + $0x748] sm:$0xff]
    %v2036 = vld [vmem:[#allocation3 + $0x750] sm:$0xff]
    %v2037 = vld [vmem:[#allocation3 + $0x758] sm:$0xff]
    %v2038 = vld [vmem:[#allocation3 + $0x760] sm:$0xff]
    %v2039 = vld [vmem:[#allocation3 + $0x768] sm:$0xff]
    %v2040 = vld [vmem:[#allocation3 + $0x770] sm:$0xff]
    %v2041 = vld [vmem:[#allocation3 + $0x778] sm:$0xff]
    %v2042 = vld [vmem:[#allocation3 + $0x780] sm:$0xff]
    %v2043 = vld [vmem:[#allocation3 + $0x788] sm:$0xff]
    %v2044 = vld [vmem:[#allocation3 + $0x790] sm:$0xff]
    %v2045 = vld [vmem:[#allocation3 + $0x798] sm:$0xff]
    %v2046 = vld [vmem:[#allocation3 + $0x7a0] sm:$0xff]
    %v2047 = vld [vmem:[#allocation3 + $0x7a8] sm:$0xff]
    %v2048 = vld [vmem:[#allocation3 + $0x7b0] sm:$0xff]
    %2049 = vmatprep.subr.mxu0 0.0
    %2050 = vmatpush1.msra.mxu0 %v2033
    %2051 = vmatprep.subr.mxu0 0.0
    %2052 = vmatpush1.msra.mxu0 %v2034
    %2053 = vmatprep.subr.mxu0 0.0
    %2054 = vmatpush1.msra.mxu0 %v2035
    %2055 = vmatprep.subr.mxu0 0.0
    %2056 = vmatpush1.msra.mxu0 %v2036
    %2057 = vmatprep.subr.mxu0 0.0
    %2058 = vmatpush1.msra.mxu0 %v2037
    %2059 = vmatprep.subr.mxu0 0.0
    %2060 = vmatpush1.msra.mxu0 %v2038
    %2061 = vmatprep.subr.mxu0 0.0
    %2062 = vmatpush1.msra.mxu0 %v2039
    %2063 = vmatprep.subr.mxu0 0.0
    %2064 = vmatpush1.msra.mxu0 %v2040
    %2065 = vmatprep.subr.mxu0 0.0
    %2066 = vmatpush1.msra.mxu0 %v2041
    %2067 = vmatprep.subr.mxu0 0.0
    %2068 = vmatpush1.msra.mxu0 %v2042
    %2069 = vmatprep.subr.mxu0 0.0
    %2070 = vmatpush1.msra.mxu0 %v2043
    %2071 = vmatprep.subr.mxu0 0.0
    %2072 = vmatpush1.msra.mxu0 %v2044
    %2073 = vmatprep.subr.mxu0 0.0
    %2074 = vmatpush1.msra.mxu0 %v2045
    %2075 = vmatprep.subr.mxu0 0.0
    %2076 = vmatpush1.msra.mxu0 %v2046
    %2077 = vmatprep.subr.mxu0 0.0
    %2078 = vmatpush1.msra.mxu0 %v2047
    %2079 = vmatprep.subr.mxu0 0.0
    %2080 = vmatpush1.msra.mxu0 %v2048
    %2081 = vmatprep.subr.mxu0 0.0
    %2082 = vmatpush1.msra.mxu0 0.0
    %2083 = vmatprep.subr.mxu0 0.0
    %2084 = vmatpush1.msra.mxu0 0.0
    %2085 = vmatprep.subr.mxu0 0.0
    %2086 = vmatpush1.msra.mxu0 0.0
    %2087 = vmatprep.subr.mxu0 0.0
    %2088 = vmatpush1.msra.mxu0 0.0
    %2089 = vmatprep.subr.mxu0 0.0
    %2090 = vmatpush1.msra.mxu0 0.0
    %2091 = vmatprep.subr.mxu0 0.0
    %2092 = vmatpush1.msra.mxu0 0.0
    %2093 = vmatprep.subr.mxu0 0.0
    %2094 = vmatpush1.msra.mxu0 0.0
    %2095 = vmatprep.subr.mxu0 0.0
    %2096 = vmatpush1.msra.mxu0 0.0
    %2097 = vmatprep.subr.mxu0 0.0
    %2098 = vmatpush1.msra.mxu0 0.0
    %2099 = vmatprep.subr.mxu0 0.0
    %2100 = vmatpush1.msra.mxu0 0.0
    %2101 = vmatprep.subr.mxu0 0.0
    %2102 = vmatpush1.msra.mxu0 0.0
    %2103 = vmatprep.subr.mxu0 0.0
    %2104 = vmatpush1.msra.mxu0 0.0
    %2105 = vmatprep.subr.mxu0 0.0
    %2106 = vmatpush1.msra.mxu0 0.0
    %2107 = vmatprep.subr.mxu0 0.0
    %2108 = vmatpush1.msra.mxu0 0.0
    %2109 = vmatprep.subr.mxu0 0.0
    %2110 = vmatpush1.msra.mxu0 0.0
    %2111 = vmatprep.subr.mxu0 0.0
    %2112 = vmatpush1.msra.mxu0 0.0
    %2113 = vmatprep.mubr.f32.mxu0 0.0
    %2114 = vmatmul.mubr.f32.gmra.mrb[0].mxu0 %v2027
    %v2115 = vpop.f32.mrb[0].mxu0
    %v2116 = vadd.f32 0.0, %v2115
    %v2117 = vpop.f32.mrb[0].mxu0
    %2118 = vmatprep.mubr.f32.mxu0 0.0
    %2119 = vmatmul.mubr.f32.gmra.mrb[0].mxu0 %v2028
    %v2120 = vpop.f32.mrb[0].mxu0
    %v2121 = vadd.f32 0.0, %v2120
    %v2122 = vpop.f32.mrb[0].mxu0
    %2123 = vmatprep.mubr.f32.mxu0 0.0
    %2124 = vmatmul.mubr.f32.gmra.mrb[0].mxu0 %v2029
    %v2125 = vpop.f32.mrb[0].mxu0
    %v2126 = vadd.f32 0.0, %v2125
    %v2127 = vpop.f32.mrb[0].mxu0
    %2128 = vmatprep.mubr.f32.mxu0 0.0
    %2129 = vmatmul.mubr.f32.gmra.mrb[0].mxu0 %v2030
    %v2130 = vpop.f32.mrb[0].mxu0
    %v2131 = vadd.f32 0.0, %v2130
    %v2132 = vpop.f32.mrb[0].mxu0
    %2133 = vmatprep.mubr.f32.mxu0 0.0
    %2134 = vmatmul.mubr.f32.gmra.mrb[0].mxu0 %v2031
    %v2135 = vpop.f32.mrb[0].mxu0
    %v2136 = vadd.f32 0.0, %v2135
    %v2137 = vpop.f32.mrb[0].mxu0
    %2138 = vmatprep.mubr.f32.mxu0 0.0
    %2139 = vmatmul.mubr.f32.gmra.mrb[0].mxu0 %v2032
    %v2140 = vpop.f32.mrb[0].mxu0
    %v2141 = vadd.f32 0.0, %v2140
    %v2142 = vpop.f32.mrb[0].mxu0
    %2143 = vdwg.mxu0
    %v2144 = vadd.f32 %v2021, %v2116
    %v2145 = vadd.f32 %v2022, %v2121
    %v2146 = vadd.f32 %v2023, %v2126
    %v2147 = vadd.f32 %v2024, %v2131
    %v2148 = vadd.f32 %v2025, %v2136
    %v2149 = vadd.f32 %v2026, %v2141
    %v2150 = vld [vmem:[#allocation2 + $0xa] sm:$0xff]
    %v2151 = vld [vmem:[#allocation2 + $0x12] sm:$0xff]
    %v2152 = vld [vmem:[#allocation2 + $0x1a] sm:$0xff]
    %v2153 = vld [vmem:[#allocation2 + $0x22] sm:$0xff]
    %v2154 = vld [vmem:[#allocation2 + $0x2a] sm:$0xff]
    %v2155 = vld [vmem:[#allocation2 + $0x32] sm:$0xff]
    %v2156 = vld [vmem:[#allocation3 + $0x7b8] sm:$0xff]
    %v2157 = vld [vmem:[#allocation3 + $0x7c0] sm:$0xff]
    %v2158 = vld [vmem:[#allocation3 + $0x7c8] sm:$0xff]
    %v2159 = vld [vmem:[#allocation3 + $0x7d0] sm:$0xff]
    %v2160 = vld [vmem:[#allocation3 + $0x7d8] sm:$0xff]
    %v2161 = vld [vmem:[#allocation3 + $0x7e0] sm:$0xff]
    %v2162 = vld [vmem:[#allocation3 + $0x7e8] sm:$0xff]
    %v2163 = vld [vmem:[#allocation3 + $0x7f0] sm:$0xff]
    %v2164 = vld [vmem:[#allocation3 + $0x7f8] sm:$0xff]
    %v2165 = vld [vmem:[#allocation3 + $0x800] sm:$0xff]
    %v2166 = vld [vmem:[#allocation3 + $0x808] sm:$0xff]
    %v2167 = vld [vmem:[#allocation3 + $0x810] sm:$0xff]
    %v2168 = vld [vmem:[#allocation3 + $0x818] sm:$0xff]
    %v2169 = vld [vmem:[#allocation3 + $0x820] sm:$0xff]
    %v2170 = vld [vmem:[#allocation3 + $0x828] sm:$0xff]
    %v2171 = vld [vmem:[#allocation3 + $0x830] sm:$0xff]
    %2172 = vmatprep.subr.mxu0 0.0
    %2173 = vmatpush1.msra.mxu0 %v2156
    %2174 = vmatprep.subr.mxu0 0.0
    %2175 = vmatpush1.msra.mxu0 %v2157
    %2176 = vmatprep.subr.mxu0 0.0
    %2177 = vmatpush1.msra.mxu0 %v2158
    %2178 = vmatprep.subr.mxu0 0.0
    %2179 = vmatpush1.msra.mxu0 %v2159
    %2180 = vmatprep.subr.mxu0 0.0
    %2181 = vmatpush1.msra.mxu0 %v2160
    %2182 = vmatprep.subr.mxu0 0.0
    %2183 = vmatpush1.msra.mxu0 %v2161
    %2184 = vmatprep.subr.mxu0 0.0
    %2185 = vmatpush1.msra.mxu0 %v2162
    %2186 = vmatprep.subr.mxu0 0.0
    %2187 = vmatpush1.msra.mxu0 %v2163
    %2188 = vmatprep.subr.mxu0 0.0
    %2189 = vmatpush1.msra.mxu0 %v2164
    %2190 = vmatprep.subr.mxu0 0.0
    %2191 = vmatpush1.msra.mxu0 %v2165
    %2192 = vmatprep.subr.mxu0 0.0
    %2193 = vmatpush1.msra.mxu0 %v2166
    %2194 = vmatprep.subr.mxu0 0.0
    %2195 = vmatpush1.msra.mxu0 %v2167
    %2196 = vmatprep.subr.mxu0 0.0
    %2197 = vmatpush1.msra.mxu0 %v2168
    %2198 = vmatprep.subr.mxu0 0.0
    %2199 = vmatpush1.msra.mxu0 %v2169
    %2200 = vmatprep.subr.mxu0 0.0
    %2201 = vmatpush1.msra.mxu0 %v2170
    %2202 = vmatprep.subr.mxu0 0.0
    %2203 = vmatpush1.msra.mxu0 %v2171
    %2204 = vmatprep.subr.mxu0 0.0
    %2205 = vmatpush1.msra.mxu0 0.0
    %2206 = vmatprep.subr.mxu0 0.0
    %2207 = vmatpush1.msra.mxu0 0.0
    %2208 = vmatprep.subr.mxu0 0.0
    %2209 = vmatpush1.msra.mxu0 0.0
    %2210 = vmatprep.subr.mxu0 0.0
    %2211 = vmatpush1.msra.mxu0 0.0
    %2212 = vmatprep.subr.mxu0 0.0
    %2213 = vmatpush1.msra.mxu0 0.0
    %2214 = vmatprep.subr.mxu0 0.0
    %2215 = vmatpush1.msra.mxu0 0.0
    %2216 = vmatprep.subr.mxu0 0.0
    %2217 = vmatpush1.msra.mxu0 0.0
    %2218 = vmatprep.subr.mxu0 0.0
    %2219 = vmatpush1.msra.mxu0 0.0
    %2220 = vmatprep.subr.mxu0 0.0
    %2221 = vmatpush1.msra.mxu0 0.0
    %2222 = vmatprep.subr.mxu0 0.0
    %2223 = vmatpush1.msra.mxu0 0.0
    %2224 = vmatprep.subr.mxu0 0.0
    %2225 = vmatpush1.msra.mxu0 0.0
    %2226 = vmatprep.subr.mxu0 0.0
    %2227 = vmatpush1.msra.mxu0 0.0
    %2228 = vmatprep.subr.mxu0 0.0
    %2229 = vmatpush1.msra.mxu0 0.0
    %2230 = vmatprep.subr.mxu0 0.0
    %2231 = vmatpush1.msra.mxu0 0.0
    %2232 = vmatprep.subr.mxu0 0.0
    %2233 = vmatpush1.msra.mxu0 0.0
    %2234 = vmatprep.subr.mxu0 0.0
    %2235 = vmatpush1.msra.mxu0 0.0
    %2236 = vmatprep.mubr.f32.mxu0 0.0
    %2237 = vmatmul.mubr.f32.gmra.mrb[0].mxu0 %v2150
    %v2238 = vpop.f32.mrb[0].mxu0
    %v2239 = vadd.f32 0.0, %v2238
    %v2240 = vpop.f32.mrb[0].mxu0
    %2241 = vmatprep.mubr.f32.mxu0 0.0
    %2242 = vmatmul.mubr.f32.gmra.mrb[0].mxu0 %v2151
    %v2243 = vpop.f32.mrb[0].mxu0
    %v2244 = vadd.f32 0.0, %v2243
    %v2245 = vpop.f32.mrb[0].mxu0
    %2246 = vmatprep.mubr.f32.mxu0 0.0
    %2247 = vmatmul.mubr.f32.gmra.mrb[0].mxu0 %v2152
    %v2248 = vpop.f32.mrb[0].mxu0
    %v2249 = vadd.f32 0.0, %v2248
    %v2250 = vpop.f32.mrb[0].mxu0
    %2251 = vmatprep.mubr.f32.mxu0 0.0
    %2252 = vmatmul.mubr.f32.gmra.mrb[0].mxu0 %v2153
    %v2253 = vpop.f32.mrb[0].mxu0
    %v2254 = vadd.f32 0.0, %v2253
    %v2255 = vpop.f32.mrb[0].mxu0
    %2256 = vmatprep.mubr.f32.mxu0 0.0
    %2257 = vmatmul.mubr.f32.gmra.mrb[0].mxu0 %v2154
    %v2258 = vpop.f32.mrb[0].mxu0
    %v2259 = vadd.f32 0.0, %v2258
    %v2260 = vpop.f32.mrb[0].mxu0
    %2261 = vmatprep.mubr.f32.mxu0 0.0
    %2262 = vmatmul.mubr.f32.gmra.mrb[0].mxu0 %v2155
    %v2263 = vpop.f32.mrb[0].mxu0
    %v2264 = vadd.f32 0.0, %v2263
    %v2265 = vpop.f32.mrb[0].mxu0
    %2266 = vdwg.mxu0
    %v2267 = vadd.f32 %v2144, %v2239
    %v2268 = vadd.f32 %v2145, %v2244
    %v2269 = vadd.f32 %v2146, %v2249
    %v2270 = vadd.f32 %v2147, %v2254
    %v2271 = vadd.f32 %v2148, %v2259
    %v2272 = vadd.f32 %v2149, %v2264
    %v2273 = vld [vmem:[#allocation3 + $0x93b] sm:$0x1]
    %v2274 = vlaneseq
    %v2275 = vshrl.u32 %v2274, 7
    %v2276 = vsub.s32 0, %v2275
    %v2277 = vrot.slane %v2273, %v2276
    %v2278 = vadd.f32 %v2267, %v2277
    %v2279 = vadd.f32 %v2268, %v2277
    %v2280 = vadd.f32 %v2269, %v2277
    %v2281 = vadd.f32 %v2270, %v2277
    %v2282 = vadd.f32 %v2271, %v2277
    %v2283 = vadd.f32 %v2272, %v2277
    %v2284 = vmax.f32 %v2278, 0.0
    %v2285 = vmax.f32 %v2279, 0.0
    %v2286 = vmax.f32 %v2280, 0.0
    %v2287 = vmax.f32 %v2281, 0.0
    %v2288 = vmax.f32 %v2282, 0.0
    %v2289 = vmax.f32 %v2283, 0.0
    %v2290 = vmul.f32 %v2284, %v81
    %v2291 = vmul.f32 %v2285, %v82
    %v2292 = vmul.f32 %v2286, %v83
    %v2293 = vmul.f32 %v2287, %v84
    %v2294 = vmul.f32 %v2288, %v85
    %v2295 = vmul.f32 %v2289, %v86
    %v2296 = vmax.f32 %v2290, %v2291
    %v2297 = vmax.f32 %v2296, %v2292
    %v2298 = vrot.slane %v2297, 4
    %v2299 = vmax.f32 %v2297, %v2298
    %v2300 = vrot.slane %v2299, 2
    %v2301 = vmax.f32 %v2299, %v2300
    %v2302 = vrot.slane %v2301, 1
    %v2303 = vmax.f32 %v2301, %v2302
    %v2304 = vmax.f32 %v2293, %v2294
    %v2305 = vmax.f32 %v2304, %v2295
    %v2306 = vrot.slane %v2305, 4
    %v2307 = vmax.f32 %v2305, %v2306
    %v2308 = vrot.slane %v2307, 2
    %v2309 = vmax.f32 %v2307, %v2308
    %v2310 = vrot.slane %v2309, 1
    %v2311 = vmax.f32 %v2309, %v2310
    %vm2312 = vcmask 1040384
    %v2313 = vsel %vm2312, %v2303, %v2311
    %v2314 = vld [vmem:[#allocation3 + $0x838] sm:$0xff]
    %v2315 = vld [vmem:[#allocation3 + $0x840] sm:$0xff]
    %v2316 = vld [vmem:[#allocation3 + $0x848] sm:$0xff]
    %v2317 = vld [vmem:[#allocation3 + $0x850] sm:$0xff]
    %v2318 = vld [vmem:[#allocation3 + $0x858] sm:$0xff]
    %v2319 = vld [vmem:[#allocation3 + $0x860] sm:$0xff]
    %v2320 = vld [vmem:[#allocation3 + $0x868] sm:$0xff]
    %v2321 = vld [vmem:[#allocation3 + $0x870] sm:$0xff]
    %v2322 = vld [vmem:[#allocation3 + $0x878] sm:$0xff]
    %v2323 = vld [vmem:[#allocation3 + $0x880] sm:$0xff]
    %v2324 = vld [vmem:[#allocation3 + $0x888] sm:$0xff]
    %v2325 = vld [vmem:[#allocation3 + $0x890] sm:$0xff]
    %v2326 = vld [vmem:[#allocation3 + $0x898] sm:$0xff]
    %v2327 = vld [vmem:[#allocation3 + $0x8a0] sm:$0xff]
    %v2328 = vld [vmem:[#allocation3 + $0x8a8] sm:$0xff]
    %v2329 = vld [vmem:[#allocation3 + $0x8b0] sm:$0xff]
    %v2330 = vld [vmem:[#allocation3 + $0x93c] sm:$0x1]
    %v2331 = vlaneseq
    %v2332 = vshrl.u32 %v2331, 7
    %v2333 = vsub.s32 0, %v2332
    %v2334 = vrot.slane %v2330, %v2333
    %2335 = vmatprep.subr.mxu0 0.0
    %2336 = vmatpush1.msra.mxu0 %v2314
    %2337 = vmatprep.subr.mxu0 0.0
    %2338 = vmatpush1.msra.mxu0 %v2315
    %2339 = vmatprep.subr.mxu0 0.0
    %2340 = vmatpush1.msra.mxu0 %v2316
    %2341 = vmatprep.subr.mxu0 0.0
    %2342 = vmatpush1.msra.mxu0 %v2317
    %2343 = vmatprep.subr.mxu0 0.0
    %2344 = vmatpush1.msra.mxu0 %v2318
    %2345 = vmatprep.subr.mxu0 0.0
    %2346 = vmatpush1.msra.mxu0 %v2319
    %2347 = vmatprep.subr.mxu0 0.0
    %2348 = vmatpush1.msra.mxu0 %v2320
    %2349 = vmatprep.subr.mxu0 0.0
    %2350 = vmatpush1.msra.mxu0 %v2321
    %2351 = vmatprep.subr.mxu0 0.0
    %2352 = vmatpush1.msra.mxu0 %v2322
    %2353 = vmatprep.subr.mxu0 0.0
    %2354 = vmatpush1.msra.mxu0 %v2323
    %2355 = vmatprep.subr.mxu0 0.0
    %2356 = vmatpush1.msra.mxu0 %v2324
    %2357 = vmatprep.subr.mxu0 0.0
    %2358 = vmatpush1.msra.mxu0 %v2325
    %2359 = vmatprep.subr.mxu0 0.0
    %2360 = vmatpush1.msra.mxu0 %v2326
    %2361 = vmatprep.subr.mxu0 0.0
    %2362 = vmatpush1.msra.mxu0 %v2327
    %2363 = vmatprep.subr.mxu0 0.0
    %2364 = vmatpush1.msra.mxu0 %v2328
    %2365 = vmatprep.subr.mxu0 0.0
    %2366 = vmatpush1.msra.mxu0 %v2329
    %2367 = vmatprep.subr.mxu0 0.0
    %2368 = vmatpush1.msra.mxu0 0.0
    %2369 = vmatprep.subr.mxu0 0.0
    %2370 = vmatpush1.msra.mxu0 0.0
    %2371 = vmatprep.subr.mxu0 0.0
    %2372 = vmatpush1.msra.mxu0 0.0
    %2373 = vmatprep.subr.mxu0 0.0
    %2374 = vmatpush1.msra.mxu0 0.0
    %2375 = vmatprep.subr.mxu0 0.0
    %2376 = vmatpush1.msra.mxu0 0.0
    %2377 = vmatprep.subr.mxu0 0.0
    %2378 = vmatpush1.msra.mxu0 0.0
    %2379 = vmatprep.subr.mxu0 0.0
    %2380 = vmatpush1.msra.mxu0 0.0
    %2381 = vmatprep.subr.mxu0 0.0
    %2382 = vmatpush1.msra.mxu0 0.0
    %2383 = vmatprep.subr.mxu0 0.0
    %2384 = vmatpush1.msra.mxu0 0.0
    %2385 = vmatprep.subr.mxu0 0.0
    %2386 = vmatpush1.msra.mxu0 0.0
    %2387 = vmatprep.subr.mxu0 0.0
    %2388 = vmatpush1.msra.mxu0 0.0
    %2389 = vmatprep.subr.mxu0 0.0
    %2390 = vmatpush1.msra.mxu0 0.0
    %2391 = vmatprep.subr.mxu0 0.0
    %2392 = vmatpush1.msra.mxu0 0.0
    %2393 = vmatprep.subr.mxu0 0.0
    %2394 = vmatpush1.msra.mxu0 0.0
    %2395 = vmatprep.subr.mxu0 0.0
    %2396 = vmatpush1.msra.mxu0 0.0
    %2397 = vmatprep.subr.mxu0 0.0
    %2398 = vmatpush1.msra.mxu0 0.0
    %2399 = vmatprep.mubr.f32.mxu0 0.0
    %2400 = vmatmul.mubr.f32.gmra.mrb[0].mxu0 %v2313
    %v2401 = vpop.f32.mrb[0].mxu0
    %v2402 = vadd.f32 %v2334, %v2401
    %v2403 = vpop.f32.mrb[0].mxu0
    %2404 = vdwg.mxu0
    %v2405 = vmax.f32 %v2402, 0.0
    %v2406 = vld [vmem:[#allocation3 + $0x8b8] sm:$0xff]
    %v2407 = vld [vmem:[#allocation3 + $0x8c0] sm:$0xff]
    %v2408 = vld [vmem:[#allocation3 + $0x8c8] sm:$0xff]
    %v2409 = vld [vmem:[#allocation3 + $0x8d0] sm:$0xff]
    %v2410 = vld [vmem:[#allocation3 + $0x8d8] sm:$0xff]
    %v2411 = vld [vmem:[#allocation3 + $0x8e0] sm:$0xff]
    %v2412 = vld [vmem:[#allocation3 + $0x8e8] sm:$0xff]
    %v2413 = vld [vmem:[#allocation3 + $0x8f0] sm:$0xff]
    %v2414 = vld [vmem:[#allocation3 + $0x8f8] sm:$0xff]
    %v2415 = vld [vmem:[#allocation3 + $0x900] sm:$0xff]
    %v2416 = vld [vmem:[#allocation3 + $0x908] sm:$0xff]
    %v2417 = vld [vmem:[#allocation3 + $0x910] sm:$0xff]
    %v2418 = vld [vmem:[#allocation3 + $0x918] sm:$0xff]
    %v2419 = vld [vmem:[#allocation3 + $0x920] sm:$0xff]
    %v2420 = vld [vmem:[#allocation3 + $0x928] sm:$0xff]
    %v2421 = vld [vmem:[#allocation3 + $0x930] sm:$0xff]
    %v2422 = vld [vmem:[#allocation3 + $0x93d] sm:$0x1]
    %v2423 = vlaneseq
    %v2424 = vshrl.u32 %v2423, 7
    %v2425 = vsub.s32 0, %v2424
    %v2426 = vrot.slane %v2422, %v2425
    %2427 = vmatprep.subr.mxu0 0.0
    %2428 = vmatpush1.msra.mxu0 %v2406
    %2429 = vmatprep.subr.mxu0 0.0
    %2430 = vmatpush1.msra.mxu0 %v2407
    %2431 = vmatprep.subr.mxu0 0.0
    %2432 = vmatpush1.msra.mxu0 %v2408
    %2433 = vmatprep.subr.mxu0 0.0
    %2434 = vmatpush1.msra.mxu0 %v2409
    %2435 = vmatprep.subr.mxu0 0.0
    %2436 = vmatpush1.msra.mxu0 %v2410
    %2437 = vmatprep.subr.mxu0 0.0
    %2438 = vmatpush1.msra.mxu0 %v2411
    %2439 = vmatprep.subr.mxu0 0.0
    %2440 = vmatpush1.msra.mxu0 %v2412
    %2441 = vmatprep.subr.mxu0 0.0
    %2442 = vmatpush1.msra.mxu0 %v2413
    %2443 = vmatprep.subr.mxu0 0.0
    %2444 = vmatpush1.msra.mxu0 %v2414
    %2445 = vmatprep.subr.mxu0 0.0
    %2446 = vmatpush1.msra.mxu0 %v2415
    %2447 = vmatprep.subr.mxu0 0.0
    %2448 = vmatpush1.msra.mxu0 %v2416
    %2449 = vmatprep.subr.mxu0 0.0
    %2450 = vmatpush1.msra.mxu0 %v2417
    %2451 = vmatprep.subr.mxu0 0.0
    %2452 = vmatpush1.msra.mxu0 %v2418
    %2453 = vmatprep.subr.mxu0 0.0
    %2454 = vmatpush1.msra.mxu0 %v2419
    %2455 = vmatprep.subr.mxu0 0.0
    %2456 = vmatpush1.msra.mxu0 %v2420
    %2457 = vmatprep.subr.mxu0 0.0
    %2458 = vmatpush1.msra.mxu0 %v2421
    %2459 = vmatprep.subr.mxu0 0.0
    %2460 = vmatpush1.msra.mxu0 0.0
    %2461 = vmatprep.subr.mxu0 0.0
    %2462 = vmatpush1.msra.mxu0 0.0
    %2463 = vmatprep.subr.mxu0 0.0
    %2464 = vmatpush1.msra.mxu0 0.0
    %2465 = vmatprep.subr.mxu0 0.0
    %2466 = vmatpush1.msra.mxu0 0.0
    %2467 = vmatprep.subr.mxu0 0.0
    %2468 = vmatpush1.msra.mxu0 0.0
    %2469 = vmatprep.subr.mxu0 0.0
    %2470 = vmatpush1.msra.mxu0 0.0
    %2471 = vmatprep.subr.mxu0 0.0
    %2472 = vmatpush1.msra.mxu0 0.0
    %2473 = vmatprep.subr.mxu0 0.0
    %2474 = vmatpush1.msra.mxu0 0.0
    %2475 = vmatprep.subr.mxu0 0.0
    %2476 = vmatpush1.msra.mxu0 0.0
    %2477 = vmatprep.subr.mxu0 0.0
    %2478 = vmatpush1.msra.mxu0 0.0
    %2479 = vmatprep.subr.mxu0 0.0
    %2480 = vmatpush1.msra.mxu0 0.0
    %2481 = vmatprep.subr.mxu0 0.0
    %2482 = vmatpush1.msra.mxu0 0.0
    %2483 = vmatprep.subr.mxu0 0.0
    %2484 = vmatpush1.msra.mxu0 0.0
    %2485 = vmatprep.subr.mxu0 0.0
    %2486 = vmatpush1.msra.mxu0 0.0
    %2487 = vmatprep.subr.mxu0 0.0
    %2488 = vmatpush1.msra.mxu0 0.0
    %2489 = vmatprep.subr.mxu0 0.0
    %2490 = vmatpush1.msra.mxu0 0.0
    %2491 = vmatprep.mubr.f32.mxu0 0.0
    %2492 = vmatmul.mubr.f32.gmra.mrb[0].mxu0 %v2405
    %v2493 = vpop.f32.mrb[0].mxu0
    %v2494 = vadd.f32 %v2426, %v2493
    %v2495 = vpop.f32.mrb[0].mxu0
    %2496 = vdwg.mxu0
    %vm2497 = vcmask 25600
    %2498 = vst.msk [vmem:[#allocation6] sm:$0x3] %vm2497, %v2494
    // Predicated region
    $region14: #{cnn_with_inception_forward.1} parent=1 // pred_check
      _
    $region15: #{cnn_with_inception_forward.1} parent=1 // pred_check_branch
      %2500 = sbr.rel (0) target = $region17
    $region16: #{cnn_with_inception_forward.1} parent=1 // pred_region
      %s2502 = ssub.s32 32, 32
      %2503 = vsyncadd [#allocation5], %s2502
      %s2505 = sshll.u32 [#allocation6], 4
      %s2506 = int_to_ptr.vmem [resolvable:$true] %s2505
      %2508 = dma.vmem_to_hbm [thread:$0]  %s2506, 32, %s2, [#allocation5]
    $region17: #{cnn_with_inception_forward.1} parent=1 // pred_fallthru
      _
    // Predicated region
    $region18: #{cnn_with_inception_forward.1} parent=1 // pred_check
      _
    $region19: #{cnn_with_inception_forward.1} parent=1 // pred_check_branch
      %2510 = sbr.rel (0) target = $region21
    $region20: #{cnn_with_inception_forward.1} parent=1 // pred_region
      %2511 = dma.done [#allocation5], 32
    $region21: #{cnn_with_inception_forward.1} parent=1 // pred_fallthru
      _
    %2512 = vsyncpa [#allocation4], 1
    %2513 = vsyncpa [#allocation5], 1

</llo_original>
